<compile_context>
chip_gen: v7x
topology: tpu7x:2x2x1
jax: 0.10.0
libtpu: 0.0.40
codegen_flags: <defaults>
</compile_context>

<pallas_src>
import jax
import jax.numpy as jnp
from jax.experimental import pallas as pl
from jax.experimental.pallas import tpu as pltpu


# ---------------------------------------------------------------------------
# helpers
# ---------------------------------------------------------------------------
def _round_up(x, m):
    return ((x + m - 1) // m) * m


def _vmem_limit_bytes():
    """Generation-aware VMEM limit (v7x has 64 MiB physical, v5e/v6e 128 MiB)."""
    cap = 64 * 1024 * 1024          # conservative fallback (safe on all gens)
    try:
        cap = int(pltpu.get_tpu_info().vmem_capacity_bytes)
    except Exception:
        pass
    return min(cap * 3 // 4, 100 * 1024 * 1024)


def _pick_nv_tile(nv, tp, t8, cin, tin, cout, vmem_limit):
    """Rows per grid step ~1024 (MXU-friendly), clamped to a VMEM budget."""
    target_rows = 1024
    nv_tile = max(1, min(nv, max(1, target_rows // max(tp, 1))))

    def est(m):
        x_blk = 2 * m * tp * cin * 2        # bf16 input, double buffered
        o_blk = 2 * m * t8 * cout * 4       # f32 output, double buffered
        feat = m * t8 * tin * 4             # VMEM scratch
        tmp = m * tp * tin * (4 + 2)        # live f32 h + bf16 hp values
        return x_blk + o_blk + feat + tmp

    budget = vmem_limit // 2
    while nv_tile > 1 and est(nv_tile) > budget:
        nv_tile -= 1
    return nv_tile


def _halo(ms_cfg):
    """Temporal halo needed on each side of T (covers all branch windows)."""
    p = 0
    for cfg in ms_cfg:
        if cfg == '1x1':
            continue
        if isinstance(cfg, tuple) and cfg[0] == 'max':
            p = max(p, 1, cfg[1] - 2)
        else:
            k_, d_ = cfg
            pad = (k_ + (k_ - 1) * (d_ - 1) - 1) // 2
            p = max(p, pad, (k_ - 1) * d_ - pad)
    return p


# ---------------------------------------------------------------------------
# fused Pallas kernel (branch 1x1s + temporal ops + transform + final BN)
# ---------------------------------------------------------------------------
def _make_fused_kernel(ms_cfg, slices, t_out, halo, cin, tin, cout):
    n_conv = sum(1 for c in ms_cfg if isinstance(c, tuple) and c[0] != 'max')

    def kernel(x_ref, w1_ref, sh1_ref, relu_ref, tmask_ref, *rest):
        conv_w_refs = rest[:n_conv]
        s1_ref, t1_ref, wt_ref, sh2_ref, o_ref, feat_ref = rest[n_conv:]

        nvt, tp, _ = x_ref.shape

        # ---- stage 1: all-branch 1x1 conv (+folded bias/BN) + masked ReLU --
        x2 = x_ref[...].reshape(nvt * tp, cin)                       # bf16
        h = jnp.dot(x2, w1_ref[...], preferred_element_type=jnp.float32)
        h = h + sh1_ref[...]
        h = jnp.where(relu_ref[...] > 0.5, jnp.maximum(h, 0.0), h)
        # zero the temporal halo rows (== PyTorch zero-pad of the branch acts)
        hp = (h.reshape(nvt, tp, tin) * tmask_ref[...]).astype(jnp.bfloat16)

        # ---- stage 2: per-branch temporal op on in-kernel shifted windows --
        wi = 0
        for cfg, (c0, c1) in zip(ms_cfg, slices):
            bc = c1 - c0
            if cfg == '1x1':
                feat_ref[:, :, c0:c1] = hp[:, halo:halo + t_out, c0:c1].astype(
                    jnp.float32)
            elif isinstance(cfg, tuple) and cfg[0] == 'max':
                kk = cfg[1]
                acc = hp[:, halo - 1:halo - 1 + t_out, c0:c1].astype(jnp.float32)
                for j in range(1, kk):
                    off = halo - 1 + j
                    acc = jnp.maximum(
                        acc, hp[:, off:off + t_out, c0:c1].astype(jnp.float32))
                feat_ref[:, :, c0:c1] = acc
            else:
                kk, d = cfg
                pad = (kk + (kk - 1) * (d - 1) - 1) // 2
                w_ref = conv_w_refs[wi]
                wi += 1
                acc = None
                for j in range(kk):
                    off = halo - pad + j * d
                    win = hp[:, off:off + t_out, c0:c1].reshape(nvt * t_out, bc)
                    term = jnp.dot(win, w_ref[j],
                                   preferred_element_type=jnp.float32)
                    acc = term if acc is None else acc + term
                feat_ref[:, :, c0:c1] = acc.reshape(nvt, t_out, bc)

        # ---- stage 3: transform BN+ReLU+1x1 conv and final BN (folded) -----
        g = jnp.maximum(feat_ref[...] * s1_ref[...] + t1_ref[...], 0.0)
        y = jnp.dot(g.astype(jnp.bfloat16).reshape(nvt * t_out, tin),
                    wt_ref[...], preferred_element_type=jnp.float32)
        y = y + sh2_ref[...]
        o_ref[...] = y.reshape(nvt, t_out, cout).astype(o_ref.dtype)

    return kernel


# ---------------------------------------------------------------------------
# forward (wrapper = pure layout glue + one pallas_call)
# ---------------------------------------------------------------------------
def mstcn_sparse_forward(x, packed, ms_cfg):
    n, cin, t_real, v = x.shape
    tin = packed['w1'].shape[1]
    cout = packed['wt'].shape[1]
    slices = packed['slices']

    nv = n * v
    t8 = _round_up(t_real, 8)
    halo = _halo(ms_cfg)
    tp = _round_up(t8 + 2 * halo, 8)

    vmem_limit = _vmem_limit_bytes()
    nv_tile = _pick_nv_tile(nv, tp, t8, cin, tin, cout, vmem_limit)
    nvp = _round_up(nv, nv_tile)

    # (N, C, T, V) -> (N*V, T, C), channels on the lane dim; pad halo + tiles.
    x3 = jnp.transpose(x, (0, 3, 2, 1)).reshape(nv, t_real, cin)
    xp = jnp.pad(x3, ((0, nvp - nv), (halo, tp - halo - t_real), (0, 0)))
    xp = xp.astype(jnp.bfloat16)

    # temporal validity mask: 1 on real frames, 0 on halo / rounding rows.
    t_ids = jnp.arange(tp)
    tmask = ((t_ids >= halo) & (t_ids < halo + t_real)).astype(
        jnp.float32).reshape(tp, 1)

    kernel = _make_fused_kernel(ms_cfg, slices, t8, halo, cin, tin, cout)

    in_specs = [
        pl.BlockSpec((nv_tile, tp, cin), lambda i: (i, 0, 0)),   # activations
        pl.BlockSpec((cin, tin), lambda i: (0, 0)),              # W1 (fused)
        pl.BlockSpec((1, tin), lambda i: (0, 0)),                # shift1
        pl.BlockSpec((1, tin), lambda i: (0, 0)),                # relu mask
        pl.BlockSpec((tp, 1), lambda i: (0, 0)),                 # temporal mask
    ]
    conv_args = []
    for w2 in packed['conv_ws']:
        in_specs.append(pl.BlockSpec(w2.shape, lambda i: (0, 0, 0)))
        conv_args.append(w2)
    in_specs += [
        pl.BlockSpec((1, tin), lambda i: (0, 0)),                # BN1 scale
        pl.BlockSpec((1, tin), lambda i: (0, 0)),                # BN1 shift (adj)
        pl.BlockSpec((tin, cout), lambda i: (0, 0)),             # Wt (folded)
        pl.BlockSpec((1, cout), lambda i: (0, 0)),               # shift2
    ]

    out = pl.pallas_call(
        kernel,
        out_shape=jax.ShapeDtypeStruct((nvp, t8, cout), jnp.float32),
        grid=(nvp // nv_tile,),
        in_specs=in_specs,
        out_specs=pl.BlockSpec((nv_tile, t8, cout), lambda i: (i, 0, 0)),
        scratch_shapes=[pltpu.VMEM((nv_tile, t8, tin), jnp.float32)],
        compiler_params=pltpu.CompilerParams(
            dimension_semantics=("parallel",),
            vmem_limit_bytes=vmem_limit),
    )(xp, packed['w1'], packed['sh1'], packed['relu_mask'], tmask,
      *conv_args, packed['s1'], packed['t1'], packed['wt'], packed['sh2'])

    out = out[:nv, :t_real]                                      # drop padding
    return out.reshape(n, v, t_real, cout).transpose(0, 3, 2, 1)  # (N,C,T,V)


# ---------------------------------------------------------------------------
# Parameter init (deterministic, synthetic) + folding/packing
# ---------------------------------------------------------------------------
def _bn_fold(key, c, eps=1e-5):
    k1, k2, k3, k4 = jax.random.split(key, 4)
    gamma = 1.0 + 0.1 * jax.random.normal(k1, (c,), jnp.float32)
    beta = 0.1 * jax.random.normal(k2, (c,), jnp.float32)
    mean = 0.1 * jax.random.normal(k3, (c,), jnp.float32)
    var = 1.0 + 0.2 * jnp.abs(jax.random.normal(k4, (c,), jnp.float32))
    s = gamma / jnp.sqrt(var + eps)
    t = beta - mean * s
    return s.reshape(1, c), t.reshape(1, c)


def _conv_w(key, cin, cout, k=1):
    w = 0.1 * jax.random.normal(key, (k, cin, cout), jnp.float32)
    return w[0] if k == 1 else w


def _bias(key, c):
    return 0.1 * jax.random.normal(key, (1, c), jnp.float32)


def init_params(key, in_channels, out_channels, ms_cfg):
    nb = len(ms_cfg)
    mid = out_channels // nb
    rem = out_channels - mid * (nb - 1)
    keys = iter(jax.random.split(key, 64))
    branches = []
    for i, cfg in enumerate(ms_cfg):
        bc = rem if i == 0 else mid
        if cfg == '1x1':
            branches.append(dict(w=_conv_w(next(keys), in_channels, bc),
                                 b=_bias(next(keys), bc)))
        elif isinstance(cfg, tuple) and cfg[0] == 'max':
            s, t = _bn_fold(next(keys), bc)
            branches.append(dict(w1=_conv_w(next(keys), in_channels, bc),
                                 b1=_bias(next(keys), bc), bn_s=s, bn_t=t))
        else:
            k_, _d = cfg
            s, t = _bn_fold(next(keys), bc)
            branches.append(dict(w1=_conv_w(next(keys), in_channels, bc),
                                 b1=_bias(next(keys), bc), bn_s=s, bn_t=t,
                                 w2=_conv_w(next(keys), bc, bc, k=k_),
                                 b2=_bias(next(keys), bc)))
    tin = mid * (nb - 1) + rem
    s1, t1 = _bn_fold(next(keys), tin)
    tw = _conv_w(next(keys), tin, out_channels)
    tb = _bias(next(keys), out_channels)
    s2, t2 = _bn_fold(next(keys), out_channels)
    transform = dict(s1=s1, t1=t1, w=tw, b=tb, s2=s2, t2=t2)
    return dict(branches=branches, transform=transform)


def pack_params(params, ms_cfg):
    """Fold biases/BN into weights & shift vectors; concat per-branch 1x1s."""
    branches = params['branches']
    tr = params['transform']
    s1, t1 = tr['s1'], tr['t1']

    w1_parts, sh1_parts, mask_parts, t1_parts = [], [], [], []
    conv_ws, slices = [], []
    c_off = 0
    for i, cfg in enumerate(ms_cfg):
        p = branches[i]
        if cfg == '1x1':
            w1, b1 = p['w'], p['b']
            bc = w1.shape[1]
            s = jnp.ones((1, bc), jnp.float32)
            t = jnp.zeros((1, bc), jnp.float32)
            relu = 0.0
        else:
            w1, b1 = p['w1'], p['b1']
            bc = w1.shape[1]
            s, t = p['bn_s'], p['bn_t']
            relu = 1.0
        c0, c1 = c_off, c_off + bc
        slices.append((c0, c1))
        c_off = c1

        w1_parts.append(w1 * s)                  # fold BN scale into W1
        sh1_parts.append(b1 * s + t)             # fold conv bias + BN shift
        mask_parts.append(jnp.full((1, bc), relu, jnp.float32))

        t1_slice = t1[:, c0:c1]
        if isinstance(cfg, tuple) and cfg[0] != 'max':
            conv_ws.append(p['w2'].astype(jnp.bfloat16))          # (k, bc, bc)
            # fold the temporal-conv bias into the transform-BN shift
            t1_slice = t1_slice + p['b2'] * s1[:, c0:c1]
        t1_parts.append(t1_slice)

    s2, t2 = tr['s2'], tr['t2']
    return dict(
        w1=jnp.concatenate(w1_parts, axis=1).astype(jnp.bfloat16),  # (cin,tin)
        sh1=jnp.concatenate(sh1_parts, axis=1),                     # (1,tin)
        relu_mask=jnp.concatenate(mask_parts, axis=1),              # (1,tin)
        conv_ws=conv_ws,
        s1=s1,                                                      # (1,tin)
        t1=jnp.concatenate(t1_parts, axis=1),                       # (1,tin)
        wt=(tr['w'] * s2).astype(jnp.bfloat16),                     # (tin,cout)
        sh2=tr['b'] * s2 + t2,                                      # (1,cout)
        slices=slices,
    )


# ---------------------------------------------------------------------------
if __name__ == "__main__":
    key = jax.random.PRNGKey(0)
    k_param, k_x = jax.random.split(key)

    N, C_IN, T, V = 2, 8, 16, 4
    OUT_CHANNELS = 12
    MS_CFG = [(3, 1), (3, 2), (3, 3), (3, 4), ('max', 3), '1x1']

    params = init_params(k_param, C_IN, OUT_CHANNELS, MS_CFG)
    packed = pack_params(params, MS_CFG)
    x = jax.random.normal(k_x, (N, C_IN, T, V), jnp.float32)

    out = mstcn_sparse_forward(x, packed, MS_CFG)
    out = jax.block_until_ready(out)

    assert out.shape == (N, OUT_CHANNELS, T, V), out.shape
    assert bool(jnp.all(jnp.isfinite(out)))
    print("KERNEL_OK")
</pallas_src>

<mosaic_0001>
module attributes {stable_mosaic.version = 11 : i64} {
  func.func @kernel(%arg0: i32, %arg1: memref<8x24x8xbf16, #tpu.memory_space<vmem>>, %arg2: memref<8x12xbf16, #tpu.memory_space<vmem>>, %arg3: memref<1x12xf32, #tpu.memory_space<vmem>>, %arg4: memref<1x12xf32, #tpu.memory_space<vmem>>, %arg5: memref<24x1xf32, #tpu.memory_space<vmem>>, %arg6: memref<3x2x2xbf16, #tpu.memory_space<vmem>>, %arg7: memref<3x2x2xbf16, #tpu.memory_space<vmem>>, %arg8: memref<3x2x2xbf16, #tpu.memory_space<vmem>>, %arg9: memref<3x2x2xbf16, #tpu.memory_space<vmem>>, %arg10: memref<1x12xf32, #tpu.memory_space<vmem>>, %arg11: memref<1x12xf32, #tpu.memory_space<vmem>>, %arg12: memref<12x12xbf16, #tpu.memory_space<vmem>>, %arg13: memref<1x12xf32, #tpu.memory_space<vmem>>, %arg14: memref<8x16x12xf32, #tpu.memory_space<vmem>>, %arg15: memref<8x16x12xf32, #tpu.memory_space<vmem>>) attributes {dimension_semantics = [#tpu.dimension_semantics<parallel>], iteration_bounds = array<i64: 1>, scalar_prefetch = 0 : i64, scratch_operands = 1 : i64, tpu.core_type = #tpu.core_type<tc>, window_params = [{transform_indices = @transform_0, window_bounds = array<i64: 8, 24, 8>}, {pipeline_mode = #tpu.pipeline_mode<synchronous>, transform_indices = @transform_1, window_bounds = array<i64: 8, 12>}, {pipeline_mode = #tpu.pipeline_mode<synchronous>, transform_indices = @transform_2, window_bounds = array<i64: 1, 12>}, {pipeline_mode = #tpu.pipeline_mode<synchronous>, transform_indices = @transform_3, window_bounds = array<i64: 1, 12>}, {pipeline_mode = #tpu.pipeline_mode<synchronous>, transform_indices = @transform_4, window_bounds = array<i64: 24, 1>}, {pipeline_mode = #tpu.pipeline_mode<synchronous>, transform_indices = @transform_5, window_bounds = array<i64: 3, 2, 2>}, {pipeline_mode = #tpu.pipeline_mode<synchronous>, transform_indices = @transform_6, window_bounds = array<i64: 3, 2, 2>}, {pipeline_mode = #tpu.pipeline_mode<synchronous>, transform_indices = @transform_7, window_bounds = array<i64: 3, 2, 2>}, {pipeline_mode = #tpu.pipeline_mode<synchronous>, transform_indices = @transform_8, window_bounds = array<i64: 3, 2, 2>}, {pipeline_mode = #tpu.pipeline_mode<synchronous>, transform_indices = @transform_9, window_bounds = array<i64: 1, 12>}, {pipeline_mode = #tpu.pipeline_mode<synchronous>, transform_indices = @transform_10, window_bounds = array<i64: 1, 12>}, {pipeline_mode = #tpu.pipeline_mode<synchronous>, transform_indices = @transform_11, window_bounds = array<i64: 12, 12>}, {pipeline_mode = #tpu.pipeline_mode<synchronous>, transform_indices = @transform_12, window_bounds = array<i64: 1, 12>}, {transform_indices = @transform_13, window_bounds = array<i64: 8, 16, 12>}]} {
    %c0 = arith.constant 0 : index
    %c0_0 = arith.constant 0 : index
    %c0_1 = arith.constant 0 : index
    %0 = vector.load %arg1[%c0, %c0_0, %c0_1] : memref<8x24x8xbf16, #tpu.memory_space<vmem>>, vector<8x24x8xbf16>
    %1 = vector.shape_cast %0 : vector<8x24x8xbf16> to vector<192x8xbf16>
    %c0_2 = arith.constant 0 : index
    %c0_3 = arith.constant 0 : index
    %2 = vector.load %arg2[%c0_2, %c0_3] : memref<8x12xbf16, #tpu.memory_space<vmem>>, vector<8x12xbf16>
    %cst = arith.constant dense<0.000000e+00> : vector<192x12xf32>
    %3 = tpu.matmul %1, %2, %cst {dimension_numbers = #tpu.dot_dimension_numbers<[1], [0], [0], [1], [0, 0, 1, 1], [], []>} : vector<192x8xbf16>, vector<8x12xbf16>, vector<192x12xf32> -> vector<192x12xf32>
    %c0_4 = arith.constant 0 : index
    %c0_5 = arith.constant 0 : index
    %4 = vector.load %arg3[%c0_4, %c0_5] : memref<1x12xf32, #tpu.memory_space<vmem>>, vector<1x12xf32>
    %5 = vector.broadcast %4 : vector<1x12xf32> to vector<192x12xf32>
    %6 = arith.addf %3, %5 : vector<192x12xf32>
    %c0_6 = arith.constant 0 : index
    %c0_7 = arith.constant 0 : index
    %7 = vector.load %arg4[%c0_6, %c0_7] : memref<1x12xf32, #tpu.memory_space<vmem>>, vector<1x12xf32>
    %cst_8 = arith.constant 5.000000e-01 : f32
    %8 = vector.broadcast %cst_8 : f32 to vector<1x12xf32>
    %9 = arith.cmpf ogt, %7, %8 : vector<1x12xf32>
    %cst_9 = arith.constant 0.000000e+00 : f32
    %10 = vector.broadcast %cst_9 : f32 to vector<192x12xf32>
    %11 = arith.maximumf %6, %10 : vector<192x12xf32>
    %12 = vector.shape_cast %9 : vector<1x12xi1> to vector<1x12xi1>
    %13 = vector.broadcast %12 : vector<1x12xi1> to vector<192x12xi1>
    %14 = arith.select %13, %11, %6 : vector<192x12xi1>, vector<192x12xf32>
    %15 = vector.shape_cast %14 : vector<192x12xf32> to vector<8x24x12xf32>
    %c0_10 = arith.constant 0 : index
    %c0_11 = arith.constant 0 : index
    %16 = vector.load %arg5[%c0_10, %c0_11] : memref<24x1xf32, #tpu.memory_space<vmem>>, vector<24x1xf32>
    %17 = vector.shape_cast %16 : vector<24x1xf32> to vector<1x24x1xf32>
    %18 = vector.broadcast %17 : vector<1x24x1xf32> to vector<8x24x12xf32>
    %19 = arith.mulf %15, %18 : vector<8x24x12xf32>
    %20 = arith.truncf %19 : vector<8x24x12xf32> to vector<8x24x12xbf16>
    %21 = vector.extract_strided_slice %20 {offsets = [0, 3, 0], sizes = [8, 16, 2], strides = [1, 1, 1]} : vector<8x24x12xbf16> to vector<8x16x2xbf16>
    %22 = vector.shape_cast %21 : vector<8x16x2xbf16> to vector<128x2xbf16>
    %c0_12 = arith.constant 0 : index
    %c0_13 = arith.constant 0 : index
    %c0_14 = arith.constant 0 : index
    %23 = vector.load %arg6[%c0_12, %c0_13, %c0_14] : memref<3x2x2xbf16, #tpu.memory_space<vmem>>, vector<1x2x2xbf16>
    %24 = vector.shape_cast %23 : vector<1x2x2xbf16> to vector<2x2xbf16>
    %cst_15 = arith.constant dense<0.000000e+00> : vector<128x2xf32>
    %25 = tpu.matmul %22, %24, %cst_15 {dimension_numbers = #tpu.dot_dimension_numbers<[1], [0], [0], [1], [0, 0, 1, 1], [], []>} : vector<128x2xbf16>, vector<2x2xbf16>, vector<128x2xf32> -> vector<128x2xf32>
    %26 = vector.extract_strided_slice %20 {offsets = [0, 4, 0], sizes = [8, 16, 2], strides = [1, 1, 1]} : vector<8x24x12xbf16> to vector<8x16x2xbf16>
    %27 = vector.shape_cast %26 : vector<8x16x2xbf16> to vector<128x2xbf16>
    %c1 = arith.constant 1 : index
    %c0_16 = arith.constant 0 : index
    %c0_17 = arith.constant 0 : index
    %28 = vector.load %arg6[%c1, %c0_16, %c0_17] : memref<3x2x2xbf16, #tpu.memory_space<vmem>>, vector<1x2x2xbf16>
    %29 = vector.shape_cast %28 : vector<1x2x2xbf16> to vector<2x2xbf16>
    %cst_18 = arith.constant dense<0.000000e+00> : vector<128x2xf32>
    %30 = tpu.matmul %27, %29, %cst_18 {dimension_numbers = #tpu.dot_dimension_numbers<[1], [0], [0], [1], [0, 0, 1, 1], [], []>} : vector<128x2xbf16>, vector<2x2xbf16>, vector<128x2xf32> -> vector<128x2xf32>
    %31 = arith.addf %25, %30 : vector<128x2xf32>
    %32 = vector.extract_strided_slice %20 {offsets = [0, 5, 0], sizes = [8, 16, 2], strides = [1, 1, 1]} : vector<8x24x12xbf16> to vector<8x16x2xbf16>
    %33 = vector.shape_cast %32 : vector<8x16x2xbf16> to vector<128x2xbf16>
    %c2 = arith.constant 2 : index
    %c0_19 = arith.constant 0 : index
    %c0_20 = arith.constant 0 : index
    %34 = vector.load %arg6[%c2, %c0_19, %c0_20] : memref<3x2x2xbf16, #tpu.memory_space<vmem>>, vector<1x2x2xbf16>
    %35 = vector.shape_cast %34 : vector<1x2x2xbf16> to vector<2x2xbf16>
    %cst_21 = arith.constant dense<0.000000e+00> : vector<128x2xf32>
    %36 = tpu.matmul %33, %35, %cst_21 {dimension_numbers = #tpu.dot_dimension_numbers<[1], [0], [0], [1], [0, 0, 1, 1], [], []>} : vector<128x2xbf16>, vector<2x2xbf16>, vector<128x2xf32> -> vector<128x2xf32>
    %37 = arith.addf %31, %36 : vector<128x2xf32>
    %38 = vector.shape_cast %37 : vector<128x2xf32> to vector<8x16x2xf32>
    %c0_22 = arith.constant 0 : index
    %c0_23 = arith.constant 0 : index
    %c0_24 = arith.constant 0 : index
    %39 = vector.load %arg15[%c0_22, %c0_23, %c0_24] : memref<8x16x12xf32, #tpu.memory_space<vmem>>, vector<8x16x2xf32>
    tpu.vector_store %arg15[%c0_22, %c0_23, %c0_24], %38 {strides = array<i32>} : memref<8x16x12xf32, #tpu.memory_space<vmem>>, vector<8x16x2xf32>,
    %40 = vector.extract_strided_slice %20 {offsets = [0, 2, 2], sizes = [8, 16, 2], strides = [1, 1, 1]} : vector<8x24x12xbf16> to vector<8x16x2xbf16>
    %41 = vector.shape_cast %40 : vector<8x16x2xbf16> to vector<128x2xbf16>
    %c0_25 = arith.constant 0 : index
    %c0_26 = arith.constant 0 : index
    %c0_27 = arith.constant 0 : index
    %42 = vector.load %arg7[%c0_25, %c0_26, %c0_27] : memref<3x2x2xbf16, #tpu.memory_space<vmem>>, vector<1x2x2xbf16>
    %43 = vector.shape_cast %42 : vector<1x2x2xbf16> to vector<2x2xbf16>
    %cst_28 = arith.constant dense<0.000000e+00> : vector<128x2xf32>
    %44 = tpu.matmul %41, %43, %cst_28 {dimension_numbers = #tpu.dot_dimension_numbers<[1], [0], [0], [1], [0, 0, 1, 1], [], []>} : vector<128x2xbf16>, vector<2x2xbf16>, vector<128x2xf32> -> vector<128x2xf32>
    %45 = vector.extract_strided_slice %20 {offsets = [0, 4, 2], sizes = [8, 16, 2], strides = [1, 1, 1]} : vector<8x24x12xbf16> to vector<8x16x2xbf16>
    %46 = vector.shape_cast %45 : vector<8x16x2xbf16> to vector<128x2xbf16>
    %c1_29 = arith.constant 1 : index
    %c0_30 = arith.constant 0 : index
    %c0_31 = arith.constant 0 : index
    %47 = vector.load %arg7[%c1_29, %c0_30, %c0_31] : memref<3x2x2xbf16, #tpu.memory_space<vmem>>, vector<1x2x2xbf16>
    %48 = vector.shape_cast %47 : vector<1x2x2xbf16> to vector<2x2xbf16>
    %cst_32 = arith.constant dense<0.000000e+00> : vector<128x2xf32>
    %49 = tpu.matmul %46, %48, %cst_32 {dimension_numbers = #tpu.dot_dimension_numbers<[1], [0], [0], [1], [0, 0, 1, 1], [], []>} : vector<128x2xbf16>, vector<2x2xbf16>, vector<128x2xf32> -> vector<128x2xf32>
    %50 = arith.addf %44, %49 : vector<128x2xf32>
    %51 = vector.extract_strided_slice %20 {offsets = [0, 6, 2], sizes = [8, 16, 2], strides = [1, 1, 1]} : vector<8x24x12xbf16> to vector<8x16x2xbf16>
    %52 = vector.shape_cast %51 : vector<8x16x2xbf16> to vector<128x2xbf16>
    %c2_33 = arith.constant 2 : index
    %c0_34 = arith.constant 0 : index
    %c0_35 = arith.constant 0 : index
    %53 = vector.load %arg7[%c2_33, %c0_34, %c0_35] : memref<3x2x2xbf16, #tpu.memory_space<vmem>>, vector<1x2x2xbf16>
    %54 = vector.shape_cast %53 : vector<1x2x2xbf16> to vector<2x2xbf16>
    %cst_36 = arith.constant dense<0.000000e+00> : vector<128x2xf32>
    %55 = tpu.matmul %52, %54, %cst_36 {dimension_numbers = #tpu.dot_dimension_numbers<[1], [0], [0], [1], [0, 0, 1, 1], [], []>} : vector<128x2xbf16>, vector<2x2xbf16>, vector<128x2xf32> -> vector<128x2xf32>
    %56 = arith.addf %50, %55 : vector<128x2xf32>
    %57 = vector.shape_cast %56 : vector<128x2xf32> to vector<8x16x2xf32>
    %c0_37 = arith.constant 0 : index
    %c0_38 = arith.constant 0 : index
    %c2_39 = arith.constant 2 : index
    %58 = vector.load %arg15[%c0_37, %c0_38, %c2_39] : memref<8x16x12xf32, #tpu.memory_space<vmem>>, vector<8x16x2xf32>
    tpu.vector_store %arg15[%c0_37, %c0_38, %c2_39], %57 {strides = array<i32>} : memref<8x16x12xf32, #tpu.memory_space<vmem>>, vector<8x16x2xf32>,
    %59 = vector.extract_strided_slice %20 {offsets = [0, 1, 4], sizes = [8, 16, 2], strides = [1, 1, 1]} : vector<8x24x12xbf16> to vector<8x16x2xbf16>
    %60 = vector.shape_cast %59 : vector<8x16x2xbf16> to vector<128x2xbf16>
    %c0_40 = arith.constant 0 : index
    %c0_41 = arith.constant 0 : index
    %c0_42 = arith.constant 0 : index
    %61 = vector.load %arg8[%c0_40, %c0_41, %c0_42] : memref<3x2x2xbf16, #tpu.memory_space<vmem>>, vector<1x2x2xbf16>
    %62 = vector.shape_cast %61 : vector<1x2x2xbf16> to vector<2x2xbf16>
    %cst_43 = arith.constant dense<0.000000e+00> : vector<128x2xf32>
    %63 = tpu.matmul %60, %62, %cst_43 {dimension_numbers = #tpu.dot_dimension_numbers<[1], [0], [0], [1], [0, 0, 1, 1], [], []>} : vector<128x2xbf16>, vector<2x2xbf16>, vector<128x2xf32> -> vector<128x2xf32>
    %64 = vector.extract_strided_slice %20 {offsets = [0, 4, 4], sizes = [8, 16, 2], strides = [1, 1, 1]} : vector<8x24x12xbf16> to vector<8x16x2xbf16>
    %65 = vector.shape_cast %64 : vector<8x16x2xbf16> to vector<128x2xbf16>
    %c1_44 = arith.constant 1 : index
    %c0_45 = arith.constant 0 : index
    %c0_46 = arith.constant 0 : index
    %66 = vector.load %arg8[%c1_44, %c0_45, %c0_46] : memref<3x2x2xbf16, #tpu.memory_space<vmem>>, vector<1x2x2xbf16>
    %67 = vector.shape_cast %66 : vector<1x2x2xbf16> to vector<2x2xbf16>
    %cst_47 = arith.constant dense<0.000000e+00> : vector<128x2xf32>
    %68 = tpu.matmul %65, %67, %cst_47 {dimension_numbers = #tpu.dot_dimension_numbers<[1], [0], [0], [1], [0, 0, 1, 1], [], []>} : vector<128x2xbf16>, vector<2x2xbf16>, vector<128x2xf32> -> vector<128x2xf32>
    %69 = arith.addf %63, %68 : vector<128x2xf32>
    %70 = vector.extract_strided_slice %20 {offsets = [0, 7, 4], sizes = [8, 16, 2], strides = [1, 1, 1]} : vector<8x24x12xbf16> to vector<8x16x2xbf16>
    %71 = vector.shape_cast %70 : vector<8x16x2xbf16> to vector<128x2xbf16>
    %c2_48 = arith.constant 2 : index
    %c0_49 = arith.constant 0 : index
    %c0_50 = arith.constant 0 : index
    %72 = vector.load %arg8[%c2_48, %c0_49, %c0_50] : memref<3x2x2xbf16, #tpu.memory_space<vmem>>, vector<1x2x2xbf16>
    %73 = vector.shape_cast %72 : vector<1x2x2xbf16> to vector<2x2xbf16>
    %cst_51 = arith.constant dense<0.000000e+00> : vector<128x2xf32>
    %74 = tpu.matmul %71, %73, %cst_51 {dimension_numbers = #tpu.dot_dimension_numbers<[1], [0], [0], [1], [0, 0, 1, 1], [], []>} : vector<128x2xbf16>, vector<2x2xbf16>, vector<128x2xf32> -> vector<128x2xf32>
    %75 = arith.addf %69, %74 : vector<128x2xf32>
    %76 = vector.shape_cast %75 : vector<128x2xf32> to vector<8x16x2xf32>
    %c0_52 = arith.constant 0 : index
    %c0_53 = arith.constant 0 : index
    %c4 = arith.constant 4 : index
    %77 = vector.load %arg15[%c0_52, %c0_53, %c4] : memref<8x16x12xf32, #tpu.memory_space<vmem>>, vector<8x16x2xf32>
    tpu.vector_store %arg15[%c0_52, %c0_53, %c4], %76 {strides = array<i32>} : memref<8x16x12xf32, #tpu.memory_space<vmem>>, vector<8x16x2xf32>,
    %78 = vector.extract_strided_slice %20 {offsets = [0, 0, 6], sizes = [8, 16, 2], strides = [1, 1, 1]} : vector<8x24x12xbf16> to vector<8x16x2xbf16>
    %79 = vector.shape_cast %78 : vector<8x16x2xbf16> to vector<128x2xbf16>
    %c0_54 = arith.constant 0 : index
    %c0_55 = arith.constant 0 : index
    %c0_56 = arith.constant 0 : index
    %80 = vector.load %arg9[%c0_54, %c0_55, %c0_56] : memref<3x2x2xbf16, #tpu.memory_space<vmem>>, vector<1x2x2xbf16>
    %81 = vector.shape_cast %80 : vector<1x2x2xbf16> to vector<2x2xbf16>
    %cst_57 = arith.constant dense<0.000000e+00> : vector<128x2xf32>
    %82 = tpu.matmul %79, %81, %cst_57 {dimension_numbers = #tpu.dot_dimension_numbers<[1], [0], [0], [1], [0, 0, 1, 1], [], []>} : vector<128x2xbf16>, vector<2x2xbf16>, vector<128x2xf32> -> vector<128x2xf32>
    %83 = vector.extract_strided_slice %20 {offsets = [0, 4, 6], sizes = [8, 16, 2], strides = [1, 1, 1]} : vector<8x24x12xbf16> to vector<8x16x2xbf16>
    %84 = vector.shape_cast %83 : vector<8x16x2xbf16> to vector<128x2xbf16>
    %c1_58 = arith.constant 1 : index
    %c0_59 = arith.constant 0 : index
    %c0_60 = arith.constant 0 : index
    %85 = vector.load %arg9[%c1_58, %c0_59, %c0_60] : memref<3x2x2xbf16, #tpu.memory_space<vmem>>, vector<1x2x2xbf16>
    %86 = vector.shape_cast %85 : vector<1x2x2xbf16> to vector<2x2xbf16>
    %cst_61 = arith.constant dense<0.000000e+00> : vector<128x2xf32>
    %87 = tpu.matmul %84, %86, %cst_61 {dimension_numbers = #tpu.dot_dimension_numbers<[1], [0], [0], [1], [0, 0, 1, 1], [], []>} : vector<128x2xbf16>, vector<2x2xbf16>, vector<128x2xf32> -> vector<128x2xf32>
    %88 = arith.addf %82, %87 : vector<128x2xf32>
    %89 = vector.extract_strided_slice %20 {offsets = [0, 8, 6], sizes = [8, 16, 2], strides = [1, 1, 1]} : vector<8x24x12xbf16> to vector<8x16x2xbf16>
    %90 = vector.shape_cast %89 : vector<8x16x2xbf16> to vector<128x2xbf16>
    %c2_62 = arith.constant 2 : index
    %c0_63 = arith.constant 0 : index
    %c0_64 = arith.constant 0 : index
    %91 = vector.load %arg9[%c2_62, %c0_63, %c0_64] : memref<3x2x2xbf16, #tpu.memory_space<vmem>>, vector<1x2x2xbf16>
    %92 = vector.shape_cast %91 : vector<1x2x2xbf16> to vector<2x2xbf16>
    %cst_65 = arith.constant dense<0.000000e+00> : vector<128x2xf32>
    %93 = tpu.matmul %90, %92, %cst_65 {dimension_numbers = #tpu.dot_dimension_numbers<[1], [0], [0], [1], [0, 0, 1, 1], [], []>} : vector<128x2xbf16>, vector<2x2xbf16>, vector<128x2xf32> -> vector<128x2xf32>
    %94 = arith.addf %88, %93 : vector<128x2xf32>
    %95 = vector.shape_cast %94 : vector<128x2xf32> to vector<8x16x2xf32>
    %c0_66 = arith.constant 0 : index
    %c0_67 = arith.constant 0 : index
    %c6 = arith.constant 6 : index
    %96 = vector.load %arg15[%c0_66, %c0_67, %c6] : memref<8x16x12xf32, #tpu.memory_space<vmem>>, vector<8x16x2xf32>
    tpu.vector_store %arg15[%c0_66, %c0_67, %c6], %95 {strides = array<i32>} : memref<8x16x12xf32, #tpu.memory_space<vmem>>, vector<8x16x2xf32>,
    %97 = vector.extract_strided_slice %20 {offsets = [0, 3, 8], sizes = [8, 16, 2], strides = [1, 1, 1]} : vector<8x24x12xbf16> to vector<8x16x2xbf16>
    %98 = arith.extf %97 : vector<8x16x2xbf16> to vector<8x16x2xf32>
    %99 = vector.extract_strided_slice %20 {offsets = [0, 4, 8], sizes = [8, 16, 2], strides = [1, 1, 1]} : vector<8x24x12xbf16> to vector<8x16x2xbf16>
    %100 = arith.extf %99 : vector<8x16x2xbf16> to vector<8x16x2xf32>
    %101 = arith.maximumf %98, %100 : vector<8x16x2xf32>
    %102 = vector.extract_strided_slice %20 {offsets = [0, 5, 8], sizes = [8, 16, 2], strides = [1, 1, 1]} : vector<8x24x12xbf16> to vector<8x16x2xbf16>
    %103 = arith.extf %102 : vector<8x16x2xbf16> to vector<8x16x2xf32>
    %104 = arith.maximumf %101, %103 : vector<8x16x2xf32>
    %c0_68 = arith.constant 0 : index
    %c0_69 = arith.constant 0 : index
    %c8 = arith.constant 8 : index
    %105 = vector.load %arg15[%c0_68, %c0_69, %c8] : memref<8x16x12xf32, #tpu.memory_space<vmem>>, vector<8x16x2xf32>
    tpu.vector_store %arg15[%c0_68, %c0_69, %c8], %104 {strides = array<i32>} : memref<8x16x12xf32, #tpu.memory_space<vmem>>, vector<8x16x2xf32>,
    %106 = vector.extract_strided_slice %20 {offsets = [0, 4, 10], sizes = [8, 16, 2], strides = [1, 1, 1]} : vector<8x24x12xbf16> to vector<8x16x2xbf16>
    %107 = arith.extf %106 : vector<8x16x2xbf16> to vector<8x16x2xf32>
    %c0_70 = arith.constant 0 : index
    %c0_71 = arith.constant 0 : index
    %c10 = arith.constant 10 : index
    %108 = vector.load %arg15[%c0_70, %c0_71, %c10] : memref<8x16x12xf32, #tpu.memory_space<vmem>>, vector<8x16x2xf32>
    tpu.vector_store %arg15[%c0_70, %c0_71, %c10], %107 {strides = array<i32>} : memref<8x16x12xf32, #tpu.memory_space<vmem>>, vector<8x16x2xf32>,
    %c0_72 = arith.constant 0 : index
    %c0_73 = arith.constant 0 : index
    %c0_74 = arith.constant 0 : index
    %109 = vector.load %arg15[%c0_72, %c0_73, %c0_74] : memref<8x16x12xf32, #tpu.memory_space<vmem>>, vector<8x16x12xf32>
    %c0_75 = arith.constant 0 : index
    %c0_76 = arith.constant 0 : index
    %110 = vector.load %arg10[%c0_75, %c0_76] : memref<1x12xf32, #tpu.memory_space<vmem>>, vector<1x12xf32>
    %111 = vector.shape_cast %110 : vector<1x12xf32> to vector<1x1x12xf32>
    %112 = vector.broadcast %111 : vector<1x1x12xf32> to vector<8x16x12xf32>
    %113 = arith.mulf %109, %112 : vector<8x16x12xf32>
    %c0_77 = arith.constant 0 : index
    %c0_78 = arith.constant 0 : index
    %114 = vector.load %arg11[%c0_77, %c0_78] : memref<1x12xf32, #tpu.memory_space<vmem>>, vector<1x12xf32>
    %115 = vector.shape_cast %114 : vector<1x12xf32> to vector<1x1x12xf32>
    %116 = vector.broadcast %115 : vector<1x1x12xf32> to vector<8x16x12xf32>
    %117 = arith.addf %113, %116 : vector<8x16x12xf32>
    %cst_79 = arith.constant 0.000000e+00 : f32
    %118 = vector.broadcast %cst_79 : f32 to vector<8x16x12xf32>
    %119 = arith.maximumf %117, %118 : vector<8x16x12xf32>
    %120 = arith.truncf %119 : vector<8x16x12xf32> to vector<8x16x12xbf16>
    %121 = vector.shape_cast %120 : vector<8x16x12xbf16> to vector<128x12xbf16>
    %c0_80 = arith.constant 0 : index
    %c0_81 = arith.constant 0 : index
    %122 = vector.load %arg12[%c0_80, %c0_81] : memref<12x12xbf16, #tpu.memory_space<vmem>>, vector<12x12xbf16>
    %cst_82 = arith.constant dense<0.000000e+00> : vector<128x12xf32>
    %123 = tpu.matmul %121, %122, %cst_82 {dimension_numbers = #tpu.dot_dimension_numbers<[1], [0], [0], [1], [0, 0, 1, 1], [], []>} : vector<128x12xbf16>, vector<12x12xbf16>, vector<128x12xf32> -> vector<128x12xf32>
    %c0_83 = arith.constant 0 : index
    %c0_84 = arith.constant 0 : index
    %124 = vector.load %arg13[%c0_83, %c0_84] : memref<1x12xf32, #tpu.memory_space<vmem>>, vector<1x12xf32>
    %125 = vector.broadcast %124 : vector<1x12xf32> to vector<128x12xf32>
    %126 = arith.addf %123, %125 : vector<128x12xf32>
    %127 = vector.shape_cast %126 : vector<128x12xf32> to vector<8x16x12xf32>
    %c0_85 = arith.constant 0 : index
    %c0_86 = arith.constant 0 : index
    %c0_87 = arith.constant 0 : index
    %128 = vector.load %arg14[%c0_85, %c0_86, %c0_87] : memref<8x16x12xf32, #tpu.memory_space<vmem>>, vector<8x16x12xf32>
    tpu.vector_store %arg14[%c0_85, %c0_86, %c0_87], %127 {strides = array<i32>} : memref<8x16x12xf32, #tpu.memory_space<vmem>>, vector<8x16x12xf32>,
    return
  }
  func.func @transform_0(%arg0: i32) -> (i32, i32, i32) {
    %c0_i32 = arith.constant 0 : i32
    %c0_i32_0 = arith.constant 0 : i32
    %c0_i32_1 = arith.constant 0 : i32
    return %arg0, %c0_i32, %c0_i32_0 : i32, i32, i32
  }
  func.func @transform_1(%arg0: i32) -> (i32, i32) {
    %c0_i32 = arith.constant 0 : i32
    %c0_i32_0 = arith.constant 0 : i32
    %c0_i32_1 = arith.constant 0 : i32
    return %c0_i32, %c0_i32_0 : i32, i32
  }
  func.func @transform_2(%arg0: i32) -> (i32, i32) {
    %c0_i32 = arith.constant 0 : i32
    %c0_i32_0 = arith.constant 0 : i32
    %c0_i32_1 = arith.constant 0 : i32
    return %c0_i32, %c0_i32_0 : i32, i32
  }
  func.func @transform_3(%arg0: i32) -> (i32, i32) {
    %c0_i32 = arith.constant 0 : i32
    %c0_i32_0 = arith.constant 0 : i32
    %c0_i32_1 = arith.constant 0 : i32
    return %c0_i32, %c0_i32_0 : i32, i32
  }
  func.func @transform_4(%arg0: i32) -> (i32, i32) {
    %c0_i32 = arith.constant 0 : i32
    %c0_i32_0 = arith.constant 0 : i32
    %c0_i32_1 = arith.constant 0 : i32
    return %c0_i32, %c0_i32_0 : i32, i32
  }
  func.func @transform_5(%arg0: i32) -> (i32, i32, i32) {
    %c0_i32 = arith.constant 0 : i32
    %c0_i32_0 = arith.constant 0 : i32
    %c0_i32_1 = arith.constant 0 : i32
    %c0_i32_2 = arith.constant 0 : i32
    return %c0_i32, %c0_i32_0, %c0_i32_1 : i32, i32, i32
  }
  func.func @transform_6(%arg0: i32) -> (i32, i32, i32) {
    %c0_i32 = arith.constant 0 : i32
    %c0_i32_0 = arith.constant 0 : i32
    %c0_i32_1 = arith.constant 0 : i32
    %c0_i32_2 = arith.constant 0 : i32
    return %c0_i32, %c0_i32_0, %c0_i32_1 : i32, i32, i32
  }
  func.func @transform_7(%arg0: i32) -> (i32, i32, i32) {
    %c0_i32 = arith.constant 0 : i32
    %c0_i32_0 = arith.constant 0 : i32
    %c0_i32_1 = arith.constant 0 : i32
    %c0_i32_2 = arith.constant 0 : i32
    return %c0_i32, %c0_i32_0, %c0_i32_1 : i32, i32, i32
  }
  func.func @transform_8(%arg0: i32) -> (i32, i32, i32) {
    %c0_i32 = arith.constant 0 : i32
    %c0_i32_0 = arith.constant 0 : i32
    %c0_i32_1 = arith.constant 0 : i32
    %c0_i32_2 = arith.constant 0 : i32
    return %c0_i32, %c0_i32_0, %c0_i32_1 : i32, i32, i32
  }
  func.func @transform_9(%arg0: i32) -> (i32, i32) {
    %c0_i32 = arith.constant 0 : i32
    %c0_i32_0 = arith.constant 0 : i32
    %c0_i32_1 = arith.constant 0 : i32
    return %c0_i32, %c0_i32_0 : i32, i32
  }
  func.func @transform_10(%arg0: i32) -> (i32, i32) {
    %c0_i32 = arith.constant 0 : i32
    %c0_i32_0 = arith.constant 0 : i32
    %c0_i32_1 = arith.constant 0 : i32
    return %c0_i32, %c0_i32_0 : i32, i32
  }
  func.func @transform_11(%arg0: i32) -> (i32, i32) {
    %c0_i32 = arith.constant 0 : i32
    %c0_i32_0 = arith.constant 0 : i32
    %c0_i32_1 = arith.constant 0 : i32
    return %c0_i32, %c0_i32_0 : i32, i32
  }
  func.func @transform_12(%arg0: i32) -> (i32, i32) {
    %c0_i32 = arith.constant 0 : i32
    %c0_i32_0 = arith.constant 0 : i32
    %c0_i32_1 = arith.constant 0 : i32
    return %c0_i32, %c0_i32_0 : i32, i32
  }
  func.func @transform_13(%arg0: i32) -> (i32, i32, i32) {
    %c0_i32 = arith.constant 0 : i32
    %c0_i32_0 = arith.constant 0 : i32
    %c0_i32_1 = arith.constant 0 : i32
    return %arg0, %c0_i32, %c0_i32_0 : i32, i32, i32
  }
}

</mosaic_0001>

<llo_original>
// kernel: tpu_custom_call.1
$region0: #{tpu_custom_call.1}
  #allocation0 [shape = 'u32[]', space=smem, size = 0x4, offset = 0x4, fixed_abs, tag = 'smem constant byte address 0x4 - core index']
  #allocation1 [shape = 'u32[144,128]{1,0:T(1,128)}', space=vmem, size = 0x12000, scoped, tag = 'internal scratch']
  #allocation2 [shape = 'f32[8,16,12]{2,1,0:T(8,128)}', space=vmem, size = 0x10000, scoped, tag = 'scratch operand']
  %s0 = inlined_call_operand.vmem [shape: bf16[8,24,8], index: 0, kind: input, shape index: {}]
  %s1 = inlined_call_operand.vmem [shape: bf16[8,12], index: 1, kind: input, shape index: {}]
  %s2 = inlined_call_operand.vmem [shape: f32[1,12], index: 2, kind: input, shape index: {}]
  %s3 = inlined_call_operand.vmem [shape: f32[1,12], index: 3, kind: input, shape index: {}]
  %s4 = inlined_call_operand.vmem [shape: f32[24,1], index: 4, kind: input, shape index: {}]
  %s5 = inlined_call_operand.vmem [shape: bf16[3,2,2], index: 5, kind: input, shape index: {}]
  %s6 = inlined_call_operand.vmem [shape: bf16[3,2,2], index: 6, kind: input, shape index: {}]
  %s7 = inlined_call_operand.vmem [shape: bf16[3,2,2], index: 7, kind: input, shape index: {}]
  %s8 = inlined_call_operand.vmem [shape: bf16[3,2,2], index: 8, kind: input, shape index: {}]
  %s9 = inlined_call_operand.vmem [shape: f32[1,12], index: 9, kind: input, shape index: {}]
  %s10 = inlined_call_operand.vmem [shape: f32[1,12], index: 10, kind: input, shape index: {}]
  %s11 = inlined_call_operand.vmem [shape: bf16[12,12], index: 11, kind: input, shape index: {}]
  %s12 = inlined_call_operand.vmem [shape: f32[1,12], index: 12, kind: input, shape index: {}]
  %s13 = inlined_call_operand.vmem [shape: f32[8,16,12], index: 13, kind: output, shape index: {}]
  %s14 = sld [smem:[#allocation0]]
  $region62: #{tpu_custom_call.1} parent=0
    _
  %s16 = ssub.s32 1, %s14
  %s17 = scalar_select 0, %s16, %s14
  // Predicated region
  $region2: #{tpu_custom_call.1} parent=0 // pred_check
    _
  $region3: #{tpu_custom_call.1} parent=0 // pred_check_branch
    %19 = sbr.rel (0) target = $region5
  $region4: #{tpu_custom_call.1} parent=0 // pred_region
    _
  $region5: #{tpu_custom_call.1} parent=0 // pred_fallthru
    _
  // Predicated region
  $region6: #{tpu_custom_call.1} parent=0 // pred_check
    _
  $region7: #{tpu_custom_call.1} parent=0 // pred_check_branch
    %21 = sbr.rel (0) target = $region9
  $region8: #{tpu_custom_call.1} parent=0 // pred_region
    _
  $region9: #{tpu_custom_call.1} parent=0 // pred_fallthru
    _
  // Predicated region
  $region10: #{tpu_custom_call.1} parent=0 // pred_check
    _
  $region11: #{tpu_custom_call.1} parent=0 // pred_check_branch
    %23 = sbr.rel (0) target = $region13
  $region12: #{tpu_custom_call.1} parent=0 // pred_region
    _
  $region13: #{tpu_custom_call.1} parent=0 // pred_fallthru
    _
  // Predicated region
  $region14: #{tpu_custom_call.1} parent=0 // pred_check
    _
  $region15: #{tpu_custom_call.1} parent=0 // pred_check_branch
    %25 = sbr.rel (0) target = $region17
  $region16: #{tpu_custom_call.1} parent=0 // pred_region
    _
  $region17: #{tpu_custom_call.1} parent=0 // pred_fallthru
    _
  // Predicated region
  $region18: #{tpu_custom_call.1} parent=0 // pred_check
    _
  $region19: #{tpu_custom_call.1} parent=0 // pred_check_branch
    %27 = sbr.rel (0) target = $region21
  $region20: #{tpu_custom_call.1} parent=0 // pred_region
    _
  $region21: #{tpu_custom_call.1} parent=0 // pred_fallthru
    _
  // Predicated region
  $region22: #{tpu_custom_call.1} parent=0 // pred_check
    _
  $region23: #{tpu_custom_call.1} parent=0 // pred_check_branch
    %29 = sbr.rel (0) target = $region25
  $region24: #{tpu_custom_call.1} parent=0 // pred_region
    _
  $region25: #{tpu_custom_call.1} parent=0 // pred_fallthru
    _
  // Predicated region
  $region26: #{tpu_custom_call.1} parent=0 // pred_check
    _
  $region27: #{tpu_custom_call.1} parent=0 // pred_check_branch
    %31 = sbr.rel (0) target = $region29
  $region28: #{tpu_custom_call.1} parent=0 // pred_region
    _
  $region29: #{tpu_custom_call.1} parent=0 // pred_fallthru
    _
  // Predicated region
  $region30: #{tpu_custom_call.1} parent=0 // pred_check
    _
  $region31: #{tpu_custom_call.1} parent=0 // pred_check_branch
    %33 = sbr.rel (0) target = $region33
  $region32: #{tpu_custom_call.1} parent=0 // pred_region
    _
  $region33: #{tpu_custom_call.1} parent=0 // pred_fallthru
    _
  // Predicated region
  $region34: #{tpu_custom_call.1} parent=0 // pred_check
    _
  $region35: #{tpu_custom_call.1} parent=0 // pred_check_branch
    %35 = sbr.rel (0) target = $region37
  $region36: #{tpu_custom_call.1} parent=0 // pred_region
    _
  $region37: #{tpu_custom_call.1} parent=0 // pred_fallthru
    _
  // Predicated region
  $region38: #{tpu_custom_call.1} parent=0 // pred_check
    _
  $region39: #{tpu_custom_call.1} parent=0 // pred_check_branch
    %37 = sbr.rel (0) target = $region41
  $region40: #{tpu_custom_call.1} parent=0 // pred_region
    _
  $region41: #{tpu_custom_call.1} parent=0 // pred_fallthru
    _
  // Predicated region
  $region42: #{tpu_custom_call.1} parent=0 // pred_check
    _
  $region43: #{tpu_custom_call.1} parent=0 // pred_check_branch
    %39 = sbr.rel (0) target = $region45
  $region44: #{tpu_custom_call.1} parent=0 // pred_region
    _
  $region45: #{tpu_custom_call.1} parent=0 // pred_fallthru
    _
  // Predicated region
  $region46: #{tpu_custom_call.1} parent=0 // pred_check
    _
  $region47: #{tpu_custom_call.1} parent=0 // pred_check_branch
    %41 = sbr.rel (0) target = $region49
  $region48: #{tpu_custom_call.1} parent=0 // pred_region
    _
  $region49: #{tpu_custom_call.1} parent=0 // pred_fallthru
    _
  // Predicated region
  $region50: #{tpu_custom_call.1} parent=0 // pred_check
    _
  $region51: #{tpu_custom_call.1} parent=0 // pred_check_branch
    %43 = sbr.rel (0) target = $region53
  $region52: #{tpu_custom_call.1} parent=0 // pred_region
    _
  $region53: #{tpu_custom_call.1} parent=0 // pred_fallthru
    _
  %v45 = vld [vmem:[%s0] sm:$0xf]
  %v46 = vld [vmem:[%s0 + $0x4] sm:$0xf]
  %v47 = vld [vmem:[%s0 + $0x8] sm:$0xf]
  %v48 = vld [vmem:[%s0 + $0xc] sm:$0xf]
  %v49 = vld [vmem:[%s0 + $0x10] sm:$0xf]
  %v50 = vld [vmem:[%s0 + $0x14] sm:$0xf]
  %v51 = vld [vmem:[%s0 + $0x18] sm:$0xf]
  %v52 = vld [vmem:[%s0 + $0x1c] sm:$0xf]
  %v53 = vld [vmem:[%s0 + $0x20] sm:$0xf]
  %v54 = vld [vmem:[%s0 + $0x24] sm:$0xf]
  %v55 = vld [vmem:[%s0 + $0x28] sm:$0xf]
  %v56 = vld [vmem:[%s0 + $0x2c] sm:$0xf]
  %v57 = vld [vmem:[%s0 + $0x30] sm:$0xf]
  %v58 = vld [vmem:[%s0 + $0x34] sm:$0xf]
  %v59 = vld [vmem:[%s0 + $0x38] sm:$0xf]
  %v60 = vld [vmem:[%s0 + $0x3c] sm:$0xf]
  %v61 = vld [vmem:[%s0 + $0x40] sm:$0xf]
  %v62 = vld [vmem:[%s0 + $0x44] sm:$0xf]
  %v63 = vld [vmem:[%s0 + $0x48] sm:$0xf]
  %v64 = vld [vmem:[%s0 + $0x4c] sm:$0xf]
  %v65 = vld [vmem:[%s0 + $0x50] sm:$0xf]
  %v66 = vld [vmem:[%s0 + $0x54] sm:$0xf]
  %v67 = vld [vmem:[%s0 + $0x58] sm:$0xf]
  %v68 = vld [vmem:[%s0 + $0x5c] sm:$0xf]
  %v69 = vld [vmem:[%s1] sm:$0xf]
  %v70 = vld [vmem:[%s2] sm:$0x1]
  %v72 = vlaneseq
  %v73 = vshrl.u32 %v72, 7
  %v74 = vsub.s32 0, %v73
  %v75 = vrot.slane %v70, %v74
  %v101 = vunpack.c.l.b16 %v45
  %v102 = vunpack.c.l.b16 %v46
  %v103 = vunpack.c.l.b16 %v47
  %v104 = vunpack.c.l.b16 %v48
  %v105 = vunpack.c.l.b16 %v49
  %v106 = vunpack.c.l.b16 %v50
  %v107 = vunpack.c.l.b16 %v51
  %v108 = vunpack.c.l.b16 %v52
  %v109 = vunpack.c.l.b16 %v53
  %v110 = vunpack.c.l.b16 %v54
  %v111 = vunpack.c.l.b16 %v55
  %v112 = vunpack.c.l.b16 %v56
  %v113 = vunpack.c.l.b16 %v57
  %v114 = vunpack.c.l.b16 %v58
  %v115 = vunpack.c.l.b16 %v59
  %v116 = vunpack.c.l.b16 %v60
  %v117 = vunpack.c.l.b16 %v61
  %v118 = vunpack.c.l.b16 %v62
  %v119 = vunpack.c.l.b16 %v63
  %v120 = vunpack.c.l.b16 %v64
  %v121 = vunpack.c.l.b16 %v65
  %v122 = vunpack.c.l.b16 %v66
  %v123 = vunpack.c.l.b16 %v67
  %v124 = vunpack.c.l.b16 %v68
  %v125 = vpack.c.b16 %v102, %v101
  %v126 = vpack.c.b16 %v104, %v103
  %v127 = vpack.c.b16 %v106, %v105
  %v128 = vpack.c.b16 %v108, %v107
  %v129 = vpack.c.b16 %v110, %v109
  %v130 = vpack.c.b16 %v112, %v111
  %v131 = vpack.c.b16 %v114, %v113
  %v132 = vpack.c.b16 %v116, %v115
  %v133 = vpack.c.b16 %v118, %v117
  %v134 = vpack.c.b16 %v120, %v119
  %v135 = vpack.c.b16 %v122, %v121
  %v136 = vpack.c.b16 %v124, %v123
  %vm137 = vcmask 64512
  %v139 = vsel %vm137, %v125, 0
  %v142 = vsel %vm137, %v126, 0
  %v145 = vsel %vm137, %v127, 0
  %v148 = vsel %vm137, %v128, 0
  %v151 = vsel %vm137, %v129, 0
  %v154 = vsel %vm137, %v130, 0
  %v157 = vsel %vm137, %v131, 0
  %v160 = vsel %vm137, %v132, 0
  %v163 = vsel %vm137, %v133, 0
  %v166 = vsel %vm137, %v134, 0
  %v169 = vsel %vm137, %v135, 0
  %v172 = vsel %vm137, %v136, 0
  %vm174 = vcmask 1043456
  %v176 = vsel %vm174, %v69, 0
  %178 = vmatprep.subr.bf16.mxu0 0
  %179 = vmatpush1.bf16.msra.mxu0 %v176
  %180 = vmatprep.subr.bf16.mxu0 0
  %181 = vmatpush1.bf16.msra.mxu0 0
  %182 = vmatprep.subr.bf16.mxu0 0
  %183 = vmatpush1.bf16.msra.mxu0 0
  %184 = vmatprep.subr.bf16.mxu0 0
  %185 = vmatpush1.bf16.msra.mxu0 0
  %186 = vmatprep.subr.bf16.mxu0 0
  %187 = vmatpush1.bf16.msra.mxu0 0
  %188 = vmatprep.subr.bf16.mxu0 0
  %189 = vmatpush1.bf16.msra.mxu0 0
  %190 = vmatprep.subr.bf16.mxu0 0
  %191 = vmatpush1.bf16.msra.mxu0 0
  %192 = vmatprep.subr.bf16.mxu0 0
  %193 = vmatpush1.bf16.msra.mxu0 0
  %194 = vmatprep.subr.bf16.mxu0 0
  %195 = vmatpush1.bf16.msra.mxu0 0
  %196 = vmatprep.subr.bf16.mxu0 0
  %197 = vmatpush1.bf16.msra.mxu0 0
  %198 = vmatprep.subr.bf16.mxu0 0
  %199 = vmatpush1.bf16.msra.mxu0 0
  %200 = vmatprep.subr.bf16.mxu0 0
  %201 = vmatpush1.bf16.msra.mxu0 0
  %202 = vmatprep.subr.bf16.mxu0 0
  %203 = vmatpush1.bf16.msra.mxu0 0
  %204 = vmatprep.subr.bf16.mxu0 0
  %205 = vmatpush1.bf16.msra.mxu0 0
  %206 = vmatprep.subr.bf16.mxu0 0
  %207 = vmatpush1.bf16.msra.mxu0 0
  %208 = vmatprep.subr.bf16.mxu0 0
  %209 = vmatpush1.bf16.msra.mxu0 0
  %210 = vmatprep.mubr.bf16.mxu0 0
  %211 = vmatmul.mubr.bf16.gmra.mrb[0].mxu0 %v139
  %v212 = vpop.f32.mrb[0].mxu0
  %v213 = vadd.f32 %v75, %v212
  %v214 = vpop.f32.mrb[0].mxu0
  %v215 = vpop.f32.mrb[0].mxu0
  %v216 = vadd.f32 %v75, %v215
  %v217 = vpop.f32.mrb[0].mxu0
  %218 = vmatprep.mubr.bf16.mxu0 0
  %219 = vmatmul.mubr.bf16.gmra.mrb[0].mxu0 %v142
  %v220 = vpop.f32.mrb[0].mxu0
  %v221 = vadd.f32 %v75, %v220
  %v222 = vpop.f32.mrb[0].mxu0
  %v223 = vpop.f32.mrb[0].mxu0
  %v224 = vadd.f32 %v75, %v223
  %v225 = vpop.f32.mrb[0].mxu0
  %226 = vmatprep.mubr.bf16.mxu0 0
  %227 = vmatmul.mubr.bf16.gmra.mrb[0].mxu0 %v145
  %v228 = vpop.f32.mrb[0].mxu0
  %v229 = vadd.f32 %v75, %v228
  %v230 = vpop.f32.mrb[0].mxu0
  %v231 = vpop.f32.mrb[0].mxu0
  %v232 = vadd.f32 %v75, %v231
  %v233 = vpop.f32.mrb[0].mxu0
  %234 = vmatprep.mubr.bf16.mxu0 0
  %235 = vmatmul.mubr.bf16.gmra.mrb[0].mxu0 %v148
  %v236 = vpop.f32.mrb[0].mxu0
  %v237 = vadd.f32 %v75, %v236
  %v238 = vpop.f32.mrb[0].mxu0
  %v239 = vpop.f32.mrb[0].mxu0
  %v240 = vadd.f32 %v75, %v239
  %v241 = vpop.f32.mrb[0].mxu0
  %242 = vmatprep.mubr.bf16.mxu0 0
  %243 = vmatmul.mubr.bf16.gmra.mrb[0].mxu0 %v151
  %v244 = vpop.f32.mrb[0].mxu0
  %v245 = vadd.f32 %v75, %v244
  %v246 = vpop.f32.mrb[0].mxu0
  %v247 = vpop.f32.mrb[0].mxu0
  %v248 = vadd.f32 %v75, %v247
  %v249 = vpop.f32.mrb[0].mxu0
  %250 = vmatprep.mubr.bf16.mxu0 0
  %251 = vmatmul.mubr.bf16.gmra.mrb[0].mxu0 %v154
  %v252 = vpop.f32.mrb[0].mxu0
  %v253 = vadd.f32 %v75, %v252
  %v254 = vpop.f32.mrb[0].mxu0
  %v255 = vpop.f32.mrb[0].mxu0
  %v256 = vadd.f32 %v75, %v255
  %v257 = vpop.f32.mrb[0].mxu0
  %258 = vmatprep.mubr.bf16.mxu0 0
  %259 = vmatmul.mubr.bf16.gmra.mrb[0].mxu0 %v157
  %v260 = vpop.f32.mrb[0].mxu0
  %v261 = vadd.f32 %v75, %v260
  %v262 = vpop.f32.mrb[0].mxu0
  %v263 = vpop.f32.mrb[0].mxu0
  %v264 = vadd.f32 %v75, %v263
  %v265 = vpop.f32.mrb[0].mxu0
  %266 = vmatprep.mubr.bf16.mxu0 0
  %267 = vmatmul.mubr.bf16.gmra.mrb[0].mxu0 %v160
  %v268 = vpop.f32.mrb[0].mxu0
  %v269 = vadd.f32 %v75, %v268
  %v270 = vpop.f32.mrb[0].mxu0
  %v271 = vpop.f32.mrb[0].mxu0
  %v272 = vadd.f32 %v75, %v271
  %v273 = vpop.f32.mrb[0].mxu0
  %274 = vmatprep.mubr.bf16.mxu0 0
  %275 = vmatmul.mubr.bf16.gmra.mrb[0].mxu0 %v163
  %v276 = vpop.f32.mrb[0].mxu0
  %v277 = vadd.f32 %v75, %v276
  %v278 = vpop.f32.mrb[0].mxu0
  %v279 = vpop.f32.mrb[0].mxu0
  %v280 = vadd.f32 %v75, %v279
  %v281 = vpop.f32.mrb[0].mxu0
  %282 = vmatprep.mubr.bf16.mxu0 0
  %283 = vmatmul.mubr.bf16.gmra.mrb[0].mxu0 %v166
  %v284 = vpop.f32.mrb[0].mxu0
  %v285 = vadd.f32 %v75, %v284
  %v286 = vpop.f32.mrb[0].mxu0
  %v287 = vpop.f32.mrb[0].mxu0
  %v288 = vadd.f32 %v75, %v287
  %v289 = vpop.f32.mrb[0].mxu0
  %290 = vmatprep.mubr.bf16.mxu0 0
  %291 = vmatmul.mubr.bf16.gmra.mrb[0].mxu0 %v169
  %v292 = vpop.f32.mrb[0].mxu0
  %v293 = vadd.f32 %v75, %v292
  %v294 = vpop.f32.mrb[0].mxu0
  %v295 = vpop.f32.mrb[0].mxu0
  %v296 = vadd.f32 %v75, %v295
  %v297 = vpop.f32.mrb[0].mxu0
  %298 = vmatprep.mubr.bf16.mxu0 0
  %299 = vmatmul.mubr.bf16.gmra.mrb[0].mxu0 %v172
  %v300 = vpop.f32.mrb[0].mxu0
  %v301 = vadd.f32 %v75, %v300
  %v302 = vpop.f32.mrb[0].mxu0
  %v303 = vpop.f32.mrb[0].mxu0
  %v304 = vadd.f32 %v75, %v303
  %v305 = vpop.f32.mrb[0].mxu0
  %306 = vdwg.mxu0
  %v307 = vld [vmem:[%s3] sm:$0x1]
  %vm308 = vcmp.gt.f32.partialorder %v307, 0.5
  %v309 = vmax.f32 %v213, 0.0
  %v310 = vmax.f32 %v216, 0.0
  %v311 = vmax.f32 %v221, 0.0
  %v312 = vmax.f32 %v224, 0.0
  %v313 = vmax.f32 %v229, 0.0
  %v314 = vmax.f32 %v232, 0.0
  %v315 = vmax.f32 %v237, 0.0
  %v316 = vmax.f32 %v240, 0.0
  %v317 = vmax.f32 %v245, 0.0
  %v318 = vmax.f32 %v248, 0.0
  %v319 = vmax.f32 %v253, 0.0
  %v320 = vmax.f32 %v256, 0.0
  %v321 = vmax.f32 %v261, 0.0
  %v322 = vmax.f32 %v264, 0.0
  %v323 = vmax.f32 %v269, 0.0
  %v324 = vmax.f32 %v272, 0.0
  %v325 = vmax.f32 %v277, 0.0
  %v326 = vmax.f32 %v280, 0.0
  %v327 = vmax.f32 %v285, 0.0
  %v328 = vmax.f32 %v288, 0.0
  %v329 = vmax.f32 %v293, 0.0
  %v330 = vmax.f32 %v296, 0.0
  %v331 = vmax.f32 %v301, 0.0
  %v332 = vmax.f32 %v304, 0.0
  %v333 = vsel %vm308, 1, 0
  %v334 = vlaneseq
  %v335 = vshrl.u32 %v334, 7
  %v336 = vsub.s32 0, %v335
  %v337 = vrot.slane %v333, %v336
  %vm338 = vcmp.eq.s32.totalorder %v337, 1
  %v339 = vsel %vm338, %v309, %v213
  %v340 = vsel %vm338, %v310, %v216
  %v341 = vsel %vm338, %v311, %v221
  %v342 = vsel %vm338, %v312, %v224
  %v343 = vsel %vm338, %v313, %v229
  %v344 = vsel %vm338, %v314, %v232
  %v345 = vsel %vm338, %v315, %v237
  %v346 = vsel %vm338, %v316, %v240
  %v347 = vsel %vm338, %v317, %v245
  %v348 = vsel %vm338, %v318, %v248
  %v349 = vsel %vm338, %v319, %v253
  %v350 = vsel %vm338, %v320, %v256
  %v351 = vsel %vm338, %v321, %v261
  %v352 = vsel %vm338, %v322, %v264
  %v353 = vsel %vm338, %v323, %v269
  %v354 = vsel %vm338, %v324, %v272
  %v355 = vsel %vm338, %v325, %v277
  %v356 = vsel %vm338, %v326, %v280
  %v357 = vsel %vm338, %v327, %v285
  %v358 = vsel %vm338, %v328, %v288
  %v359 = vsel %vm338, %v329, %v293
  %v360 = vsel %vm338, %v330, %v296
  %v361 = vsel %vm338, %v331, %v301
  %v362 = vsel %vm338, %v332, %v304
  %v363 = vld [vmem:[%s4] sm:$0xff]
  %v364 = vld [vmem:[%s4 + $0x8] sm:$0xff]
  %v365 = vld [vmem:[%s4 + $0x10] sm:$0xff]
  %367 = vset.pattern.permute.xlu0 0
  %368 = vperm.xlu0 %367, %v363
  %v369 = vpop.permute.xlu0 %368
  %372 = vset.pattern.permute.xlu0 0
  %373 = vperm.xlu0 %372, %v364
  %v374 = vpop.permute.xlu0 %373
  %377 = vset.pattern.permute.xlu0 0
  %378 = vperm.xlu0 %377, %v365
  %v379 = vpop.permute.xlu0 %378
  %v381 = vmul.f32 %v339, %v369
  %v382 = vmul.f32 %v340, %v374
  %v383 = vmul.f32 %v341, %v379
  %v384 = vmul.f32 %v342, %v369
  %v385 = vmul.f32 %v343, %v374
  %v386 = vmul.f32 %v344, %v379
  %v387 = vmul.f32 %v345, %v369
  %v388 = vmul.f32 %v346, %v374
  %v389 = vmul.f32 %v347, %v379
  %v390 = vmul.f32 %v348, %v369
  %v391 = vmul.f32 %v349, %v374
  %v392 = vmul.f32 %v350, %v379
  %v393 = vmul.f32 %v351, %v369
  %v394 = vmul.f32 %v352, %v374
  %v395 = vmul.f32 %v353, %v379
  %v396 = vmul.f32 %v354, %v369
  %v397 = vmul.f32 %v355, %v374
  %v398 = vmul.f32 %v356, %v379
  %v399 = vmul.f32 %v357, %v369
  %v400 = vmul.f32 %v358, %v374
  %v401 = vmul.f32 %v359, %v379
  %v402 = vmul.f32 %v360, %v369
  %v403 = vmul.f32 %v361, %v374
  %v404 = vmul.f32 %v362, %v379
  %v405 = vpack.c.bf16 %v382, %v381
  %v406 = vpack.c.bf16 %v383, %v383
  %v407 = vpack.c.bf16 %v385, %v384
  %v408 = vpack.c.bf16 %v386, %v386
  %v409 = vpack.c.bf16 %v388, %v387
  %v410 = vpack.c.bf16 %v389, %v389
  %v411 = vpack.c.bf16 %v391, %v390
  %v412 = vpack.c.bf16 %v392, %v392
  %v413 = vpack.c.bf16 %v394, %v393
  %v414 = vpack.c.bf16 %v395, %v395
  %v415 = vpack.c.bf16 %v397, %v396
  %v416 = vpack.c.bf16 %v398, %v398
  %v417 = vpack.c.bf16 %v400, %v399
  %v418 = vpack.c.bf16 %v401, %v401
  %v419 = vpack.c.bf16 %v403, %v402
  %v420 = vpack.c.bf16 %v404, %v404
  %vm421 = vsmask.f32 6400
  %v423 = vshrl.u32 %v405, 16
  %v425 = vrot.slane %v423, 1
  %v426 = vshll.u32 %v405, 16
  %v428 = vrot.slane %v426, 2
  %v429 = vor.u32 %v425, %v428
  %v431 = vshrl.u32 %v406, 16
  %v433 = vrot.slane %v431, 1
  %v434 = vshll.u32 %v406, 16
  %v436 = vrot.slane %v434, 2
  %v437 = vor.u32 %v433, %v436
  %v438 = vsel %vm421, %v429, %v437
  %v440 = vshrl.u32 %v407, 16
  %v442 = vrot.slane %v440, 1
  %v443 = vshll.u32 %v407, 16
  %v445 = vrot.slane %v443, 2
  %v446 = vor.u32 %v442, %v445
  %v448 = vshrl.u32 %v408, 16
  %v450 = vrot.slane %v448, 1
  %v451 = vshll.u32 %v408, 16
  %v453 = vrot.slane %v451, 2
  %v454 = vor.u32 %v450, %v453
  %v455 = vsel %vm421, %v446, %v454
  %v457 = vshrl.u32 %v409, 16
  %v459 = vrot.slane %v457, 1
  %v460 = vshll.u32 %v409, 16
  %v462 = vrot.slane %v460, 2
  %v463 = vor.u32 %v459, %v462
  %v465 = vshrl.u32 %v410, 16
  %v467 = vrot.slane %v465, 1
  %v468 = vshll.u32 %v410, 16
  %v470 = vrot.slane %v468, 2
  %v471 = vor.u32 %v467, %v470
  %v472 = vsel %vm421, %v463, %v471
  %v474 = vshrl.u32 %v411, 16
  %v476 = vrot.slane %v474, 1
  %v477 = vshll.u32 %v411, 16
  %v479 = vrot.slane %v477, 2
  %v480 = vor.u32 %v476, %v479
  %v482 = vshrl.u32 %v412, 16
  %v484 = vrot.slane %v482, 1
  %v485 = vshll.u32 %v412, 16
  %v487 = vrot.slane %v485, 2
  %v488 = vor.u32 %v484, %v487
  %v489 = vsel %vm421, %v480, %v488
  %v491 = vshrl.u32 %v413, 16
  %v493 = vrot.slane %v491, 1
  %v494 = vshll.u32 %v413, 16
  %v496 = vrot.slane %v494, 2
  %v497 = vor.u32 %v493, %v496
  %v499 = vshrl.u32 %v414, 16
  %v501 = vrot.slane %v499, 1
  %v502 = vshll.u32 %v414, 16
  %v504 = vrot.slane %v502, 2
  %v505 = vor.u32 %v501, %v504
  %v506 = vsel %vm421, %v497, %v505
  %v508 = vshrl.u32 %v415, 16
  %v510 = vrot.slane %v508, 1
  %v511 = vshll.u32 %v415, 16
  %v513 = vrot.slane %v511, 2
  %v514 = vor.u32 %v510, %v513
  %v516 = vshrl.u32 %v416, 16
  %v518 = vrot.slane %v516, 1
  %v519 = vshll.u32 %v416, 16
  %v521 = vrot.slane %v519, 2
  %v522 = vor.u32 %v518, %v521
  %v523 = vsel %vm421, %v514, %v522
  %v525 = vshrl.u32 %v417, 16
  %v527 = vrot.slane %v525, 1
  %v528 = vshll.u32 %v417, 16
  %v530 = vrot.slane %v528, 2
  %v531 = vor.u32 %v527, %v530
  %v533 = vshrl.u32 %v418, 16
  %v535 = vrot.slane %v533, 1
  %v536 = vshll.u32 %v418, 16
  %v538 = vrot.slane %v536, 2
  %v539 = vor.u32 %v535, %v538
  %v540 = vsel %vm421, %v531, %v539
  %v542 = vshrl.u32 %v419, 16
  %v544 = vrot.slane %v542, 1
  %v545 = vshll.u32 %v419, 16
  %v547 = vrot.slane %v545, 2
  %v548 = vor.u32 %v544, %v547
  %v550 = vshrl.u32 %v420, 16
  %v552 = vrot.slane %v550, 1
  %v553 = vshll.u32 %v420, 16
  %v555 = vrot.slane %v553, 2
  %v556 = vor.u32 %v552, %v555
  %v557 = vsel %vm421, %v548, %v556
  %v558 = vld [vmem:[%s5] sm:$0x1]
  %vm575 = vcmask 1045504
  %v576 = vrot.slane %v405, 2
  %v577 = vrot.slane %v406, 2
  %v578 = vsel %vm575, %v576, %v577
  %v579 = vrot.slane %v407, 2
  %v580 = vrot.slane %v408, 2
  %v581 = vsel %vm575, %v579, %v580
  %v582 = vrot.slane %v409, 2
  %v583 = vrot.slane %v410, 2
  %v584 = vsel %vm575, %v582, %v583
  %v585 = vrot.slane %v411, 2
  %v586 = vrot.slane %v412, 2
  %v587 = vsel %vm575, %v585, %v586
  %v588 = vrot.slane %v413, 2
  %v589 = vrot.slane %v414, 2
  %v590 = vsel %vm575, %v588, %v589
  %v591 = vrot.slane %v415, 2
  %v592 = vrot.slane %v416, 2
  %v593 = vsel %vm575, %v591, %v592
  %v594 = vrot.slane %v417, 2
  %v595 = vrot.slane %v418, 2
  %v596 = vsel %vm575, %v594, %v595
  %v597 = vrot.slane %v419, 2
  %v598 = vrot.slane %v420, 2
  %v599 = vsel %vm575, %v597, %v598
  %s600 = scalar_lea.vmem %s5, 1
  %v601 = vld [vmem:[%s600] sm:$0x1]
  %vm602 = vcmask 15360
  %v604 = vsel %vm602, %v578, 0
  %v607 = vsel %vm602, %v581, 0
  %v610 = vsel %vm602, %v584, 0
  %v613 = vsel %vm602, %v587, 0
  %v616 = vsel %vm602, %v590, 0
  %v619 = vsel %vm602, %v593, 0
  %v622 = vsel %vm602, %v596, 0
  %v625 = vsel %vm602, %v599, 0
  %vm627 = vcmask 1040384
  %v629 = vsel %vm627, %v601, 0
  %631 = vmatprep.subr.bf16.mxu0 0
  %632 = vmatpush1.bf16.msra.mxu0 %v629
  %633 = vmatprep.subr.bf16.mxu0 0
  %634 = vmatpush1.bf16.msra.mxu0 0
  %635 = vmatprep.subr.bf16.mxu0 0
  %636 = vmatpush1.bf16.msra.mxu0 0
  %637 = vmatprep.subr.bf16.mxu0 0
  %638 = vmatpush1.bf16.msra.mxu0 0
  %639 = vmatprep.subr.bf16.mxu0 0
  %640 = vmatpush1.bf16.msra.mxu0 0
  %641 = vmatprep.subr.bf16.mxu0 0
  %642 = vmatpush1.bf16.msra.mxu0 0
  %643 = vmatprep.subr.bf16.mxu0 0
  %644 = vmatpush1.bf16.msra.mxu0 0
  %645 = vmatprep.subr.bf16.mxu0 0
  %646 = vmatpush1.bf16.msra.mxu0 0
  %647 = vmatprep.subr.bf16.mxu0 0
  %648 = vmatpush1.bf16.msra.mxu0 0
  %649 = vmatprep.subr.bf16.mxu0 0
  %650 = vmatpush1.bf16.msra.mxu0 0
  %651 = vmatprep.subr.bf16.mxu0 0
  %652 = vmatpush1.bf16.msra.mxu0 0
  %653 = vmatprep.subr.bf16.mxu0 0
  %654 = vmatpush1.bf16.msra.mxu0 0
  %655 = vmatprep.subr.bf16.mxu0 0
  %656 = vmatpush1.bf16.msra.mxu0 0
  %657 = vmatprep.subr.bf16.mxu0 0
  %658 = vmatpush1.bf16.msra.mxu0 0
  %659 = vmatprep.subr.bf16.mxu0 0
  %660 = vmatpush1.bf16.msra.mxu0 0
  %661 = vmatprep.subr.bf16.mxu0 0
  %662 = vmatpush1.bf16.msra.mxu0 0
  %663 = vmatprep.mubr.bf16.mxu0 0
  %664 = vmatmul.mubr.bf16.gmra.mrb[0].mxu0 %v604
  %v665 = vpop.f32.mrb[0].mxu0
  %v666 = vadd.f32 0.0, %v665
  %v667 = vpop.f32.mrb[0].mxu0
  %v668 = vpop.f32.mrb[0].mxu0
  %v669 = vadd.f32 0.0, %v668
  %v670 = vpop.f32.mrb[0].mxu0
  %671 = vmatprep.mubr.bf16.mxu0 0
  %672 = vmatmul.mubr.bf16.gmra.mrb[0].mxu0 %v607
  %v673 = vpop.f32.mrb[0].mxu0
  %v674 = vadd.f32 0.0, %v673
  %v675 = vpop.f32.mrb[0].mxu0
  %v676 = vpop.f32.mrb[0].mxu0
  %v677 = vadd.f32 0.0, %v676
  %v678 = vpop.f32.mrb[0].mxu0
  %679 = vmatprep.mubr.bf16.mxu0 0
  %680 = vmatmul.mubr.bf16.gmra.mrb[0].mxu0 %v610
  %v681 = vpop.f32.mrb[0].mxu0
  %v682 = vadd.f32 0.0, %v681
  %v683 = vpop.f32.mrb[0].mxu0
  %v684 = vpop.f32.mrb[0].mxu0
  %v685 = vadd.f32 0.0, %v684
  %v686 = vpop.f32.mrb[0].mxu0
  %687 = vmatprep.mubr.bf16.mxu0 0
  %688 = vmatmul.mubr.bf16.gmra.mrb[0].mxu0 %v613
  %v689 = vpop.f32.mrb[0].mxu0
  %v690 = vadd.f32 0.0, %v689
  %v691 = vpop.f32.mrb[0].mxu0
  %v692 = vpop.f32.mrb[0].mxu0
  %v693 = vadd.f32 0.0, %v692
  %v694 = vpop.f32.mrb[0].mxu0
  %695 = vmatprep.mubr.bf16.mxu0 0
  %696 = vmatmul.mubr.bf16.gmra.mrb[0].mxu0 %v616
  %v697 = vpop.f32.mrb[0].mxu0
  %v698 = vadd.f32 0.0, %v697
  %v699 = vpop.f32.mrb[0].mxu0
  %v700 = vpop.f32.mrb[0].mxu0
  %v701 = vadd.f32 0.0, %v700
  %v702 = vpop.f32.mrb[0].mxu0
  %703 = vmatprep.mubr.bf16.mxu0 0
  %704 = vmatmul.mubr.bf16.gmra.mrb[0].mxu0 %v619
  %v705 = vpop.f32.mrb[0].mxu0
  %v706 = vadd.f32 0.0, %v705
  %v707 = vpop.f32.mrb[0].mxu0
  %v708 = vpop.f32.mrb[0].mxu0
  %v709 = vadd.f32 0.0, %v708
  %v710 = vpop.f32.mrb[0].mxu0
  %711 = vmatprep.mubr.bf16.mxu0 0
  %712 = vmatmul.mubr.bf16.gmra.mrb[0].mxu0 %v622
  %v713 = vpop.f32.mrb[0].mxu0
  %v714 = vadd.f32 0.0, %v713
  %v715 = vpop.f32.mrb[0].mxu0
  %v716 = vpop.f32.mrb[0].mxu0
  %v717 = vadd.f32 0.0, %v716
  %v718 = vpop.f32.mrb[0].mxu0
  %719 = vmatprep.mubr.bf16.mxu0 0
  %720 = vmatmul.mubr.bf16.gmra.mrb[0].mxu0 %v625
  %v721 = vpop.f32.mrb[0].mxu0
  %v722 = vadd.f32 0.0, %v721
  %v723 = vpop.f32.mrb[0].mxu0
  %v724 = vpop.f32.mrb[0].mxu0
  %v725 = vadd.f32 0.0, %v724
  %v726 = vpop.f32.mrb[0].mxu0
  %727 = vdwg.mxu0
  %v729 = vsel %vm602, %v438, 0
  %v732 = vsel %vm602, %v455, 0
  %v735 = vsel %vm602, %v472, 0
  %v738 = vsel %vm602, %v489, 0
  %v741 = vsel %vm602, %v506, 0
  %v744 = vsel %vm602, %v523, 0
  %v747 = vsel %vm602, %v540, 0
  %v750 = vsel %vm602, %v557, 0
  %v753 = vsel %vm627, %v558, 0
  %755 = vmatprep.subr.bf16.mxu0 0
  %756 = vmatpush1.bf16.msra.mxu0 %v753
  %757 = vmatprep.subr.bf16.mxu0 0
  %758 = vmatpush1.bf16.msra.mxu0 0
  %759 = vmatprep.subr.bf16.mxu0 0
  %760 = vmatpush1.bf16.msra.mxu0 0
  %761 = vmatprep.subr.bf16.mxu0 0
  %762 = vmatpush1.bf16.msra.mxu0 0
  %763 = vmatprep.subr.bf16.mxu0 0
  %764 = vmatpush1.bf16.msra.mxu0 0
  %765 = vmatprep.subr.bf16.mxu0 0
  %766 = vmatpush1.bf16.msra.mxu0 0
  %767 = vmatprep.subr.bf16.mxu0 0
  %768 = vmatpush1.bf16.msra.mxu0 0
  %769 = vmatprep.subr.bf16.mxu0 0
  %770 = vmatpush1.bf16.msra.mxu0 0
  %771 = vmatprep.subr.bf16.mxu0 0
  %772 = vmatpush1.bf16.msra.mxu0 0
  %773 = vmatprep.subr.bf16.mxu0 0
  %774 = vmatpush1.bf16.msra.mxu0 0
  %775 = vmatprep.subr.bf16.mxu0 0
  %776 = vmatpush1.bf16.msra.mxu0 0
  %777 = vmatprep.subr.bf16.mxu0 0
  %778 = vmatpush1.bf16.msra.mxu0 0
  %779 = vmatprep.subr.bf16.mxu0 0
  %780 = vmatpush1.bf16.msra.mxu0 0
  %781 = vmatprep.subr.bf16.mxu0 0
  %782 = vmatpush1.bf16.msra.mxu0 0
  %783 = vmatprep.subr.bf16.mxu0 0
  %784 = vmatpush1.bf16.msra.mxu0 0
  %785 = vmatprep.subr.bf16.mxu0 0
  %786 = vmatpush1.bf16.msra.mxu0 0
  %787 = vmatprep.mubr.bf16.mxu0 0
  %788 = vmatmul.mubr.bf16.gmra.mrb[0].mxu0 %v729
  %v789 = vpop.f32.mrb[0].mxu0
  %v790 = vadd.f32 %v666, %v789
  %v791 = vpop.f32.mrb[0].mxu0
  %v792 = vpop.f32.mrb[0].mxu0
  %v793 = vadd.f32 %v669, %v792
  %v794 = vpop.f32.mrb[0].mxu0
  %795 = vmatprep.mubr.bf16.mxu0 0
  %796 = vmatmul.mubr.bf16.gmra.mrb[0].mxu0 %v732
  %v797 = vpop.f32.mrb[0].mxu0
  %v798 = vadd.f32 %v674, %v797
  %v799 = vpop.f32.mrb[0].mxu0
  %v800 = vpop.f32.mrb[0].mxu0
  %v801 = vadd.f32 %v677, %v800
  %v802 = vpop.f32.mrb[0].mxu0
  %803 = vmatprep.mubr.bf16.mxu0 0
  %804 = vmatmul.mubr.bf16.gmra.mrb[0].mxu0 %v735
  %v805 = vpop.f32.mrb[0].mxu0
  %v806 = vadd.f32 %v682, %v805
  %v807 = vpop.f32.mrb[0].mxu0
  %v808 = vpop.f32.mrb[0].mxu0
  %v809 = vadd.f32 %v685, %v808
  %v810 = vpop.f32.mrb[0].mxu0
  %811 = vmatprep.mubr.bf16.mxu0 0
  %812 = vmatmul.mubr.bf16.gmra.mrb[0].mxu0 %v738
  %v813 = vpop.f32.mrb[0].mxu0
  %v814 = vadd.f32 %v690, %v813
  %v815 = vpop.f32.mrb[0].mxu0
  %v816 = vpop.f32.mrb[0].mxu0
  %v817 = vadd.f32 %v693, %v816
  %v818 = vpop.f32.mrb[0].mxu0
  %819 = vmatprep.mubr.bf16.mxu0 0
  %820 = vmatmul.mubr.bf16.gmra.mrb[0].mxu0 %v741
  %v821 = vpop.f32.mrb[0].mxu0
  %v822 = vadd.f32 %v698, %v821
  %v823 = vpop.f32.mrb[0].mxu0
  %v824 = vpop.f32.mrb[0].mxu0
  %v825 = vadd.f32 %v701, %v824
  %v826 = vpop.f32.mrb[0].mxu0
  %827 = vmatprep.mubr.bf16.mxu0 0
  %828 = vmatmul.mubr.bf16.gmra.mrb[0].mxu0 %v744
  %v829 = vpop.f32.mrb[0].mxu0
  %v830 = vadd.f32 %v706, %v829
  %v831 = vpop.f32.mrb[0].mxu0
  %v832 = vpop.f32.mrb[0].mxu0
  %v833 = vadd.f32 %v709, %v832
  %v834 = vpop.f32.mrb[0].mxu0
  %835 = vmatprep.mubr.bf16.mxu0 0
  %836 = vmatmul.mubr.bf16.gmra.mrb[0].mxu0 %v747
  %v837 = vpop.f32.mrb[0].mxu0
  %v838 = vadd.f32 %v714, %v837
  %v839 = vpop.f32.mrb[0].mxu0
  %v840 = vpop.f32.mrb[0].mxu0
  %v841 = vadd.f32 %v717, %v840
  %v842 = vpop.f32.mrb[0].mxu0
  %843 = vmatprep.mubr.bf16.mxu0 0
  %844 = vmatmul.mubr.bf16.gmra.mrb[0].mxu0 %v750
  %v845 = vpop.f32.mrb[0].mxu0
  %v846 = vadd.f32 %v722, %v845
  %v847 = vpop.f32.mrb[0].mxu0
  %v848 = vpop.f32.mrb[0].mxu0
  %v849 = vadd.f32 %v725, %v848
  %v850 = vpop.f32.mrb[0].mxu0
  %851 = vdwg.mxu0
  %vm852 = vsmask.f32 5376
  %v853 = vrot.slane %v423, 2
  %v854 = vrot.slane %v426, 3
  %v855 = vor.u32 %v853, %v854
  %v856 = vrot.slane %v431, 2
  %v857 = vrot.slane %v434, 3
  %v858 = vor.u32 %v856, %v857
  %v859 = vsel %vm852, %v855, %v858
  %v860 = vrot.slane %v440, 2
  %v861 = vrot.slane %v443, 3
  %v862 = vor.u32 %v860, %v861
  %v863 = vrot.slane %v448, 2
  %v864 = vrot.slane %v451, 3
  %v865 = vor.u32 %v863, %v864
  %v866 = vsel %vm852, %v862, %v865
  %v867 = vrot.slane %v457, 2
  %v868 = vrot.slane %v460, 3
  %v869 = vor.u32 %v867, %v868
  %v870 = vrot.slane %v465, 2
  %v871 = vrot.slane %v468, 3
  %v872 = vor.u32 %v870, %v871
  %v873 = vsel %vm852, %v869, %v872
  %v874 = vrot.slane %v474, 2
  %v875 = vrot.slane %v477, 3
  %v876 = vor.u32 %v874, %v875
  %v877 = vrot.slane %v482, 2
  %v878 = vrot.slane %v485, 3
  %v879 = vor.u32 %v877, %v878
  %v880 = vsel %vm852, %v876, %v879
  %v881 = vrot.slane %v491, 2
  %v882 = vrot.slane %v494, 3
  %v883 = vor.u32 %v881, %v882
  %v884 = vrot.slane %v499, 2
  %v885 = vrot.slane %v502, 3
  %v886 = vor.u32 %v884, %v885
  %v887 = vsel %vm852, %v883, %v886
  %v888 = vrot.slane %v508, 2
  %v889 = vrot.slane %v511, 3
  %v890 = vor.u32 %v888, %v889
  %v891 = vrot.slane %v516, 2
  %v892 = vrot.slane %v519, 3
  %v893 = vor.u32 %v891, %v892
  %v894 = vsel %vm852, %v890, %v893
  %v895 = vrot.slane %v525, 2
  %v896 = vrot.slane %v528, 3
  %v897 = vor.u32 %v895, %v896
  %v898 = vrot.slane %v533, 2
  %v899 = vrot.slane %v536, 3
  %v900 = vor.u32 %v898, %v899
  %v901 = vsel %vm852, %v897, %v900
  %v902 = vrot.slane %v542, 2
  %v903 = vrot.slane %v545, 3
  %v904 = vor.u32 %v902, %v903
  %v905 = vrot.slane %v550, 2
  %v906 = vrot.slane %v553, 3
  %v907 = vor.u32 %v905, %v906
  %v908 = vsel %vm852, %v904, %v907
  %s909 = scalar_lea.vmem %s5, 2
  %v910 = vld [vmem:[%s909] sm:$0x1]
  %v912 = vsel %vm602, %v859, 0
  %v915 = vsel %vm602, %v866, 0
  %v918 = vsel %vm602, %v873, 0
  %v921 = vsel %vm602, %v880, 0
  %v924 = vsel %vm602, %v887, 0
  %v927 = vsel %vm602, %v894, 0
  %v930 = vsel %vm602, %v901, 0
  %v933 = vsel %vm602, %v908, 0
  %v936 = vsel %vm627, %v910, 0
  %938 = vmatprep.subr.bf16.mxu0 0
  %939 = vmatpush1.bf16.msra.mxu0 %v936
  %940 = vmatprep.subr.bf16.mxu0 0
  %941 = vmatpush1.bf16.msra.mxu0 0
  %942 = vmatprep.subr.bf16.mxu0 0
  %943 = vmatpush1.bf16.msra.mxu0 0
  %944 = vmatprep.subr.bf16.mxu0 0
  %945 = vmatpush1.bf16.msra.mxu0 0
  %946 = vmatprep.subr.bf16.mxu0 0
  %947 = vmatpush1.bf16.msra.mxu0 0
  %948 = vmatprep.subr.bf16.mxu0 0
  %949 = vmatpush1.bf16.msra.mxu0 0
  %950 = vmatprep.subr.bf16.mxu0 0
  %951 = vmatpush1.bf16.msra.mxu0 0
  %952 = vmatprep.subr.bf16.mxu0 0
  %953 = vmatpush1.bf16.msra.mxu0 0
  %954 = vmatprep.subr.bf16.mxu0 0
  %955 = vmatpush1.bf16.msra.mxu0 0
  %956 = vmatprep.subr.bf16.mxu0 0
  %957 = vmatpush1.bf16.msra.mxu0 0
  %958 = vmatprep.subr.bf16.mxu0 0
  %959 = vmatpush1.bf16.msra.mxu0 0
  %960 = vmatprep.subr.bf16.mxu0 0
  %961 = vmatpush1.bf16.msra.mxu0 0
  %962 = vmatprep.subr.bf16.mxu0 0
  %963 = vmatpush1.bf16.msra.mxu0 0
  %964 = vmatprep.subr.bf16.mxu0 0
  %965 = vmatpush1.bf16.msra.mxu0 0
  %966 = vmatprep.subr.bf16.mxu0 0
  %967 = vmatpush1.bf16.msra.mxu0 0
  %968 = vmatprep.subr.bf16.mxu0 0
  %969 = vmatpush1.bf16.msra.mxu0 0
  %970 = vmatprep.mubr.bf16.mxu0 0
  %971 = vmatmul.mubr.bf16.gmra.mrb[0].mxu0 %v912
  %v972 = vpop.f32.mrb[0].mxu0
  %v973 = vadd.f32 0.0, %v972
  %v974 = vpop.f32.mrb[0].mxu0
  %v975 = vpop.f32.mrb[0].mxu0
  %v976 = vadd.f32 0.0, %v975
  %v977 = vpop.f32.mrb[0].mxu0
  %978 = vmatprep.mubr.bf16.mxu0 0
  %979 = vmatmul.mubr.bf16.gmra.mrb[0].mxu0 %v915
  %v980 = vpop.f32.mrb[0].mxu0
  %v981 = vadd.f32 0.0, %v980
  %v982 = vpop.f32.mrb[0].mxu0
  %v983 = vpop.f32.mrb[0].mxu0
  %v984 = vadd.f32 0.0, %v983
  %v985 = vpop.f32.mrb[0].mxu0
  %986 = vmatprep.mubr.bf16.mxu0 0
  %987 = vmatmul.mubr.bf16.gmra.mrb[0].mxu0 %v918
  %v988 = vpop.f32.mrb[0].mxu0
  %v989 = vadd.f32 0.0, %v988
  %v990 = vpop.f32.mrb[0].mxu0
  %v991 = vpop.f32.mrb[0].mxu0
  %v992 = vadd.f32 0.0, %v991
  %v993 = vpop.f32.mrb[0].mxu0
  %994 = vmatprep.mubr.bf16.mxu0 0
  %995 = vmatmul.mubr.bf16.gmra.mrb[0].mxu0 %v921
  %v996 = vpop.f32.mrb[0].mxu0
  %v997 = vadd.f32 0.0, %v996
  %v998 = vpop.f32.mrb[0].mxu0
  %v999 = vpop.f32.mrb[0].mxu0
  %v1000 = vadd.f32 0.0, %v999
  %v1001 = vpop.f32.mrb[0].mxu0
  %1002 = vmatprep.mubr.bf16.mxu0 0
  %1003 = vmatmul.mubr.bf16.gmra.mrb[0].mxu0 %v924
  %v1004 = vpop.f32.mrb[0].mxu0
  %v1005 = vadd.f32 0.0, %v1004
  %v1006 = vpop.f32.mrb[0].mxu0
  %v1007 = vpop.f32.mrb[0].mxu0
  %v1008 = vadd.f32 0.0, %v1007
  %v1009 = vpop.f32.mrb[0].mxu0
  %1010 = vmatprep.mubr.bf16.mxu0 0
  %1011 = vmatmul.mubr.bf16.gmra.mrb[0].mxu0 %v927
  %v1012 = vpop.f32.mrb[0].mxu0
  %v1013 = vadd.f32 0.0, %v1012
  %v1014 = vpop.f32.mrb[0].mxu0
  %v1015 = vpop.f32.mrb[0].mxu0
  %v1016 = vadd.f32 0.0, %v1015
  %v1017 = vpop.f32.mrb[0].mxu0
  %1018 = vmatprep.mubr.bf16.mxu0 0
  %1019 = vmatmul.mubr.bf16.gmra.mrb[0].mxu0 %v930
  %v1020 = vpop.f32.mrb[0].mxu0
  %v1021 = vadd.f32 0.0, %v1020
  %v1022 = vpop.f32.mrb[0].mxu0
  %v1023 = vpop.f32.mrb[0].mxu0
  %v1024 = vadd.f32 0.0, %v1023
  %v1025 = vpop.f32.mrb[0].mxu0
  %1026 = vmatprep.mubr.bf16.mxu0 0
  %1027 = vmatmul.mubr.bf16.gmra.mrb[0].mxu0 %v933
  %v1028 = vpop.f32.mrb[0].mxu0
  %v1029 = vadd.f32 0.0, %v1028
  %v1030 = vpop.f32.mrb[0].mxu0
  %v1031 = vpop.f32.mrb[0].mxu0
  %v1032 = vadd.f32 0.0, %v1031
  %v1033 = vpop.f32.mrb[0].mxu0
  %1034 = vdwg.mxu0
  %v1035 = vadd.f32 %v790, %v973
  %v1036 = vadd.f32 %v793, %v976
  %v1037 = vadd.f32 %v798, %v981
  %v1038 = vadd.f32 %v801, %v984
  %v1039 = vadd.f32 %v806, %v989
  %v1040 = vadd.f32 %v809, %v992
  %v1041 = vadd.f32 %v814, %v997
  %v1042 = vadd.f32 %v817, %v1000
  %v1043 = vadd.f32 %v822, %v1005
  %v1044 = vadd.f32 %v825, %v1008
  %v1045 = vadd.f32 %v830, %v1013
  %v1046 = vadd.f32 %v833, %v1016
  %v1047 = vadd.f32 %v838, %v1021
  %v1048 = vadd.f32 %v841, %v1024
  %v1049 = vadd.f32 %v846, %v1029
  %v1050 = vadd.f32 %v849, %v1032
  %1051 = vst.msk [vmem:[#allocation2] sm:$0xff] %vm602, %v1035
  %1052 = vst.msk [vmem:[#allocation2 + $0x8] sm:$0xff] %vm602, %v1036
  %1053 = vst.msk [vmem:[#allocation2 + $0x10] sm:$0xff] %vm602, %v1037
  %1054 = vst.msk [vmem:[#allocation2 + $0x18] sm:$0xff] %vm602, %v1038
  %1055 = vst.msk [vmem:[#allocation2 + $0x20] sm:$0xff] %vm602, %v1039
  %1056 = vst.msk [vmem:[#allocation2 + $0x28] sm:$0xff] %vm602, %v1040
  %1057 = vst.msk [vmem:[#allocation2 + $0x30] sm:$0xff] %vm602, %v1041
  %1058 = vst.msk [vmem:[#allocation2 + $0x38] sm:$0xff] %vm602, %v1042
  %1059 = vst.msk [vmem:[#allocation2 + $0x40] sm:$0xff] %vm602, %v1043
  %1060 = vst.msk [vmem:[#allocation2 + $0x48] sm:$0xff] %vm602, %v1044
  %1061 = vst.msk [vmem:[#allocation2 + $0x50] sm:$0xff] %vm602, %v1045
  %1062 = vst.msk [vmem:[#allocation2 + $0x58] sm:$0xff] %vm602, %v1046
  %1063 = vst.msk [vmem:[#allocation2 + $0x60] sm:$0xff] %vm602, %v1047
  %1064 = vst.msk [vmem:[#allocation2 + $0x68] sm:$0xff] %vm602, %v1048
  %1065 = vst.msk [vmem:[#allocation2 + $0x70] sm:$0xff] %vm602, %v1049
  %1066 = vst.msk [vmem:[#allocation2 + $0x78] sm:$0xff] %vm602, %v1050
  %vm1067 = vcmask 1046528
  %v1068 = vrot.slane %v405, 1
  %v1069 = vrot.slane %v406, 1
  %v1070 = vsel %vm1067, %v1068, %v1069
  %v1071 = vrot.slane %v407, 1
  %v1072 = vrot.slane %v408, 1
  %v1073 = vsel %vm1067, %v1071, %v1072
  %v1074 = vrot.slane %v409, 1
  %v1075 = vrot.slane %v410, 1
  %v1076 = vsel %vm1067, %v1074, %v1075
  %v1077 = vrot.slane %v411, 1
  %v1078 = vrot.slane %v412, 1
  %v1079 = vsel %vm1067, %v1077, %v1078
  %v1080 = vrot.slane %v413, 1
  %v1081 = vrot.slane %v414, 1
  %v1082 = vsel %vm1067, %v1080, %v1081
  %v1083 = vrot.slane %v415, 1
  %v1084 = vrot.slane %v416, 1
  %v1085 = vsel %vm1067, %v1083, %v1084
  %v1086 = vrot.slane %v417, 1
  %v1087 = vrot.slane %v418, 1
  %v1088 = vsel %vm1067, %v1086, %v1087
  %v1089 = vrot.slane %v419, 1
  %v1090 = vrot.slane %v420, 1
  %v1091 = vsel %vm1067, %v1089, %v1090
  %v1092 = vld [vmem:[%s6] sm:$0x1]
  %s1093 = scalar_lea.vmem %s6, 1
  %v1094 = vld [vmem:[%s1093] sm:$0x1]
  %1095 = vrot.lane.b32.xlu0 %v578, 126
  %v1096 = vpop.permute.xlu0 %1095
  %1097 = vrot.lane.b32.xlu0 %v581, 126
  %v1098 = vpop.permute.xlu0 %1097
  %1099 = vrot.lane.b32.xlu0 %v584, 126
  %v1100 = vpop.permute.xlu0 %1099
  %1101 = vrot.lane.b32.xlu0 %v587, 126
  %v1102 = vpop.permute.xlu0 %1101
  %1103 = vrot.lane.b32.xlu0 %v590, 126
  %v1104 = vpop.permute.xlu0 %1103
  %1105 = vrot.lane.b32.xlu0 %v593, 126
  %v1106 = vpop.permute.xlu0 %1105
  %1107 = vrot.lane.b32.xlu0 %v596, 126
  %v1108 = vpop.permute.xlu0 %1107
  %1109 = vrot.lane.b32.xlu0 %v599, 126
  %v1110 = vpop.permute.xlu0 %1109
  %v1112 = vsel %vm602, %v1096, 0
  %v1115 = vsel %vm602, %v1098, 0
  %v1118 = vsel %vm602, %v1100, 0
  %v1121 = vsel %vm602, %v1102, 0
  %v1124 = vsel %vm602, %v1104, 0
  %v1127 = vsel %vm602, %v1106, 0
  %v1130 = vsel %vm602, %v1108, 0
  %v1133 = vsel %vm602, %v1110, 0
  %v1136 = vsel %vm627, %v1094, 0
  %1138 = vmatprep.subr.bf16.mxu0 0
  %1139 = vmatpush1.bf16.msra.mxu0 %v1136
  %1140 = vmatprep.subr.bf16.mxu0 0
  %1141 = vmatpush1.bf16.msra.mxu0 0
  %1142 = vmatprep.subr.bf16.mxu0 0
  %1143 = vmatpush1.bf16.msra.mxu0 0
  %1144 = vmatprep.subr.bf16.mxu0 0
  %1145 = vmatpush1.bf16.msra.mxu0 0
  %1146 = vmatprep.subr.bf16.mxu0 0
  %1147 = vmatpush1.bf16.msra.mxu0 0
  %1148 = vmatprep.subr.bf16.mxu0 0
  %1149 = vmatpush1.bf16.msra.mxu0 0
  %1150 = vmatprep.subr.bf16.mxu0 0
  %1151 = vmatpush1.bf16.msra.mxu0 0
  %1152 = vmatprep.subr.bf16.mxu0 0
  %1153 = vmatpush1.bf16.msra.mxu0 0
  %1154 = vmatprep.subr.bf16.mxu0 0
  %1155 = vmatpush1.bf16.msra.mxu0 0
  %1156 = vmatprep.subr.bf16.mxu0 0
  %1157 = vmatpush1.bf16.msra.mxu0 0
  %1158 = vmatprep.subr.bf16.mxu0 0
  %1159 = vmatpush1.bf16.msra.mxu0 0
  %1160 = vmatprep.subr.bf16.mxu0 0
  %1161 = vmatpush1.bf16.msra.mxu0 0
  %1162 = vmatprep.subr.bf16.mxu0 0
  %1163 = vmatpush1.bf16.msra.mxu0 0
  %1164 = vmatprep.subr.bf16.mxu0 0
  %1165 = vmatpush1.bf16.msra.mxu0 0
  %1166 = vmatprep.subr.bf16.mxu0 0
  %1167 = vmatpush1.bf16.msra.mxu0 0
  %1168 = vmatprep.subr.bf16.mxu0 0
  %1169 = vmatpush1.bf16.msra.mxu0 0
  %1170 = vmatprep.mubr.bf16.mxu0 0
  %1171 = vmatmul.mubr.bf16.gmra.mrb[0].mxu0 %v1112
  %v1172 = vpop.f32.mrb[0].mxu0
  %v1173 = vadd.f32 0.0, %v1172
  %v1174 = vpop.f32.mrb[0].mxu0
  %v1175 = vpop.f32.mrb[0].mxu0
  %v1176 = vadd.f32 0.0, %v1175
  %v1177 = vpop.f32.mrb[0].mxu0
  %1178 = vmatprep.mubr.bf16.mxu0 0
  %1179 = vmatmul.mubr.bf16.gmra.mrb[0].mxu0 %v1115
  %v1180 = vpop.f32.mrb[0].mxu0
  %v1181 = vadd.f32 0.0, %v1180
  %v1182 = vpop.f32.mrb[0].mxu0
  %v1183 = vpop.f32.mrb[0].mxu0
  %v1184 = vadd.f32 0.0, %v1183
  %v1185 = vpop.f32.mrb[0].mxu0
  %1186 = vmatprep.mubr.bf16.mxu0 0
  %1187 = vmatmul.mubr.bf16.gmra.mrb[0].mxu0 %v1118
  %v1188 = vpop.f32.mrb[0].mxu0
  %v1189 = vadd.f32 0.0, %v1188
  %v1190 = vpop.f32.mrb[0].mxu0
  %v1191 = vpop.f32.mrb[0].mxu0
  %v1192 = vadd.f32 0.0, %v1191
  %v1193 = vpop.f32.mrb[0].mxu0
  %1194 = vmatprep.mubr.bf16.mxu0 0
  %1195 = vmatmul.mubr.bf16.gmra.mrb[0].mxu0 %v1121
  %v1196 = vpop.f32.mrb[0].mxu0
  %v1197 = vadd.f32 0.0, %v1196
  %v1198 = vpop.f32.mrb[0].mxu0
  %v1199 = vpop.f32.mrb[0].mxu0
  %v1200 = vadd.f32 0.0, %v1199
  %v1201 = vpop.f32.mrb[0].mxu0
  %1202 = vmatprep.mubr.bf16.mxu0 0
  %1203 = vmatmul.mubr.bf16.gmra.mrb[0].mxu0 %v1124
  %v1204 = vpop.f32.mrb[0].mxu0
  %v1205 = vadd.f32 0.0, %v1204
  %v1206 = vpop.f32.mrb[0].mxu0
  %v1207 = vpop.f32.mrb[0].mxu0
  %v1208 = vadd.f32 0.0, %v1207
  %v1209 = vpop.f32.mrb[0].mxu0
  %1210 = vmatprep.mubr.bf16.mxu0 0
  %1211 = vmatmul.mubr.bf16.gmra.mrb[0].mxu0 %v1127
  %v1212 = vpop.f32.mrb[0].mxu0
  %v1213 = vadd.f32 0.0, %v1212
  %v1214 = vpop.f32.mrb[0].mxu0
  %v1215 = vpop.f32.mrb[0].mxu0
  %v1216 = vadd.f32 0.0, %v1215
  %v1217 = vpop.f32.mrb[0].mxu0
  %1218 = vmatprep.mubr.bf16.mxu0 0
  %1219 = vmatmul.mubr.bf16.gmra.mrb[0].mxu0 %v1130
  %v1220 = vpop.f32.mrb[0].mxu0
  %v1221 = vadd.f32 0.0, %v1220
  %v1222 = vpop.f32.mrb[0].mxu0
  %v1223 = vpop.f32.mrb[0].mxu0
  %v1224 = vadd.f32 0.0, %v1223
  %v1225 = vpop.f32.mrb[0].mxu0
  %1226 = vmatprep.mubr.bf16.mxu0 0
  %1227 = vmatmul.mubr.bf16.gmra.mrb[0].mxu0 %v1133
  %v1228 = vpop.f32.mrb[0].mxu0
  %v1229 = vadd.f32 0.0, %v1228
  %v1230 = vpop.f32.mrb[0].mxu0
  %v1231 = vpop.f32.mrb[0].mxu0
  %v1232 = vadd.f32 0.0, %v1231
  %v1233 = vpop.f32.mrb[0].mxu0
  %1234 = vdwg.mxu0
  %1235 = vrot.lane.b32.xlu0 %v1070, 126
  %v1236 = vpop.permute.xlu0 %1235
  %1237 = vrot.lane.b32.xlu0 %v1073, 126
  %v1238 = vpop.permute.xlu0 %1237
  %1239 = vrot.lane.b32.xlu0 %v1076, 126
  %v1240 = vpop.permute.xlu0 %1239
  %1241 = vrot.lane.b32.xlu0 %v1079, 126
  %v1242 = vpop.permute.xlu0 %1241
  %1243 = vrot.lane.b32.xlu0 %v1082, 126
  %v1244 = vpop.permute.xlu0 %1243
  %1245 = vrot.lane.b32.xlu0 %v1085, 126
  %v1246 = vpop.permute.xlu0 %1245
  %1247 = vrot.lane.b32.xlu0 %v1088, 126
  %v1248 = vpop.permute.xlu0 %1247
  %1249 = vrot.lane.b32.xlu0 %v1091, 126
  %v1250 = vpop.permute.xlu0 %1249
  %v1252 = vsel %vm602, %v1236, 0
  %v1255 = vsel %vm602, %v1238, 0
  %v1258 = vsel %vm602, %v1240, 0
  %v1261 = vsel %vm602, %v1242, 0
  %v1264 = vsel %vm602, %v1244, 0
  %v1267 = vsel %vm602, %v1246, 0
  %v1270 = vsel %vm602, %v1248, 0
  %v1273 = vsel %vm602, %v1250, 0
  %v1276 = vsel %vm627, %v1092, 0
  %1278 = vmatprep.subr.bf16.mxu0 0
  %1279 = vmatpush1.bf16.msra.mxu0 %v1276
  %1280 = vmatprep.subr.bf16.mxu0 0
  %1281 = vmatpush1.bf16.msra.mxu0 0
  %1282 = vmatprep.subr.bf16.mxu0 0
  %1283 = vmatpush1.bf16.msra.mxu0 0
  %1284 = vmatprep.subr.bf16.mxu0 0
  %1285 = vmatpush1.bf16.msra.mxu0 0
  %1286 = vmatprep.subr.bf16.mxu0 0
  %1287 = vmatpush1.bf16.msra.mxu0 0
  %1288 = vmatprep.subr.bf16.mxu0 0
  %1289 = vmatpush1.bf16.msra.mxu0 0
  %1290 = vmatprep.subr.bf16.mxu0 0
  %1291 = vmatpush1.bf16.msra.mxu0 0
  %1292 = vmatprep.subr.bf16.mxu0 0
  %1293 = vmatpush1.bf16.msra.mxu0 0
  %1294 = vmatprep.subr.bf16.mxu0 0
  %1295 = vmatpush1.bf16.msra.mxu0 0
  %1296 = vmatprep.subr.bf16.mxu0 0
  %1297 = vmatpush1.bf16.msra.mxu0 0
  %1298 = vmatprep.subr.bf16.mxu0 0
  %1299 = vmatpush1.bf16.msra.mxu0 0
  %1300 = vmatprep.subr.bf16.mxu0 0
  %1301 = vmatpush1.bf16.msra.mxu0 0
  %1302 = vmatprep.subr.bf16.mxu0 0
  %1303 = vmatpush1.bf16.msra.mxu0 0
  %1304 = vmatprep.subr.bf16.mxu0 0
  %1305 = vmatpush1.bf16.msra.mxu0 0
  %1306 = vmatprep.subr.bf16.mxu0 0
  %1307 = vmatpush1.bf16.msra.mxu0 0
  %1308 = vmatprep.subr.bf16.mxu0 0
  %1309 = vmatpush1.bf16.msra.mxu0 0
  %1310 = vmatprep.mubr.bf16.mxu0 0
  %1311 = vmatmul.mubr.bf16.gmra.mrb[0].mxu0 %v1252
  %v1312 = vpop.f32.mrb[0].mxu0
  %v1313 = vadd.f32 %v1173, %v1312
  %v1314 = vpop.f32.mrb[0].mxu0
  %v1315 = vpop.f32.mrb[0].mxu0
  %v1316 = vadd.f32 %v1176, %v1315
  %v1317 = vpop.f32.mrb[0].mxu0
  %1318 = vmatprep.mubr.bf16.mxu0 0
  %1319 = vmatmul.mubr.bf16.gmra.mrb[0].mxu0 %v1255
  %v1320 = vpop.f32.mrb[0].mxu0
  %v1321 = vadd.f32 %v1181, %v1320
  %v1322 = vpop.f32.mrb[0].mxu0
  %v1323 = vpop.f32.mrb[0].mxu0
  %v1324 = vadd.f32 %v1184, %v1323
  %v1325 = vpop.f32.mrb[0].mxu0
  %1326 = vmatprep.mubr.bf16.mxu0 0
  %1327 = vmatmul.mubr.bf16.gmra.mrb[0].mxu0 %v1258
  %v1328 = vpop.f32.mrb[0].mxu0
  %v1329 = vadd.f32 %v1189, %v1328
  %v1330 = vpop.f32.mrb[0].mxu0
  %v1331 = vpop.f32.mrb[0].mxu0
  %v1332 = vadd.f32 %v1192, %v1331
  %v1333 = vpop.f32.mrb[0].mxu0
  %1334 = vmatprep.mubr.bf16.mxu0 0
  %1335 = vmatmul.mubr.bf16.gmra.mrb[0].mxu0 %v1261
  %v1336 = vpop.f32.mrb[0].mxu0
  %v1337 = vadd.f32 %v1197, %v1336
  %v1338 = vpop.f32.mrb[0].mxu0
  %v1339 = vpop.f32.mrb[0].mxu0
  %v1340 = vadd.f32 %v1200, %v1339
  %v1341 = vpop.f32.mrb[0].mxu0
  %1342 = vmatprep.mubr.bf16.mxu0 0
  %1343 = vmatmul.mubr.bf16.gmra.mrb[0].mxu0 %v1264
  %v1344 = vpop.f32.mrb[0].mxu0
  %v1345 = vadd.f32 %v1205, %v1344
  %v1346 = vpop.f32.mrb[0].mxu0
  %v1347 = vpop.f32.mrb[0].mxu0
  %v1348 = vadd.f32 %v1208, %v1347
  %v1349 = vpop.f32.mrb[0].mxu0
  %1350 = vmatprep.mubr.bf16.mxu0 0
  %1351 = vmatmul.mubr.bf16.gmra.mrb[0].mxu0 %v1267
  %v1352 = vpop.f32.mrb[0].mxu0
  %v1353 = vadd.f32 %v1213, %v1352
  %v1354 = vpop.f32.mrb[0].mxu0
  %v1355 = vpop.f32.mrb[0].mxu0
  %v1356 = vadd.f32 %v1216, %v1355
  %v1357 = vpop.f32.mrb[0].mxu0
  %1358 = vmatprep.mubr.bf16.mxu0 0
  %1359 = vmatmul.mubr.bf16.gmra.mrb[0].mxu0 %v1270
  %v1360 = vpop.f32.mrb[0].mxu0
  %v1361 = vadd.f32 %v1221, %v1360
  %v1362 = vpop.f32.mrb[0].mxu0
  %v1363 = vpop.f32.mrb[0].mxu0
  %v1364 = vadd.f32 %v1224, %v1363
  %v1365 = vpop.f32.mrb[0].mxu0
  %1366 = vmatprep.mubr.bf16.mxu0 0
  %1367 = vmatmul.mubr.bf16.gmra.mrb[0].mxu0 %v1273
  %v1368 = vpop.f32.mrb[0].mxu0
  %v1369 = vadd.f32 %v1229, %v1368
  %v1370 = vpop.f32.mrb[0].mxu0
  %v1371 = vpop.f32.mrb[0].mxu0
  %v1372 = vadd.f32 %v1232, %v1371
  %v1373 = vpop.f32.mrb[0].mxu0
  %1374 = vdwg.mxu0
  %vm1375 = vcmask 1044480
  %v1376 = vrot.slane %v405, 3
  %v1377 = vrot.slane %v406, 3
  %v1378 = vsel %vm1375, %v1376, %v1377
  %v1379 = vrot.slane %v407, 3
  %v1380 = vrot.slane %v408, 3
  %v1381 = vsel %vm1375, %v1379, %v1380
  %v1382 = vrot.slane %v409, 3
  %v1383 = vrot.slane %v410, 3
  %v1384 = vsel %vm1375, %v1382, %v1383
  %v1385 = vrot.slane %v411, 3
  %v1386 = vrot.slane %v412, 3
  %v1387 = vsel %vm1375, %v1385, %v1386
  %v1388 = vrot.slane %v413, 3
  %v1389 = vrot.slane %v414, 3
  %v1390 = vsel %vm1375, %v1388, %v1389
  %v1391 = vrot.slane %v415, 3
  %v1392 = vrot.slane %v416, 3
  %v1393 = vsel %vm1375, %v1391, %v1392
  %v1394 = vrot.slane %v417, 3
  %v1395 = vrot.slane %v418, 3
  %v1396 = vsel %vm1375, %v1394, %v1395
  %v1397 = vrot.slane %v419, 3
  %v1398 = vrot.slane %v420, 3
  %v1399 = vsel %vm1375, %v1397, %v1398
  %s1400 = scalar_lea.vmem %s6, 2
  %v1401 = vld [vmem:[%s1400] sm:$0x1]
  %1402 = vrot.lane.b32.xlu0 %v1378, 126
  %v1403 = vpop.permute.xlu0 %1402
  %1404 = vrot.lane.b32.xlu0 %v1381, 126
  %v1405 = vpop.permute.xlu0 %1404
  %1406 = vrot.lane.b32.xlu0 %v1384, 126
  %v1407 = vpop.permute.xlu0 %1406
  %1408 = vrot.lane.b32.xlu0 %v1387, 126
  %v1409 = vpop.permute.xlu0 %1408
  %1410 = vrot.lane.b32.xlu0 %v1390, 126
  %v1411 = vpop.permute.xlu0 %1410
  %1412 = vrot.lane.b32.xlu0 %v1393, 126
  %v1413 = vpop.permute.xlu0 %1412
  %1414 = vrot.lane.b32.xlu0 %v1396, 126
  %v1415 = vpop.permute.xlu0 %1414
  %1416 = vrot.lane.b32.xlu0 %v1399, 126
  %v1417 = vpop.permute.xlu0 %1416
  %v1419 = vsel %vm602, %v1403, 0
  %v1422 = vsel %vm602, %v1405, 0
  %v1425 = vsel %vm602, %v1407, 0
  %v1428 = vsel %vm602, %v1409, 0
  %v1431 = vsel %vm602, %v1411, 0
  %v1434 = vsel %vm602, %v1413, 0
  %v1437 = vsel %vm602, %v1415, 0
  %v1440 = vsel %vm602, %v1417, 0
  %v1443 = vsel %vm627, %v1401, 0
  %1445 = vmatprep.subr.bf16.mxu0 0
  %1446 = vmatpush1.bf16.msra.mxu0 %v1443
  %1447 = vmatprep.subr.bf16.mxu0 0
  %1448 = vmatpush1.bf16.msra.mxu0 0
  %1449 = vmatprep.subr.bf16.mxu0 0
  %1450 = vmatpush1.bf16.msra.mxu0 0
  %1451 = vmatprep.subr.bf16.mxu0 0
  %1452 = vmatpush1.bf16.msra.mxu0 0
  %1453 = vmatprep.subr.bf16.mxu0 0
  %1454 = vmatpush1.bf16.msra.mxu0 0
  %1455 = vmatprep.subr.bf16.mxu0 0
  %1456 = vmatpush1.bf16.msra.mxu0 0
  %1457 = vmatprep.subr.bf16.mxu0 0
  %1458 = vmatpush1.bf16.msra.mxu0 0
  %1459 = vmatprep.subr.bf16.mxu0 0
  %1460 = vmatpush1.bf16.msra.mxu0 0
  %1461 = vmatprep.subr.bf16.mxu0 0
  %1462 = vmatpush1.bf16.msra.mxu0 0
  %1463 = vmatprep.subr.bf16.mxu0 0
  %1464 = vmatpush1.bf16.msra.mxu0 0
  %1465 = vmatprep.subr.bf16.mxu0 0
  %1466 = vmatpush1.bf16.msra.mxu0 0
  %1467 = vmatprep.subr.bf16.mxu0 0
  %1468 = vmatpush1.bf16.msra.mxu0 0
  %1469 = vmatprep.subr.bf16.mxu0 0
  %1470 = vmatpush1.bf16.msra.mxu0 0
  %1471 = vmatprep.subr.bf16.mxu0 0
  %1472 = vmatpush1.bf16.msra.mxu0 0
  %1473 = vmatprep.subr.bf16.mxu0 0
  %1474 = vmatpush1.bf16.msra.mxu0 0
  %1475 = vmatprep.subr.bf16.mxu0 0
  %1476 = vmatpush1.bf16.msra.mxu0 0
  %1477 = vmatprep.mubr.bf16.mxu0 0
  %1478 = vmatmul.mubr.bf16.gmra.mrb[0].mxu0 %v1419
  %v1479 = vpop.f32.mrb[0].mxu0
  %v1480 = vadd.f32 0.0, %v1479
  %v1481 = vpop.f32.mrb[0].mxu0
  %v1482 = vpop.f32.mrb[0].mxu0
  %v1483 = vadd.f32 0.0, %v1482
  %v1484 = vpop.f32.mrb[0].mxu0
  %1485 = vmatprep.mubr.bf16.mxu0 0
  %1486 = vmatmul.mubr.bf16.gmra.mrb[0].mxu0 %v1422
  %v1487 = vpop.f32.mrb[0].mxu0
  %v1488 = vadd.f32 0.0, %v1487
  %v1489 = vpop.f32.mrb[0].mxu0
  %v1490 = vpop.f32.mrb[0].mxu0
  %v1491 = vadd.f32 0.0, %v1490
  %v1492 = vpop.f32.mrb[0].mxu0
  %1493 = vmatprep.mubr.bf16.mxu0 0
  %1494 = vmatmul.mubr.bf16.gmra.mrb[0].mxu0 %v1425
  %v1495 = vpop.f32.mrb[0].mxu0
  %v1496 = vadd.f32 0.0, %v1495
  %v1497 = vpop.f32.mrb[0].mxu0
  %v1498 = vpop.f32.mrb[0].mxu0
  %v1499 = vadd.f32 0.0, %v1498
  %v1500 = vpop.f32.mrb[0].mxu0
  %1501 = vmatprep.mubr.bf16.mxu0 0
  %1502 = vmatmul.mubr.bf16.gmra.mrb[0].mxu0 %v1428
  %v1503 = vpop.f32.mrb[0].mxu0
  %v1504 = vadd.f32 0.0, %v1503
  %v1505 = vpop.f32.mrb[0].mxu0
  %v1506 = vpop.f32.mrb[0].mxu0
  %v1507 = vadd.f32 0.0, %v1506
  %v1508 = vpop.f32.mrb[0].mxu0
  %1509 = vmatprep.mubr.bf16.mxu0 0
  %1510 = vmatmul.mubr.bf16.gmra.mrb[0].mxu0 %v1431
  %v1511 = vpop.f32.mrb[0].mxu0
  %v1512 = vadd.f32 0.0, %v1511
  %v1513 = vpop.f32.mrb[0].mxu0
  %v1514 = vpop.f32.mrb[0].mxu0
  %v1515 = vadd.f32 0.0, %v1514
  %v1516 = vpop.f32.mrb[0].mxu0
  %1517 = vmatprep.mubr.bf16.mxu0 0
  %1518 = vmatmul.mubr.bf16.gmra.mrb[0].mxu0 %v1434
  %v1519 = vpop.f32.mrb[0].mxu0
  %v1520 = vadd.f32 0.0, %v1519
  %v1521 = vpop.f32.mrb[0].mxu0
  %v1522 = vpop.f32.mrb[0].mxu0
  %v1523 = vadd.f32 0.0, %v1522
  %v1524 = vpop.f32.mrb[0].mxu0
  %1525 = vmatprep.mubr.bf16.mxu0 0
  %1526 = vmatmul.mubr.bf16.gmra.mrb[0].mxu0 %v1437
  %v1527 = vpop.f32.mrb[0].mxu0
  %v1528 = vadd.f32 0.0, %v1527
  %v1529 = vpop.f32.mrb[0].mxu0
  %v1530 = vpop.f32.mrb[0].mxu0
  %v1531 = vadd.f32 0.0, %v1530
  %v1532 = vpop.f32.mrb[0].mxu0
  %1533 = vmatprep.mubr.bf16.mxu0 0
  %1534 = vmatmul.mubr.bf16.gmra.mrb[0].mxu0 %v1440
  %v1535 = vpop.f32.mrb[0].mxu0
  %v1536 = vadd.f32 0.0, %v1535
  %v1537 = vpop.f32.mrb[0].mxu0
  %v1538 = vpop.f32.mrb[0].mxu0
  %v1539 = vadd.f32 0.0, %v1538
  %v1540 = vpop.f32.mrb[0].mxu0
  %1541 = vdwg.mxu0
  %v1542 = vadd.f32 %v1313, %v1480
  %v1543 = vadd.f32 %v1316, %v1483
  %v1544 = vadd.f32 %v1321, %v1488
  %v1545 = vadd.f32 %v1324, %v1491
  %v1546 = vadd.f32 %v1329, %v1496
  %v1547 = vadd.f32 %v1332, %v1499
  %v1548 = vadd.f32 %v1337, %v1504
  %v1549 = vadd.f32 %v1340, %v1507
  %v1550 = vadd.f32 %v1345, %v1512
  %v1551 = vadd.f32 %v1348, %v1515
  %v1552 = vadd.f32 %v1353, %v1520
  %v1553 = vadd.f32 %v1356, %v1523
  %v1554 = vadd.f32 %v1361, %v1528
  %v1555 = vadd.f32 %v1364, %v1531
  %v1556 = vadd.f32 %v1369, %v1536
  %v1557 = vadd.f32 %v1372, %v1539
  %1574 = vrot.lane.b32.xlu0 %v1542, 2
  %v1575 = vpop.permute.xlu0 %1574
  %1576 = vrot.lane.b32.xlu0 %v1543, 2
  %v1577 = vpop.permute.xlu0 %1576
  %1578 = vrot.lane.b32.xlu0 %v1544, 2
  %v1579 = vpop.permute.xlu0 %1578
  %1580 = vrot.lane.b32.xlu0 %v1545, 2
  %v1581 = vpop.permute.xlu0 %1580
  %1582 = vrot.lane.b32.xlu0 %v1546, 2
  %v1583 = vpop.permute.xlu0 %1582
  %1584 = vrot.lane.b32.xlu0 %v1547, 2
  %v1585 = vpop.permute.xlu0 %1584
  %1586 = vrot.lane.b32.xlu0 %v1548, 2
  %v1587 = vpop.permute.xlu0 %1586
  %1588 = vrot.lane.b32.xlu0 %v1549, 2
  %v1589 = vpop.permute.xlu0 %1588
  %1590 = vrot.lane.b32.xlu0 %v1550, 2
  %v1591 = vpop.permute.xlu0 %1590
  %1592 = vrot.lane.b32.xlu0 %v1551, 2
  %v1593 = vpop.permute.xlu0 %1592
  %1594 = vrot.lane.b32.xlu0 %v1552, 2
  %v1595 = vpop.permute.xlu0 %1594
  %1596 = vrot.lane.b32.xlu0 %v1553, 2
  %v1597 = vpop.permute.xlu0 %1596
  %1598 = vrot.lane.b32.xlu0 %v1554, 2
  %v1599 = vpop.permute.xlu0 %1598
  %1600 = vrot.lane.b32.xlu0 %v1555, 2
  %v1601 = vpop.permute.xlu0 %1600
  %1602 = vrot.lane.b32.xlu0 %v1556, 2
  %v1603 = vpop.permute.xlu0 %1602
  %1604 = vrot.lane.b32.xlu0 %v1557, 2
  %v1605 = vpop.permute.xlu0 %1604
  %vm1622 = vcmask 31760
  %1623 = vst.msk [vmem:[#allocation2] sm:$0xff] %vm1622, %v1575
  %1624 = vst.msk [vmem:[#allocation2 + $0x8] sm:$0xff] %vm1622, %v1577
  %1625 = vst.msk [vmem:[#allocation2 + $0x10] sm:$0xff] %vm1622, %v1579
  %1626 = vst.msk [vmem:[#allocation2 + $0x18] sm:$0xff] %vm1622, %v1581
  %1627 = vst.msk [vmem:[#allocation2 + $0x20] sm:$0xff] %vm1622, %v1583
  %1628 = vst.msk [vmem:[#allocation2 + $0x28] sm:$0xff] %vm1622, %v1585
  %1629 = vst.msk [vmem:[#allocation2 + $0x30] sm:$0xff] %vm1622, %v1587
  %1630 = vst.msk [vmem:[#allocation2 + $0x38] sm:$0xff] %vm1622, %v1589
  %1631 = vst.msk [vmem:[#allocation2 + $0x40] sm:$0xff] %vm1622, %v1591
  %1632 = vst.msk [vmem:[#allocation2 + $0x48] sm:$0xff] %vm1622, %v1593
  %1633 = vst.msk [vmem:[#allocation2 + $0x50] sm:$0xff] %vm1622, %v1595
  %1634 = vst.msk [vmem:[#allocation2 + $0x58] sm:$0xff] %vm1622, %v1597
  %1635 = vst.msk [vmem:[#allocation2 + $0x60] sm:$0xff] %vm1622, %v1599
  %1636 = vst.msk [vmem:[#allocation2 + $0x68] sm:$0xff] %vm1622, %v1601
  %1637 = vst.msk [vmem:[#allocation2 + $0x70] sm:$0xff] %vm1622, %v1603
  %1638 = vst.msk [vmem:[#allocation2 + $0x78] sm:$0xff] %vm1622, %v1605
  %vm1639 = vsmask.f32 7424
  %v1640 = vrot.slane %v426, 1
  %v1641 = vor.u32 %v423, %v1640
  %v1642 = vrot.slane %v434, 1
  %v1643 = vsel %vm1639, %v1641, %v1642
  %v1644 = vrot.slane %v443, 1
  %v1645 = vor.u32 %v440, %v1644
  %v1646 = vrot.slane %v451, 1
  %v1647 = vsel %vm1639, %v1645, %v1646
  %v1648 = vrot.slane %v460, 1
  %v1649 = vor.u32 %v457, %v1648
  %v1650 = vrot.slane %v468, 1
  %v1651 = vsel %vm1639, %v1649, %v1650
  %v1652 = vrot.slane %v477, 1
  %v1653 = vor.u32 %v474, %v1652
  %v1654 = vrot.slane %v485, 1
  %v1655 = vsel %vm1639, %v1653, %v1654
  %v1656 = vrot.slane %v494, 1
  %v1657 = vor.u32 %v491, %v1656
  %v1658 = vrot.slane %v502, 1
  %v1659 = vsel %vm1639, %v1657, %v1658
  %v1660 = vrot.slane %v511, 1
  %v1661 = vor.u32 %v508, %v1660
  %v1662 = vrot.slane %v519, 1
  %v1663 = vsel %vm1639, %v1661, %v1662
  %v1664 = vrot.slane %v528, 1
  %v1665 = vor.u32 %v525, %v1664
  %v1666 = vrot.slane %v536, 1
  %v1667 = vsel %vm1639, %v1665, %v1666
  %v1668 = vrot.slane %v545, 1
  %v1669 = vor.u32 %v542, %v1668
  %v1670 = vrot.slane %v553, 1
  %v1671 = vsel %vm1639, %v1669, %v1670
  %v1672 = vld [vmem:[%s7] sm:$0x1]
  %s1673 = scalar_lea.vmem %s7, 1
  %v1674 = vld [vmem:[%s1673] sm:$0x1]
  %1675 = vrot.lane.b32.xlu0 %v578, 124
  %v1676 = vpop.permute.xlu0 %1675
  %1677 = vrot.lane.b32.xlu0 %v581, 124
  %v1678 = vpop.permute.xlu0 %1677
  %1679 = vrot.lane.b32.xlu0 %v584, 124
  %v1680 = vpop.permute.xlu0 %1679
  %1681 = vrot.lane.b32.xlu0 %v587, 124
  %v1682 = vpop.permute.xlu0 %1681
  %1683 = vrot.lane.b32.xlu0 %v590, 124
  %v1684 = vpop.permute.xlu0 %1683
  %1685 = vrot.lane.b32.xlu0 %v593, 124
  %v1686 = vpop.permute.xlu0 %1685
  %1687 = vrot.lane.b32.xlu0 %v596, 124
  %v1688 = vpop.permute.xlu0 %1687
  %1689 = vrot.lane.b32.xlu0 %v599, 124
  %v1690 = vpop.permute.xlu0 %1689
  %v1692 = vsel %vm602, %v1676, 0
  %v1695 = vsel %vm602, %v1678, 0
  %v1698 = vsel %vm602, %v1680, 0
  %v1701 = vsel %vm602, %v1682, 0
  %v1704 = vsel %vm602, %v1684, 0
  %v1707 = vsel %vm602, %v1686, 0
  %v1710 = vsel %vm602, %v1688, 0
  %v1713 = vsel %vm602, %v1690, 0
  %v1716 = vsel %vm627, %v1674, 0
  %1718 = vmatprep.subr.bf16.mxu0 0
  %1719 = vmatpush1.bf16.msra.mxu0 %v1716
  %1720 = vmatprep.subr.bf16.mxu0 0
  %1721 = vmatpush1.bf16.msra.mxu0 0
  %1722 = vmatprep.subr.bf16.mxu0 0
  %1723 = vmatpush1.bf16.msra.mxu0 0
  %1724 = vmatprep.subr.bf16.mxu0 0
  %1725 = vmatpush1.bf16.msra.mxu0 0
  %1726 = vmatprep.subr.bf16.mxu0 0
  %1727 = vmatpush1.bf16.msra.mxu0 0
  %1728 = vmatprep.subr.bf16.mxu0 0
  %1729 = vmatpush1.bf16.msra.mxu0 0
  %1730 = vmatprep.subr.bf16.mxu0 0
  %1731 = vmatpush1.bf16.msra.mxu0 0
  %1732 = vmatprep.subr.bf16.mxu0 0
  %1733 = vmatpush1.bf16.msra.mxu0 0
  %1734 = vmatprep.subr.bf16.mxu0 0
  %1735 = vmatpush1.bf16.msra.mxu0 0
  %1736 = vmatprep.subr.bf16.mxu0 0
  %1737 = vmatpush1.bf16.msra.mxu0 0
  %1738 = vmatprep.subr.bf16.mxu0 0
  %1739 = vmatpush1.bf16.msra.mxu0 0
  %1740 = vmatprep.subr.bf16.mxu0 0
  %1741 = vmatpush1.bf16.msra.mxu0 0
  %1742 = vmatprep.subr.bf16.mxu0 0
  %1743 = vmatpush1.bf16.msra.mxu0 0
  %1744 = vmatprep.subr.bf16.mxu0 0
  %1745 = vmatpush1.bf16.msra.mxu0 0
  %1746 = vmatprep.subr.bf16.mxu0 0
  %1747 = vmatpush1.bf16.msra.mxu0 0
  %1748 = vmatprep.subr.bf16.mxu0 0
  %1749 = vmatpush1.bf16.msra.mxu0 0
  %1750 = vmatprep.mubr.bf16.mxu0 0
  %1751 = vmatmul.mubr.bf16.gmra.mrb[0].mxu0 %v1692
  %v1752 = vpop.f32.mrb[0].mxu0
  %v1753 = vadd.f32 0.0, %v1752
  %v1754 = vpop.f32.mrb[0].mxu0
  %v1755 = vpop.f32.mrb[0].mxu0
  %v1756 = vadd.f32 0.0, %v1755
  %v1757 = vpop.f32.mrb[0].mxu0
  %1758 = vmatprep.mubr.bf16.mxu0 0
  %1759 = vmatmul.mubr.bf16.gmra.mrb[0].mxu0 %v1695
  %v1760 = vpop.f32.mrb[0].mxu0
  %v1761 = vadd.f32 0.0, %v1760
  %v1762 = vpop.f32.mrb[0].mxu0
  %v1763 = vpop.f32.mrb[0].mxu0
  %v1764 = vadd.f32 0.0, %v1763
  %v1765 = vpop.f32.mrb[0].mxu0
  %1766 = vmatprep.mubr.bf16.mxu0 0
  %1767 = vmatmul.mubr.bf16.gmra.mrb[0].mxu0 %v1698
  %v1768 = vpop.f32.mrb[0].mxu0
  %v1769 = vadd.f32 0.0, %v1768
  %v1770 = vpop.f32.mrb[0].mxu0
  %v1771 = vpop.f32.mrb[0].mxu0
  %v1772 = vadd.f32 0.0, %v1771
  %v1773 = vpop.f32.mrb[0].mxu0
  %1774 = vmatprep.mubr.bf16.mxu0 0
  %1775 = vmatmul.mubr.bf16.gmra.mrb[0].mxu0 %v1701
  %v1776 = vpop.f32.mrb[0].mxu0
  %v1777 = vadd.f32 0.0, %v1776
  %v1778 = vpop.f32.mrb[0].mxu0
  %v1779 = vpop.f32.mrb[0].mxu0
  %v1780 = vadd.f32 0.0, %v1779
  %v1781 = vpop.f32.mrb[0].mxu0
  %1782 = vmatprep.mubr.bf16.mxu0 0
  %1783 = vmatmul.mubr.bf16.gmra.mrb[0].mxu0 %v1704
  %v1784 = vpop.f32.mrb[0].mxu0
  %v1785 = vadd.f32 0.0, %v1784
  %v1786 = vpop.f32.mrb[0].mxu0
  %v1787 = vpop.f32.mrb[0].mxu0
  %v1788 = vadd.f32 0.0, %v1787
  %v1789 = vpop.f32.mrb[0].mxu0
  %1790 = vmatprep.mubr.bf16.mxu0 0
  %1791 = vmatmul.mubr.bf16.gmra.mrb[0].mxu0 %v1707
  %v1792 = vpop.f32.mrb[0].mxu0
  %v1793 = vadd.f32 0.0, %v1792
  %v1794 = vpop.f32.mrb[0].mxu0
  %v1795 = vpop.f32.mrb[0].mxu0
  %v1796 = vadd.f32 0.0, %v1795
  %v1797 = vpop.f32.mrb[0].mxu0
  %1798 = vmatprep.mubr.bf16.mxu0 0
  %1799 = vmatmul.mubr.bf16.gmra.mrb[0].mxu0 %v1710
  %v1800 = vpop.f32.mrb[0].mxu0
  %v1801 = vadd.f32 0.0, %v1800
  %v1802 = vpop.f32.mrb[0].mxu0
  %v1803 = vpop.f32.mrb[0].mxu0
  %v1804 = vadd.f32 0.0, %v1803
  %v1805 = vpop.f32.mrb[0].mxu0
  %1806 = vmatprep.mubr.bf16.mxu0 0
  %1807 = vmatmul.mubr.bf16.gmra.mrb[0].mxu0 %v1713
  %v1808 = vpop.f32.mrb[0].mxu0
  %v1809 = vadd.f32 0.0, %v1808
  %v1810 = vpop.f32.mrb[0].mxu0
  %v1811 = vpop.f32.mrb[0].mxu0
  %v1812 = vadd.f32 0.0, %v1811
  %v1813 = vpop.f32.mrb[0].mxu0
  %1814 = vdwg.mxu0
  %1815 = vrot.lane.b32.xlu0 %v1643, 124
  %v1816 = vpop.permute.xlu0 %1815
  %1817 = vrot.lane.b32.xlu0 %v1647, 124
  %v1818 = vpop.permute.xlu0 %1817
  %1819 = vrot.lane.b32.xlu0 %v1651, 124
  %v1820 = vpop.permute.xlu0 %1819
  %1821 = vrot.lane.b32.xlu0 %v1655, 124
  %v1822 = vpop.permute.xlu0 %1821
  %1823 = vrot.lane.b32.xlu0 %v1659, 124
  %v1824 = vpop.permute.xlu0 %1823
  %1825 = vrot.lane.b32.xlu0 %v1663, 124
  %v1826 = vpop.permute.xlu0 %1825
  %1827 = vrot.lane.b32.xlu0 %v1667, 124
  %v1828 = vpop.permute.xlu0 %1827
  %1829 = vrot.lane.b32.xlu0 %v1671, 124
  %v1830 = vpop.permute.xlu0 %1829
  %v1832 = vsel %vm602, %v1816, 0
  %v1835 = vsel %vm602, %v1818, 0
  %v1838 = vsel %vm602, %v1820, 0
  %v1841 = vsel %vm602, %v1822, 0
  %v1844 = vsel %vm602, %v1824, 0
  %v1847 = vsel %vm602, %v1826, 0
  %v1850 = vsel %vm602, %v1828, 0
  %v1853 = vsel %vm602, %v1830, 0
  %v1856 = vsel %vm627, %v1672, 0
  %1858 = vmatprep.subr.bf16.mxu0 0
  %1859 = vmatpush1.bf16.msra.mxu0 %v1856
  %1860 = vmatprep.subr.bf16.mxu0 0
  %1861 = vmatpush1.bf16.msra.mxu0 0
  %1862 = vmatprep.subr.bf16.mxu0 0
  %1863 = vmatpush1.bf16.msra.mxu0 0
  %1864 = vmatprep.subr.bf16.mxu0 0
  %1865 = vmatpush1.bf16.msra.mxu0 0
  %1866 = vmatprep.subr.bf16.mxu0 0
  %1867 = vmatpush1.bf16.msra.mxu0 0
  %1868 = vmatprep.subr.bf16.mxu0 0
  %1869 = vmatpush1.bf16.msra.mxu0 0
  %1870 = vmatprep.subr.bf16.mxu0 0
  %1871 = vmatpush1.bf16.msra.mxu0 0
  %1872 = vmatprep.subr.bf16.mxu0 0
  %1873 = vmatpush1.bf16.msra.mxu0 0
  %1874 = vmatprep.subr.bf16.mxu0 0
  %1875 = vmatpush1.bf16.msra.mxu0 0
  %1876 = vmatprep.subr.bf16.mxu0 0
  %1877 = vmatpush1.bf16.msra.mxu0 0
  %1878 = vmatprep.subr.bf16.mxu0 0
  %1879 = vmatpush1.bf16.msra.mxu0 0
  %1880 = vmatprep.subr.bf16.mxu0 0
  %1881 = vmatpush1.bf16.msra.mxu0 0
  %1882 = vmatprep.subr.bf16.mxu0 0
  %1883 = vmatpush1.bf16.msra.mxu0 0
  %1884 = vmatprep.subr.bf16.mxu0 0
  %1885 = vmatpush1.bf16.msra.mxu0 0
  %1886 = vmatprep.subr.bf16.mxu0 0
  %1887 = vmatpush1.bf16.msra.mxu0 0
  %1888 = vmatprep.subr.bf16.mxu0 0
  %1889 = vmatpush1.bf16.msra.mxu0 0
  %1890 = vmatprep.mubr.bf16.mxu0 0
  %1891 = vmatmul.mubr.bf16.gmra.mrb[0].mxu0 %v1832
  %v1892 = vpop.f32.mrb[0].mxu0
  %v1893 = vadd.f32 %v1753, %v1892
  %v1894 = vpop.f32.mrb[0].mxu0
  %v1895 = vpop.f32.mrb[0].mxu0
  %v1896 = vadd.f32 %v1756, %v1895
  %v1897 = vpop.f32.mrb[0].mxu0
  %1898 = vmatprep.mubr.bf16.mxu0 0
  %1899 = vmatmul.mubr.bf16.gmra.mrb[0].mxu0 %v1835
  %v1900 = vpop.f32.mrb[0].mxu0
  %v1901 = vadd.f32 %v1761, %v1900
  %v1902 = vpop.f32.mrb[0].mxu0
  %v1903 = vpop.f32.mrb[0].mxu0
  %v1904 = vadd.f32 %v1764, %v1903
  %v1905 = vpop.f32.mrb[0].mxu0
  %1906 = vmatprep.mubr.bf16.mxu0 0
  %1907 = vmatmul.mubr.bf16.gmra.mrb[0].mxu0 %v1838
  %v1908 = vpop.f32.mrb[0].mxu0
  %v1909 = vadd.f32 %v1769, %v1908
  %v1910 = vpop.f32.mrb[0].mxu0
  %v1911 = vpop.f32.mrb[0].mxu0
  %v1912 = vadd.f32 %v1772, %v1911
  %v1913 = vpop.f32.mrb[0].mxu0
  %1914 = vmatprep.mubr.bf16.mxu0 0
  %1915 = vmatmul.mubr.bf16.gmra.mrb[0].mxu0 %v1841
  %v1916 = vpop.f32.mrb[0].mxu0
  %v1917 = vadd.f32 %v1777, %v1916
  %v1918 = vpop.f32.mrb[0].mxu0
  %v1919 = vpop.f32.mrb[0].mxu0
  %v1920 = vadd.f32 %v1780, %v1919
  %v1921 = vpop.f32.mrb[0].mxu0
  %1922 = vmatprep.mubr.bf16.mxu0 0
  %1923 = vmatmul.mubr.bf16.gmra.mrb[0].mxu0 %v1844
  %v1924 = vpop.f32.mrb[0].mxu0
  %v1925 = vadd.f32 %v1785, %v1924
  %v1926 = vpop.f32.mrb[0].mxu0
  %v1927 = vpop.f32.mrb[0].mxu0
  %v1928 = vadd.f32 %v1788, %v1927
  %v1929 = vpop.f32.mrb[0].mxu0
  %1930 = vmatprep.mubr.bf16.mxu0 0
  %1931 = vmatmul.mubr.bf16.gmra.mrb[0].mxu0 %v1847
  %v1932 = vpop.f32.mrb[0].mxu0
  %v1933 = vadd.f32 %v1793, %v1932
  %v1934 = vpop.f32.mrb[0].mxu0
  %v1935 = vpop.f32.mrb[0].mxu0
  %v1936 = vadd.f32 %v1796, %v1935
  %v1937 = vpop.f32.mrb[0].mxu0
  %1938 = vmatprep.mubr.bf16.mxu0 0
  %1939 = vmatmul.mubr.bf16.gmra.mrb[0].mxu0 %v1850
  %v1940 = vpop.f32.mrb[0].mxu0
  %v1941 = vadd.f32 %v1801, %v1940
  %v1942 = vpop.f32.mrb[0].mxu0
  %v1943 = vpop.f32.mrb[0].mxu0
  %v1944 = vadd.f32 %v1804, %v1943
  %v1945 = vpop.f32.mrb[0].mxu0
  %1946 = vmatprep.mubr.bf16.mxu0 0
  %1947 = vmatmul.mubr.bf16.gmra.mrb[0].mxu0 %v1853
  %v1948 = vpop.f32.mrb[0].mxu0
  %v1949 = vadd.f32 %v1809, %v1948
  %v1950 = vpop.f32.mrb[0].mxu0
  %v1951 = vpop.f32.mrb[0].mxu0
  %v1952 = vadd.f32 %v1812, %v1951
  %v1953 = vpop.f32.mrb[0].mxu0
  %1954 = vdwg.mxu0
  %vm1955 = vsmask.f32 4352
  %v1956 = vrot.slane %v423, 3
  %v1957 = vrot.slane %v426, 4
  %v1958 = vor.u32 %v1956, %v1957
  %v1959 = vrot.slane %v431, 3
  %v1960 = vrot.slane %v434, 4
  %v1961 = vor.u32 %v1959, %v1960
  %v1962 = vsel %vm1955, %v1958, %v1961
  %v1963 = vrot.slane %v440, 3
  %v1964 = vrot.slane %v443, 4
  %v1965 = vor.u32 %v1963, %v1964
  %v1966 = vrot.slane %v448, 3
  %v1967 = vrot.slane %v451, 4
  %v1968 = vor.u32 %v1966, %v1967
  %v1969 = vsel %vm1955, %v1965, %v1968
  %v1970 = vrot.slane %v457, 3
  %v1971 = vrot.slane %v460, 4
  %v1972 = vor.u32 %v1970, %v1971
  %v1973 = vrot.slane %v465, 3
  %v1974 = vrot.slane %v468, 4
  %v1975 = vor.u32 %v1973, %v1974
  %v1976 = vsel %vm1955, %v1972, %v1975
  %v1977 = vrot.slane %v474, 3
  %v1978 = vrot.slane %v477, 4
  %v1979 = vor.u32 %v1977, %v1978
  %v1980 = vrot.slane %v482, 3
  %v1981 = vrot.slane %v485, 4
  %v1982 = vor.u32 %v1980, %v1981
  %v1983 = vsel %vm1955, %v1979, %v1982
  %v1984 = vrot.slane %v491, 3
  %v1985 = vrot.slane %v494, 4
  %v1986 = vor.u32 %v1984, %v1985
  %v1987 = vrot.slane %v499, 3
  %v1988 = vrot.slane %v502, 4
  %v1989 = vor.u32 %v1987, %v1988
  %v1990 = vsel %vm1955, %v1986, %v1989
  %v1991 = vrot.slane %v508, 3
  %v1992 = vrot.slane %v511, 4
  %v1993 = vor.u32 %v1991, %v1992
  %v1994 = vrot.slane %v516, 3
  %v1995 = vrot.slane %v519, 4
  %v1996 = vor.u32 %v1994, %v1995
  %v1997 = vsel %vm1955, %v1993, %v1996
  %v1998 = vrot.slane %v525, 3
  %v1999 = vrot.slane %v528, 4
  %v2000 = vor.u32 %v1998, %v1999
  %v2001 = vrot.slane %v533, 3
  %v2002 = vrot.slane %v536, 4
  %v2003 = vor.u32 %v2001, %v2002
  %v2004 = vsel %vm1955, %v2000, %v2003
  %v2005 = vrot.slane %v542, 3
  %v2006 = vrot.slane %v545, 4
  %v2007 = vor.u32 %v2005, %v2006
  %v2008 = vrot.slane %v550, 3
  %v2009 = vrot.slane %v553, 4
  %v2010 = vor.u32 %v2008, %v2009
  %v2011 = vsel %vm1955, %v2007, %v2010
  %s2012 = scalar_lea.vmem %s7, 2
  %v2013 = vld [vmem:[%s2012] sm:$0x1]
  %2014 = vrot.lane.b32.xlu0 %v1962, 124
  %v2015 = vpop.permute.xlu0 %2014
  %2016 = vrot.lane.b32.xlu0 %v1969, 124
  %v2017 = vpop.permute.xlu0 %2016
  %2018 = vrot.lane.b32.xlu0 %v1976, 124
  %v2019 = vpop.permute.xlu0 %2018
  %2020 = vrot.lane.b32.xlu0 %v1983, 124
  %v2021 = vpop.permute.xlu0 %2020
  %2022 = vrot.lane.b32.xlu0 %v1990, 124
  %v2023 = vpop.permute.xlu0 %2022
  %2024 = vrot.lane.b32.xlu0 %v1997, 124
  %v2025 = vpop.permute.xlu0 %2024
  %2026 = vrot.lane.b32.xlu0 %v2004, 124
  %v2027 = vpop.permute.xlu0 %2026
  %2028 = vrot.lane.b32.xlu0 %v2011, 124
  %v2029 = vpop.permute.xlu0 %2028
  %v2031 = vsel %vm602, %v2015, 0
  %v2034 = vsel %vm602, %v2017, 0
  %v2037 = vsel %vm602, %v2019, 0
  %v2040 = vsel %vm602, %v2021, 0
  %v2043 = vsel %vm602, %v2023, 0
  %v2046 = vsel %vm602, %v2025, 0
  %v2049 = vsel %vm602, %v2027, 0
  %v2052 = vsel %vm602, %v2029, 0
  %v2055 = vsel %vm627, %v2013, 0
  %2057 = vmatprep.subr.bf16.mxu0 0
  %2058 = vmatpush1.bf16.msra.mxu0 %v2055
  %2059 = vmatprep.subr.bf16.mxu0 0
  %2060 = vmatpush1.bf16.msra.mxu0 0
  %2061 = vmatprep.subr.bf16.mxu0 0
  %2062 = vmatpush1.bf16.msra.mxu0 0
  %2063 = vmatprep.subr.bf16.mxu0 0
  %2064 = vmatpush1.bf16.msra.mxu0 0
  %2065 = vmatprep.subr.bf16.mxu0 0
  %2066 = vmatpush1.bf16.msra.mxu0 0
  %2067 = vmatprep.subr.bf16.mxu0 0
  %2068 = vmatpush1.bf16.msra.mxu0 0
  %2069 = vmatprep.subr.bf16.mxu0 0
  %2070 = vmatpush1.bf16.msra.mxu0 0
  %2071 = vmatprep.subr.bf16.mxu0 0
  %2072 = vmatpush1.bf16.msra.mxu0 0
  %2073 = vmatprep.subr.bf16.mxu0 0
  %2074 = vmatpush1.bf16.msra.mxu0 0
  %2075 = vmatprep.subr.bf16.mxu0 0
  %2076 = vmatpush1.bf16.msra.mxu0 0
  %2077 = vmatprep.subr.bf16.mxu0 0
  %2078 = vmatpush1.bf16.msra.mxu0 0
  %2079 = vmatprep.subr.bf16.mxu0 0
  %2080 = vmatpush1.bf16.msra.mxu0 0
  %2081 = vmatprep.subr.bf16.mxu0 0
  %2082 = vmatpush1.bf16.msra.mxu0 0
  %2083 = vmatprep.subr.bf16.mxu0 0
  %2084 = vmatpush1.bf16.msra.mxu0 0
  %2085 = vmatprep.subr.bf16.mxu0 0
  %2086 = vmatpush1.bf16.msra.mxu0 0
  %2087 = vmatprep.subr.bf16.mxu0 0
  %2088 = vmatpush1.bf16.msra.mxu0 0
  %2089 = vmatprep.mubr.bf16.mxu0 0
  %2090 = vmatmul.mubr.bf16.gmra.mrb[0].mxu0 %v2031
  %v2091 = vpop.f32.mrb[0].mxu0
  %v2092 = vadd.f32 0.0, %v2091
  %v2093 = vpop.f32.mrb[0].mxu0
  %v2094 = vpop.f32.mrb[0].mxu0
  %v2095 = vadd.f32 0.0, %v2094
  %v2096 = vpop.f32.mrb[0].mxu0
  %2097 = vmatprep.mubr.bf16.mxu0 0
  %2098 = vmatmul.mubr.bf16.gmra.mrb[0].mxu0 %v2034
  %v2099 = vpop.f32.mrb[0].mxu0
  %v2100 = vadd.f32 0.0, %v2099
  %v2101 = vpop.f32.mrb[0].mxu0
  %v2102 = vpop.f32.mrb[0].mxu0
  %v2103 = vadd.f32 0.0, %v2102
  %v2104 = vpop.f32.mrb[0].mxu0
  %2105 = vmatprep.mubr.bf16.mxu0 0
  %2106 = vmatmul.mubr.bf16.gmra.mrb[0].mxu0 %v2037
  %v2107 = vpop.f32.mrb[0].mxu0
  %v2108 = vadd.f32 0.0, %v2107
  %v2109 = vpop.f32.mrb[0].mxu0
  %v2110 = vpop.f32.mrb[0].mxu0
  %v2111 = vadd.f32 0.0, %v2110
  %v2112 = vpop.f32.mrb[0].mxu0
  %2113 = vmatprep.mubr.bf16.mxu0 0
  %2114 = vmatmul.mubr.bf16.gmra.mrb[0].mxu0 %v2040
  %v2115 = vpop.f32.mrb[0].mxu0
  %v2116 = vadd.f32 0.0, %v2115
  %v2117 = vpop.f32.mrb[0].mxu0
  %v2118 = vpop.f32.mrb[0].mxu0
  %v2119 = vadd.f32 0.0, %v2118
  %v2120 = vpop.f32.mrb[0].mxu0
  %2121 = vmatprep.mubr.bf16.mxu0 0
  %2122 = vmatmul.mubr.bf16.gmra.mrb[0].mxu0 %v2043
  %v2123 = vpop.f32.mrb[0].mxu0
  %v2124 = vadd.f32 0.0, %v2123
  %v2125 = vpop.f32.mrb[0].mxu0
  %v2126 = vpop.f32.mrb[0].mxu0
  %v2127 = vadd.f32 0.0, %v2126
  %v2128 = vpop.f32.mrb[0].mxu0
  %2129 = vmatprep.mubr.bf16.mxu0 0
  %2130 = vmatmul.mubr.bf16.gmra.mrb[0].mxu0 %v2046
  %v2131 = vpop.f32.mrb[0].mxu0
  %v2132 = vadd.f32 0.0, %v2131
  %v2133 = vpop.f32.mrb[0].mxu0
  %v2134 = vpop.f32.mrb[0].mxu0
  %v2135 = vadd.f32 0.0, %v2134
  %v2136 = vpop.f32.mrb[0].mxu0
  %2137 = vmatprep.mubr.bf16.mxu0 0
  %2138 = vmatmul.mubr.bf16.gmra.mrb[0].mxu0 %v2049
  %v2139 = vpop.f32.mrb[0].mxu0
  %v2140 = vadd.f32 0.0, %v2139
  %v2141 = vpop.f32.mrb[0].mxu0
  %v2142 = vpop.f32.mrb[0].mxu0
  %v2143 = vadd.f32 0.0, %v2142
  %v2144 = vpop.f32.mrb[0].mxu0
  %2145 = vmatprep.mubr.bf16.mxu0 0
  %2146 = vmatmul.mubr.bf16.gmra.mrb[0].mxu0 %v2052
  %v2147 = vpop.f32.mrb[0].mxu0
  %v2148 = vadd.f32 0.0, %v2147
  %v2149 = vpop.f32.mrb[0].mxu0
  %v2150 = vpop.f32.mrb[0].mxu0
  %v2151 = vadd.f32 0.0, %v2150
  %v2152 = vpop.f32.mrb[0].mxu0
  %2153 = vdwg.mxu0
  %v2154 = vadd.f32 %v1893, %v2092
  %v2155 = vadd.f32 %v1896, %v2095
  %v2156 = vadd.f32 %v1901, %v2100
  %v2157 = vadd.f32 %v1904, %v2103
  %v2158 = vadd.f32 %v1909, %v2108
  %v2159 = vadd.f32 %v1912, %v2111
  %v2160 = vadd.f32 %v1917, %v2116
  %v2161 = vadd.f32 %v1920, %v2119
  %v2162 = vadd.f32 %v1925, %v2124
  %v2163 = vadd.f32 %v1928, %v2127
  %v2164 = vadd.f32 %v1933, %v2132
  %v2165 = vadd.f32 %v1936, %v2135
  %v2166 = vadd.f32 %v1941, %v2140
  %v2167 = vadd.f32 %v1944, %v2143
  %v2168 = vadd.f32 %v1949, %v2148
  %v2169 = vadd.f32 %v1952, %v2151
  %2186 = vrot.lane.b32.xlu0 %v2154, 4
  %v2187 = vpop.permute.xlu0 %2186
  %2188 = vrot.lane.b32.xlu0 %v2155, 4
  %v2189 = vpop.permute.xlu0 %2188
  %2190 = vrot.lane.b32.xlu0 %v2156, 4
  %v2191 = vpop.permute.xlu0 %2190
  %2192 = vrot.lane.b32.xlu0 %v2157, 4
  %v2193 = vpop.permute.xlu0 %2192
  %2194 = vrot.lane.b32.xlu0 %v2158, 4
  %v2195 = vpop.permute.xlu0 %2194
  %2196 = vrot.lane.b32.xlu0 %v2159, 4
  %v2197 = vpop.permute.xlu0 %2196
  %2198 = vrot.lane.b32.xlu0 %v2160, 4
  %v2199 = vpop.permute.xlu0 %2198
  %2200 = vrot.lane.b32.xlu0 %v2161, 4
  %v2201 = vpop.permute.xlu0 %2200
  %2202 = vrot.lane.b32.xlu0 %v2162, 4
  %v2203 = vpop.permute.xlu0 %2202
  %2204 = vrot.lane.b32.xlu0 %v2163, 4
  %v2205 = vpop.permute.xlu0 %2204
  %2206 = vrot.lane.b32.xlu0 %v2164, 4
  %v2207 = vpop.permute.xlu0 %2206
  %2208 = vrot.lane.b32.xlu0 %v2165, 4
  %v2209 = vpop.permute.xlu0 %2208
  %2210 = vrot.lane.b32.xlu0 %v2166, 4
  %v2211 = vpop.permute.xlu0 %2210
  %2212 = vrot.lane.b32.xlu0 %v2167, 4
  %v2213 = vpop.permute.xlu0 %2212
  %2214 = vrot.lane.b32.xlu0 %v2168, 4
  %v2215 = vpop.permute.xlu0 %2214
  %2216 = vrot.lane.b32.xlu0 %v2169, 4
  %v2217 = vpop.permute.xlu0 %2216
  %vm2234 = vcmask 48160
  %2235 = vst.msk [vmem:[#allocation2] sm:$0xff] %vm2234, %v2187
  %2236 = vst.msk [vmem:[#allocation2 + $0x8] sm:$0xff] %vm2234, %v2189
  %2237 = vst.msk [vmem:[#allocation2 + $0x10] sm:$0xff] %vm2234, %v2191
  %2238 = vst.msk [vmem:[#allocation2 + $0x18] sm:$0xff] %vm2234, %v2193
  %2239 = vst.msk [vmem:[#allocation2 + $0x20] sm:$0xff] %vm2234, %v2195
  %2240 = vst.msk [vmem:[#allocation2 + $0x28] sm:$0xff] %vm2234, %v2197
  %2241 = vst.msk [vmem:[#allocation2 + $0x30] sm:$0xff] %vm2234, %v2199
  %2242 = vst.msk [vmem:[#allocation2 + $0x38] sm:$0xff] %vm2234, %v2201
  %2243 = vst.msk [vmem:[#allocation2 + $0x40] sm:$0xff] %vm2234, %v2203
  %2244 = vst.msk [vmem:[#allocation2 + $0x48] sm:$0xff] %vm2234, %v2205
  %2245 = vst.msk [vmem:[#allocation2 + $0x50] sm:$0xff] %vm2234, %v2207
  %2246 = vst.msk [vmem:[#allocation2 + $0x58] sm:$0xff] %vm2234, %v2209
  %2247 = vst.msk [vmem:[#allocation2 + $0x60] sm:$0xff] %vm2234, %v2211
  %2248 = vst.msk [vmem:[#allocation2 + $0x68] sm:$0xff] %vm2234, %v2213
  %2249 = vst.msk [vmem:[#allocation2 + $0x70] sm:$0xff] %vm2234, %v2215
  %2250 = vst.msk [vmem:[#allocation2 + $0x78] sm:$0xff] %vm2234, %v2217
  %v2251 = vld [vmem:[%s8] sm:$0x1]
  %s2252 = scalar_lea.vmem %s8, 1
  %v2253 = vld [vmem:[%s2252] sm:$0x1]
  %2254 = vrot.lane.b32.xlu0 %v578, 122
  %v2255 = vpop.permute.xlu0 %2254
  %2256 = vrot.lane.b32.xlu0 %v581, 122
  %v2257 = vpop.permute.xlu0 %2256
  %2258 = vrot.lane.b32.xlu0 %v584, 122
  %v2259 = vpop.permute.xlu0 %2258
  %2260 = vrot.lane.b32.xlu0 %v587, 122
  %v2261 = vpop.permute.xlu0 %2260
  %2262 = vrot.lane.b32.xlu0 %v590, 122
  %v2263 = vpop.permute.xlu0 %2262
  %2264 = vrot.lane.b32.xlu0 %v593, 122
  %v2265 = vpop.permute.xlu0 %2264
  %2266 = vrot.lane.b32.xlu0 %v596, 122
  %v2267 = vpop.permute.xlu0 %2266
  %2268 = vrot.lane.b32.xlu0 %v599, 122
  %v2269 = vpop.permute.xlu0 %2268
  %v2271 = vsel %vm602, %v2255, 0
  %v2274 = vsel %vm602, %v2257, 0
  %v2277 = vsel %vm602, %v2259, 0
  %v2280 = vsel %vm602, %v2261, 0
  %v2283 = vsel %vm602, %v2263, 0
  %v2286 = vsel %vm602, %v2265, 0
  %v2289 = vsel %vm602, %v2267, 0
  %v2292 = vsel %vm602, %v2269, 0
  %v2295 = vsel %vm627, %v2253, 0
  %2297 = vmatprep.subr.bf16.mxu0 0
  %2298 = vmatpush1.bf16.msra.mxu0 %v2295
  %2299 = vmatprep.subr.bf16.mxu0 0
  %2300 = vmatpush1.bf16.msra.mxu0 0
  %2301 = vmatprep.subr.bf16.mxu0 0
  %2302 = vmatpush1.bf16.msra.mxu0 0
  %2303 = vmatprep.subr.bf16.mxu0 0
  %2304 = vmatpush1.bf16.msra.mxu0 0
  %2305 = vmatprep.subr.bf16.mxu0 0
  %2306 = vmatpush1.bf16.msra.mxu0 0
  %2307 = vmatprep.subr.bf16.mxu0 0
  %2308 = vmatpush1.bf16.msra.mxu0 0
  %2309 = vmatprep.subr.bf16.mxu0 0
  %2310 = vmatpush1.bf16.msra.mxu0 0
  %2311 = vmatprep.subr.bf16.mxu0 0
  %2312 = vmatpush1.bf16.msra.mxu0 0
  %2313 = vmatprep.subr.bf16.mxu0 0
  %2314 = vmatpush1.bf16.msra.mxu0 0
  %2315 = vmatprep.subr.bf16.mxu0 0
  %2316 = vmatpush1.bf16.msra.mxu0 0
  %2317 = vmatprep.subr.bf16.mxu0 0
  %2318 = vmatpush1.bf16.msra.mxu0 0
  %2319 = vmatprep.subr.bf16.mxu0 0
  %2320 = vmatpush1.bf16.msra.mxu0 0
  %2321 = vmatprep.subr.bf16.mxu0 0
  %2322 = vmatpush1.bf16.msra.mxu0 0
  %2323 = vmatprep.subr.bf16.mxu0 0
  %2324 = vmatpush1.bf16.msra.mxu0 0
  %2325 = vmatprep.subr.bf16.mxu0 0
  %2326 = vmatpush1.bf16.msra.mxu0 0
  %2327 = vmatprep.subr.bf16.mxu0 0
  %2328 = vmatpush1.bf16.msra.mxu0 0
  %2329 = vmatprep.mubr.bf16.mxu0 0
  %2330 = vmatmul.mubr.bf16.gmra.mrb[0].mxu0 %v2271
  %v2331 = vpop.f32.mrb[0].mxu0
  %v2332 = vadd.f32 0.0, %v2331
  %v2333 = vpop.f32.mrb[0].mxu0
  %v2334 = vpop.f32.mrb[0].mxu0
  %v2335 = vadd.f32 0.0, %v2334
  %v2336 = vpop.f32.mrb[0].mxu0
  %2337 = vmatprep.mubr.bf16.mxu0 0
  %2338 = vmatmul.mubr.bf16.gmra.mrb[0].mxu0 %v2274
  %v2339 = vpop.f32.mrb[0].mxu0
  %v2340 = vadd.f32 0.0, %v2339
  %v2341 = vpop.f32.mrb[0].mxu0
  %v2342 = vpop.f32.mrb[0].mxu0
  %v2343 = vadd.f32 0.0, %v2342
  %v2344 = vpop.f32.mrb[0].mxu0
  %2345 = vmatprep.mubr.bf16.mxu0 0
  %2346 = vmatmul.mubr.bf16.gmra.mrb[0].mxu0 %v2277
  %v2347 = vpop.f32.mrb[0].mxu0
  %v2348 = vadd.f32 0.0, %v2347
  %v2349 = vpop.f32.mrb[0].mxu0
  %v2350 = vpop.f32.mrb[0].mxu0
  %v2351 = vadd.f32 0.0, %v2350
  %v2352 = vpop.f32.mrb[0].mxu0
  %2353 = vmatprep.mubr.bf16.mxu0 0
  %2354 = vmatmul.mubr.bf16.gmra.mrb[0].mxu0 %v2280
  %v2355 = vpop.f32.mrb[0].mxu0
  %v2356 = vadd.f32 0.0, %v2355
  %v2357 = vpop.f32.mrb[0].mxu0
  %v2358 = vpop.f32.mrb[0].mxu0
  %v2359 = vadd.f32 0.0, %v2358
  %v2360 = vpop.f32.mrb[0].mxu0
  %2361 = vmatprep.mubr.bf16.mxu0 0
  %2362 = vmatmul.mubr.bf16.gmra.mrb[0].mxu0 %v2283
  %v2363 = vpop.f32.mrb[0].mxu0
  %v2364 = vadd.f32 0.0, %v2363
  %v2365 = vpop.f32.mrb[0].mxu0
  %v2366 = vpop.f32.mrb[0].mxu0
  %v2367 = vadd.f32 0.0, %v2366
  %v2368 = vpop.f32.mrb[0].mxu0
  %2369 = vmatprep.mubr.bf16.mxu0 0
  %2370 = vmatmul.mubr.bf16.gmra.mrb[0].mxu0 %v2286
  %v2371 = vpop.f32.mrb[0].mxu0
  %v2372 = vadd.f32 0.0, %v2371
  %v2373 = vpop.f32.mrb[0].mxu0
  %v2374 = vpop.f32.mrb[0].mxu0
  %v2375 = vadd.f32 0.0, %v2374
  %v2376 = vpop.f32.mrb[0].mxu0
  %2377 = vmatprep.mubr.bf16.mxu0 0
  %2378 = vmatmul.mubr.bf16.gmra.mrb[0].mxu0 %v2289
  %v2379 = vpop.f32.mrb[0].mxu0
  %v2380 = vadd.f32 0.0, %v2379
  %v2381 = vpop.f32.mrb[0].mxu0
  %v2382 = vpop.f32.mrb[0].mxu0
  %v2383 = vadd.f32 0.0, %v2382
  %v2384 = vpop.f32.mrb[0].mxu0
  %2385 = vmatprep.mubr.bf16.mxu0 0
  %2386 = vmatmul.mubr.bf16.gmra.mrb[0].mxu0 %v2292
  %v2387 = vpop.f32.mrb[0].mxu0
  %v2388 = vadd.f32 0.0, %v2387
  %v2389 = vpop.f32.mrb[0].mxu0
  %v2390 = vpop.f32.mrb[0].mxu0
  %v2391 = vadd.f32 0.0, %v2390
  %v2392 = vpop.f32.mrb[0].mxu0
  %2393 = vdwg.mxu0
  %2394 = vrot.lane.b32.xlu0 %v405, 122
  %v2395 = vpop.permute.xlu0 %2394
  %2396 = vrot.lane.b32.xlu0 %v407, 122
  %v2397 = vpop.permute.xlu0 %2396
  %2398 = vrot.lane.b32.xlu0 %v409, 122
  %v2399 = vpop.permute.xlu0 %2398
  %2400 = vrot.lane.b32.xlu0 %v411, 122
  %v2401 = vpop.permute.xlu0 %2400
  %2402 = vrot.lane.b32.xlu0 %v413, 122
  %v2403 = vpop.permute.xlu0 %2402
  %2404 = vrot.lane.b32.xlu0 %v415, 122
  %v2405 = vpop.permute.xlu0 %2404
  %2406 = vrot.lane.b32.xlu0 %v417, 122
  %v2407 = vpop.permute.xlu0 %2406
  %2408 = vrot.lane.b32.xlu0 %v419, 122
  %v2409 = vpop.permute.xlu0 %2408
  %v2411 = vsel %vm602, %v2395, 0
  %v2414 = vsel %vm602, %v2397, 0
  %v2417 = vsel %vm602, %v2399, 0
  %v2420 = vsel %vm602, %v2401, 0
  %v2423 = vsel %vm602, %v2403, 0
  %v2426 = vsel %vm602, %v2405, 0
  %v2429 = vsel %vm602, %v2407, 0
  %v2432 = vsel %vm602, %v2409, 0
  %v2435 = vsel %vm627, %v2251, 0
  %2437 = vmatprep.subr.bf16.mxu0 0
  %2438 = vmatpush1.bf16.msra.mxu0 %v2435
  %2439 = vmatprep.subr.bf16.mxu0 0
  %2440 = vmatpush1.bf16.msra.mxu0 0
  %2441 = vmatprep.subr.bf16.mxu0 0
  %2442 = vmatpush1.bf16.msra.mxu0 0
  %2443 = vmatprep.subr.bf16.mxu0 0
  %2444 = vmatpush1.bf16.msra.mxu0 0
  %2445 = vmatprep.subr.bf16.mxu0 0
  %2446 = vmatpush1.bf16.msra.mxu0 0
  %2447 = vmatprep.subr.bf16.mxu0 0
  %2448 = vmatpush1.bf16.msra.mxu0 0
  %2449 = vmatprep.subr.bf16.mxu0 0
  %2450 = vmatpush1.bf16.msra.mxu0 0
  %2451 = vmatprep.subr.bf16.mxu0 0
  %2452 = vmatpush1.bf16.msra.mxu0 0
  %2453 = vmatprep.subr.bf16.mxu0 0
  %2454 = vmatpush1.bf16.msra.mxu0 0
  %2455 = vmatprep.subr.bf16.mxu0 0
  %2456 = vmatpush1.bf16.msra.mxu0 0
  %2457 = vmatprep.subr.bf16.mxu0 0
  %2458 = vmatpush1.bf16.msra.mxu0 0
  %2459 = vmatprep.subr.bf16.mxu0 0
  %2460 = vmatpush1.bf16.msra.mxu0 0
  %2461 = vmatprep.subr.bf16.mxu0 0
  %2462 = vmatpush1.bf16.msra.mxu0 0
  %2463 = vmatprep.subr.bf16.mxu0 0
  %2464 = vmatpush1.bf16.msra.mxu0 0
  %2465 = vmatprep.subr.bf16.mxu0 0
  %2466 = vmatpush1.bf16.msra.mxu0 0
  %2467 = vmatprep.subr.bf16.mxu0 0
  %2468 = vmatpush1.bf16.msra.mxu0 0
  %2469 = vmatprep.mubr.bf16.mxu0 0
  %2470 = vmatmul.mubr.bf16.gmra.mrb[0].mxu0 %v2411
  %v2471 = vpop.f32.mrb[0].mxu0
  %v2472 = vadd.f32 %v2332, %v2471
  %v2473 = vpop.f32.mrb[0].mxu0
  %v2474 = vpop.f32.mrb[0].mxu0
  %v2475 = vadd.f32 %v2335, %v2474
  %v2476 = vpop.f32.mrb[0].mxu0
  %2477 = vmatprep.mubr.bf16.mxu0 0
  %2478 = vmatmul.mubr.bf16.gmra.mrb[0].mxu0 %v2414
  %v2479 = vpop.f32.mrb[0].mxu0
  %v2480 = vadd.f32 %v2340, %v2479
  %v2481 = vpop.f32.mrb[0].mxu0
  %v2482 = vpop.f32.mrb[0].mxu0
  %v2483 = vadd.f32 %v2343, %v2482
  %v2484 = vpop.f32.mrb[0].mxu0
  %2485 = vmatprep.mubr.bf16.mxu0 0
  %2486 = vmatmul.mubr.bf16.gmra.mrb[0].mxu0 %v2417
  %v2487 = vpop.f32.mrb[0].mxu0
  %v2488 = vadd.f32 %v2348, %v2487
  %v2489 = vpop.f32.mrb[0].mxu0
  %v2490 = vpop.f32.mrb[0].mxu0
  %v2491 = vadd.f32 %v2351, %v2490
  %v2492 = vpop.f32.mrb[0].mxu0
  %2493 = vmatprep.mubr.bf16.mxu0 0
  %2494 = vmatmul.mubr.bf16.gmra.mrb[0].mxu0 %v2420
  %v2495 = vpop.f32.mrb[0].mxu0
  %v2496 = vadd.f32 %v2356, %v2495
  %v2497 = vpop.f32.mrb[0].mxu0
  %v2498 = vpop.f32.mrb[0].mxu0
  %v2499 = vadd.f32 %v2359, %v2498
  %v2500 = vpop.f32.mrb[0].mxu0
  %2501 = vmatprep.mubr.bf16.mxu0 0
  %2502 = vmatmul.mubr.bf16.gmra.mrb[0].mxu0 %v2423
  %v2503 = vpop.f32.mrb[0].mxu0
  %v2504 = vadd.f32 %v2364, %v2503
  %v2505 = vpop.f32.mrb[0].mxu0
  %v2506 = vpop.f32.mrb[0].mxu0
  %v2507 = vadd.f32 %v2367, %v2506
  %v2508 = vpop.f32.mrb[0].mxu0
  %2509 = vmatprep.mubr.bf16.mxu0 0
  %2510 = vmatmul.mubr.bf16.gmra.mrb[0].mxu0 %v2426
  %v2511 = vpop.f32.mrb[0].mxu0
  %v2512 = vadd.f32 %v2372, %v2511
  %v2513 = vpop.f32.mrb[0].mxu0
  %v2514 = vpop.f32.mrb[0].mxu0
  %v2515 = vadd.f32 %v2375, %v2514
  %v2516 = vpop.f32.mrb[0].mxu0
  %2517 = vmatprep.mubr.bf16.mxu0 0
  %2518 = vmatmul.mubr.bf16.gmra.mrb[0].mxu0 %v2429
  %v2519 = vpop.f32.mrb[0].mxu0
  %v2520 = vadd.f32 %v2380, %v2519
  %v2521 = vpop.f32.mrb[0].mxu0
  %v2522 = vpop.f32.mrb[0].mxu0
  %v2523 = vadd.f32 %v2383, %v2522
  %v2524 = vpop.f32.mrb[0].mxu0
  %2525 = vmatprep.mubr.bf16.mxu0 0
  %2526 = vmatmul.mubr.bf16.gmra.mrb[0].mxu0 %v2432
  %v2527 = vpop.f32.mrb[0].mxu0
  %v2528 = vadd.f32 %v2388, %v2527
  %v2529 = vpop.f32.mrb[0].mxu0
  %v2530 = vpop.f32.mrb[0].mxu0
  %v2531 = vadd.f32 %v2391, %v2530
  %v2532 = vpop.f32.mrb[0].mxu0
  %2533 = vdwg.mxu0
  %vm2534 = vcmask 1043456
  %v2535 = vrot.slane %v405, 4
  %v2536 = vrot.slane %v406, 4
  %v2537 = vsel %vm2534, %v2535, %v2536
  %v2538 = vrot.slane %v407, 4
  %v2539 = vrot.slane %v408, 4
  %v2540 = vsel %vm2534, %v2538, %v2539
  %v2541 = vrot.slane %v409, 4
  %v2542 = vrot.slane %v410, 4
  %v2543 = vsel %vm2534, %v2541, %v2542
  %v2544 = vrot.slane %v411, 4
  %v2545 = vrot.slane %v412, 4
  %v2546 = vsel %vm2534, %v2544, %v2545
  %v2547 = vrot.slane %v413, 4
  %v2548 = vrot.slane %v414, 4
  %v2549 = vsel %vm2534, %v2547, %v2548
  %v2550 = vrot.slane %v415, 4
  %v2551 = vrot.slane %v416, 4
  %v2552 = vsel %vm2534, %v2550, %v2551
  %v2553 = vrot.slane %v417, 4
  %v2554 = vrot.slane %v418, 4
  %v2555 = vsel %vm2534, %v2553, %v2554
  %v2556 = vrot.slane %v419, 4
  %v2557 = vrot.slane %v420, 4
  %v2558 = vsel %vm2534, %v2556, %v2557
  %s2559 = scalar_lea.vmem %s8, 2
  %v2560 = vld [vmem:[%s2559] sm:$0x1]
  %2561 = vrot.lane.b32.xlu0 %v2537, 122
  %v2562 = vpop.permute.xlu0 %2561
  %2563 = vrot.lane.b32.xlu0 %v2540, 122
  %v2564 = vpop.permute.xlu0 %2563
  %2565 = vrot.lane.b32.xlu0 %v2543, 122
  %v2566 = vpop.permute.xlu0 %2565
  %2567 = vrot.lane.b32.xlu0 %v2546, 122
  %v2568 = vpop.permute.xlu0 %2567
  %2569 = vrot.lane.b32.xlu0 %v2549, 122
  %v2570 = vpop.permute.xlu0 %2569
  %2571 = vrot.lane.b32.xlu0 %v2552, 122
  %v2572 = vpop.permute.xlu0 %2571
  %2573 = vrot.lane.b32.xlu0 %v2555, 122
  %v2574 = vpop.permute.xlu0 %2573
  %2575 = vrot.lane.b32.xlu0 %v2558, 122
  %v2576 = vpop.permute.xlu0 %2575
  %v2578 = vsel %vm602, %v2562, 0
  %v2581 = vsel %vm602, %v2564, 0
  %v2584 = vsel %vm602, %v2566, 0
  %v2587 = vsel %vm602, %v2568, 0
  %v2590 = vsel %vm602, %v2570, 0
  %v2593 = vsel %vm602, %v2572, 0
  %v2596 = vsel %vm602, %v2574, 0
  %v2599 = vsel %vm602, %v2576, 0
  %v2602 = vsel %vm627, %v2560, 0
  %2604 = vmatprep.subr.bf16.mxu0 0
  %2605 = vmatpush1.bf16.msra.mxu0 %v2602
  %2606 = vmatprep.subr.bf16.mxu0 0
  %2607 = vmatpush1.bf16.msra.mxu0 0
  %2608 = vmatprep.subr.bf16.mxu0 0
  %2609 = vmatpush1.bf16.msra.mxu0 0
  %2610 = vmatprep.subr.bf16.mxu0 0
  %2611 = vmatpush1.bf16.msra.mxu0 0
  %2612 = vmatprep.subr.bf16.mxu0 0
  %2613 = vmatpush1.bf16.msra.mxu0 0
  %2614 = vmatprep.subr.bf16.mxu0 0
  %2615 = vmatpush1.bf16.msra.mxu0 0
  %2616 = vmatprep.subr.bf16.mxu0 0
  %2617 = vmatpush1.bf16.msra.mxu0 0
  %2618 = vmatprep.subr.bf16.mxu0 0
  %2619 = vmatpush1.bf16.msra.mxu0 0
  %2620 = vmatprep.subr.bf16.mxu0 0
  %2621 = vmatpush1.bf16.msra.mxu0 0
  %2622 = vmatprep.subr.bf16.mxu0 0
  %2623 = vmatpush1.bf16.msra.mxu0 0
  %2624 = vmatprep.subr.bf16.mxu0 0
  %2625 = vmatpush1.bf16.msra.mxu0 0
  %2626 = vmatprep.subr.bf16.mxu0 0
  %2627 = vmatpush1.bf16.msra.mxu0 0
  %2628 = vmatprep.subr.bf16.mxu0 0
  %2629 = vmatpush1.bf16.msra.mxu0 0
  %2630 = vmatprep.subr.bf16.mxu0 0
  %2631 = vmatpush1.bf16.msra.mxu0 0
  %2632 = vmatprep.subr.bf16.mxu0 0
  %2633 = vmatpush1.bf16.msra.mxu0 0
  %2634 = vmatprep.subr.bf16.mxu0 0
  %2635 = vmatpush1.bf16.msra.mxu0 0
  %2636 = vmatprep.mubr.bf16.mxu0 0
  %2637 = vmatmul.mubr.bf16.gmra.mrb[0].mxu0 %v2578
  %v2638 = vpop.f32.mrb[0].mxu0
  %v2639 = vadd.f32 0.0, %v2638
  %v2640 = vpop.f32.mrb[0].mxu0
  %v2641 = vpop.f32.mrb[0].mxu0
  %v2642 = vadd.f32 0.0, %v2641
  %v2643 = vpop.f32.mrb[0].mxu0
  %2644 = vmatprep.mubr.bf16.mxu0 0
  %2645 = vmatmul.mubr.bf16.gmra.mrb[0].mxu0 %v2581
  %v2646 = vpop.f32.mrb[0].mxu0
  %v2647 = vadd.f32 0.0, %v2646
  %v2648 = vpop.f32.mrb[0].mxu0
  %v2649 = vpop.f32.mrb[0].mxu0
  %v2650 = vadd.f32 0.0, %v2649
  %v2651 = vpop.f32.mrb[0].mxu0
  %2652 = vmatprep.mubr.bf16.mxu0 0
  %2653 = vmatmul.mubr.bf16.gmra.mrb[0].mxu0 %v2584
  %v2654 = vpop.f32.mrb[0].mxu0
  %v2655 = vadd.f32 0.0, %v2654
  %v2656 = vpop.f32.mrb[0].mxu0
  %v2657 = vpop.f32.mrb[0].mxu0
  %v2658 = vadd.f32 0.0, %v2657
  %v2659 = vpop.f32.mrb[0].mxu0
  %2660 = vmatprep.mubr.bf16.mxu0 0
  %2661 = vmatmul.mubr.bf16.gmra.mrb[0].mxu0 %v2587
  %v2662 = vpop.f32.mrb[0].mxu0
  %v2663 = vadd.f32 0.0, %v2662
  %v2664 = vpop.f32.mrb[0].mxu0
  %v2665 = vpop.f32.mrb[0].mxu0
  %v2666 = vadd.f32 0.0, %v2665
  %v2667 = vpop.f32.mrb[0].mxu0
  %2668 = vmatprep.mubr.bf16.mxu0 0
  %2669 = vmatmul.mubr.bf16.gmra.mrb[0].mxu0 %v2590
  %v2670 = vpop.f32.mrb[0].mxu0
  %v2671 = vadd.f32 0.0, %v2670
  %v2672 = vpop.f32.mrb[0].mxu0
  %v2673 = vpop.f32.mrb[0].mxu0
  %v2674 = vadd.f32 0.0, %v2673
  %v2675 = vpop.f32.mrb[0].mxu0
  %2676 = vmatprep.mubr.bf16.mxu0 0
  %2677 = vmatmul.mubr.bf16.gmra.mrb[0].mxu0 %v2593
  %v2678 = vpop.f32.mrb[0].mxu0
  %v2679 = vadd.f32 0.0, %v2678
  %v2680 = vpop.f32.mrb[0].mxu0
  %v2681 = vpop.f32.mrb[0].mxu0
  %v2682 = vadd.f32 0.0, %v2681
  %v2683 = vpop.f32.mrb[0].mxu0
  %2684 = vmatprep.mubr.bf16.mxu0 0
  %2685 = vmatmul.mubr.bf16.gmra.mrb[0].mxu0 %v2596
  %v2686 = vpop.f32.mrb[0].mxu0
  %v2687 = vadd.f32 0.0, %v2686
  %v2688 = vpop.f32.mrb[0].mxu0
  %v2689 = vpop.f32.mrb[0].mxu0
  %v2690 = vadd.f32 0.0, %v2689
  %v2691 = vpop.f32.mrb[0].mxu0
  %2692 = vmatprep.mubr.bf16.mxu0 0
  %2693 = vmatmul.mubr.bf16.gmra.mrb[0].mxu0 %v2599
  %v2694 = vpop.f32.mrb[0].mxu0
  %v2695 = vadd.f32 0.0, %v2694
  %v2696 = vpop.f32.mrb[0].mxu0
  %v2697 = vpop.f32.mrb[0].mxu0
  %v2698 = vadd.f32 0.0, %v2697
  %v2699 = vpop.f32.mrb[0].mxu0
  %2700 = vdwg.mxu0
  %v2701 = vadd.f32 %v2472, %v2639
  %v2702 = vadd.f32 %v2475, %v2642
  %v2703 = vadd.f32 %v2480, %v2647
  %v2704 = vadd.f32 %v2483, %v2650
  %v2705 = vadd.f32 %v2488, %v2655
  %v2706 = vadd.f32 %v2491, %v2658
  %v2707 = vadd.f32 %v2496, %v2663
  %v2708 = vadd.f32 %v2499, %v2666
  %v2709 = vadd.f32 %v2504, %v2671
  %v2710 = vadd.f32 %v2507, %v2674
  %v2711 = vadd.f32 %v2512, %v2679
  %v2712 = vadd.f32 %v2515, %v2682
  %v2713 = vadd.f32 %v2520, %v2687
  %v2714 = vadd.f32 %v2523, %v2690
  %v2715 = vadd.f32 %v2528, %v2695
  %v2716 = vadd.f32 %v2531, %v2698
  %2733 = vrot.lane.b32.xlu0 %v2701, 6
  %v2734 = vpop.permute.xlu0 %2733
  %2735 = vrot.lane.b32.xlu0 %v2702, 6
  %v2736 = vpop.permute.xlu0 %2735
  %2737 = vrot.lane.b32.xlu0 %v2703, 6
  %v2738 = vpop.permute.xlu0 %2737
  %2739 = vrot.lane.b32.xlu0 %v2704, 6
  %v2740 = vpop.permute.xlu0 %2739
  %2741 = vrot.lane.b32.xlu0 %v2705, 6
  %v2742 = vpop.permute.xlu0 %2741
  %2743 = vrot.lane.b32.xlu0 %v2706, 6
  %v2744 = vpop.permute.xlu0 %2743
  %2745 = vrot.lane.b32.xlu0 %v2707, 6
  %v2746 = vpop.permute.xlu0 %2745
  %2747 = vrot.lane.b32.xlu0 %v2708, 6
  %v2748 = vpop.permute.xlu0 %2747
  %2749 = vrot.lane.b32.xlu0 %v2709, 6
  %v2750 = vpop.permute.xlu0 %2749
  %2751 = vrot.lane.b32.xlu0 %v2710, 6
  %v2752 = vpop.permute.xlu0 %2751
  %2753 = vrot.lane.b32.xlu0 %v2711, 6
  %v2754 = vpop.permute.xlu0 %2753
  %2755 = vrot.lane.b32.xlu0 %v2712, 6
  %v2756 = vpop.permute.xlu0 %2755
  %2757 = vrot.lane.b32.xlu0 %v2713, 6
  %v2758 = vpop.permute.xlu0 %2757
  %2759 = vrot.lane.b32.xlu0 %v2714, 6
  %v2760 = vpop.permute.xlu0 %2759
  %2761 = vrot.lane.b32.xlu0 %v2715, 6
  %v2762 = vpop.permute.xlu0 %2761
  %2763 = vrot.lane.b32.xlu0 %v2716, 6
  %v2764 = vpop.permute.xlu0 %2763
  %vm2781 = vcmask 64560
  %2782 = vst.msk [vmem:[#allocation2] sm:$0xff] %vm2781, %v2734
  %2783 = vst.msk [vmem:[#allocation2 + $0x8] sm:$0xff] %vm2781, %v2736
  %2784 = vst.msk [vmem:[#allocation2 + $0x10] sm:$0xff] %vm2781, %v2738
  %2785 = vst.msk [vmem:[#allocation2 + $0x18] sm:$0xff] %vm2781, %v2740
  %2786 = vst.msk [vmem:[#allocation2 + $0x20] sm:$0xff] %vm2781, %v2742
  %2787 = vst.msk [vmem:[#allocation2 + $0x28] sm:$0xff] %vm2781, %v2744
  %2788 = vst.msk [vmem:[#allocation2 + $0x30] sm:$0xff] %vm2781, %v2746
  %2789 = vst.msk [vmem:[#allocation2 + $0x38] sm:$0xff] %vm2781, %v2748
  %2790 = vst.msk [vmem:[#allocation2 + $0x40] sm:$0xff] %vm2781, %v2750
  %2791 = vst.msk [vmem:[#allocation2 + $0x48] sm:$0xff] %vm2781, %v2752
  %2792 = vst.msk [vmem:[#allocation2 + $0x50] sm:$0xff] %vm2781, %v2754
  %2793 = vst.msk [vmem:[#allocation2 + $0x58] sm:$0xff] %vm2781, %v2756
  %2794 = vst.msk [vmem:[#allocation2 + $0x60] sm:$0xff] %vm2781, %v2758
  %2795 = vst.msk [vmem:[#allocation2 + $0x68] sm:$0xff] %vm2781, %v2760
  %2796 = vst.msk [vmem:[#allocation2 + $0x70] sm:$0xff] %vm2781, %v2762
  %2797 = vst.msk [vmem:[#allocation2 + $0x78] sm:$0xff] %vm2781, %v2764
  %v2798 = vunpack.c.l.bf16 %v405
  %v2799 = vunpack.c.h.bf16 %v405
  %v2800 = vunpack.c.l.bf16 %v406
  %v2801 = vunpack.c.l.bf16 %v407
  %v2802 = vunpack.c.h.bf16 %v407
  %v2803 = vunpack.c.l.bf16 %v408
  %v2804 = vunpack.c.l.bf16 %v409
  %v2805 = vunpack.c.h.bf16 %v409
  %v2806 = vunpack.c.l.bf16 %v410
  %v2807 = vunpack.c.l.bf16 %v411
  %v2808 = vunpack.c.h.bf16 %v411
  %v2809 = vunpack.c.l.bf16 %v412
  %v2810 = vunpack.c.l.bf16 %v413
  %v2811 = vunpack.c.h.bf16 %v413
  %v2812 = vunpack.c.l.bf16 %v414
  %v2813 = vunpack.c.l.bf16 %v415
  %v2814 = vunpack.c.h.bf16 %v415
  %v2815 = vunpack.c.l.bf16 %v416
  %v2816 = vunpack.c.l.bf16 %v417
  %v2817 = vunpack.c.h.bf16 %v417
  %v2818 = vunpack.c.l.bf16 %v418
  %v2819 = vunpack.c.l.bf16 %v419
  %v2820 = vunpack.c.h.bf16 %v419
  %v2821 = vunpack.c.l.bf16 %v420
  %vm2846 = vcmask 1046528
  %v2847 = vrot.slane %v2798, 1
  %v2848 = vrot.slane %v2799, 1
  %v2849 = vsel %vm2846, %v2847, %v2848
  %v2850 = vrot.slane %v2800, 1
  %v2851 = vsel %vm2846, %v2848, %v2850
  %v2852 = vrot.slane %v2801, 1
  %v2853 = vrot.slane %v2802, 1
  %v2854 = vsel %vm2846, %v2852, %v2853
  %v2855 = vrot.slane %v2803, 1
  %v2856 = vsel %vm2846, %v2853, %v2855
  %v2857 = vrot.slane %v2804, 1
  %v2858 = vrot.slane %v2805, 1
  %v2859 = vsel %vm2846, %v2857, %v2858
  %v2860 = vrot.slane %v2806, 1
  %v2861 = vsel %vm2846, %v2858, %v2860
  %v2862 = vrot.slane %v2807, 1
  %v2863 = vrot.slane %v2808, 1
  %v2864 = vsel %vm2846, %v2862, %v2863
  %v2865 = vrot.slane %v2809, 1
  %v2866 = vsel %vm2846, %v2863, %v2865
  %v2867 = vrot.slane %v2810, 1
  %v2868 = vrot.slane %v2811, 1
  %v2869 = vsel %vm2846, %v2867, %v2868
  %v2870 = vrot.slane %v2812, 1
  %v2871 = vsel %vm2846, %v2868, %v2870
  %v2872 = vrot.slane %v2813, 1
  %v2873 = vrot.slane %v2814, 1
  %v2874 = vsel %vm2846, %v2872, %v2873
  %v2875 = vrot.slane %v2815, 1
  %v2876 = vsel %vm2846, %v2873, %v2875
  %v2877 = vrot.slane %v2816, 1
  %v2878 = vrot.slane %v2817, 1
  %v2879 = vsel %vm2846, %v2877, %v2878
  %v2880 = vrot.slane %v2818, 1
  %v2881 = vsel %vm2846, %v2878, %v2880
  %v2882 = vrot.slane %v2819, 1
  %v2883 = vrot.slane %v2820, 1
  %v2884 = vsel %vm2846, %v2882, %v2883
  %v2885 = vrot.slane %v2821, 1
  %v2886 = vsel %vm2846, %v2883, %v2885
  %v2911 = vmax.f32 %v2798, %v2849
  %v2912 = vmax.f32 %v2799, %v2851
  %v2913 = vmax.f32 %v2800, %v2850
  %v2914 = vmax.f32 %v2801, %v2854
  %v2915 = vmax.f32 %v2802, %v2856
  %v2916 = vmax.f32 %v2803, %v2855
  %v2917 = vmax.f32 %v2804, %v2859
  %v2918 = vmax.f32 %v2805, %v2861
  %v2919 = vmax.f32 %v2806, %v2860
  %v2920 = vmax.f32 %v2807, %v2864
  %v2921 = vmax.f32 %v2808, %v2866
  %v2922 = vmax.f32 %v2809, %v2865
  %v2923 = vmax.f32 %v2810, %v2869
  %v2924 = vmax.f32 %v2811, %v2871
  %v2925 = vmax.f32 %v2812, %v2870
  %v2926 = vmax.f32 %v2813, %v2874
  %v2927 = vmax.f32 %v2814, %v2876
  %v2928 = vmax.f32 %v2815, %v2875
  %v2929 = vmax.f32 %v2816, %v2879
  %v2930 = vmax.f32 %v2817, %v2881
  %v2931 = vmax.f32 %v2818, %v2880
  %v2932 = vmax.f32 %v2819, %v2884
  %v2933 = vmax.f32 %v2820, %v2886
  %v2934 = vmax.f32 %v2821, %v2885
  %vm2935 = vcmask 1045504
  %v2936 = vrot.slane %v2798, 2
  %v2937 = vrot.slane %v2799, 2
  %v2938 = vsel %vm2935, %v2936, %v2937
  %v2939 = vrot.slane %v2800, 2
  %v2940 = vsel %vm2935, %v2937, %v2939
  %v2941 = vrot.slane %v2801, 2
  %v2942 = vrot.slane %v2802, 2
  %v2943 = vsel %vm2935, %v2941, %v2942
  %v2944 = vrot.slane %v2803, 2
  %v2945 = vsel %vm2935, %v2942, %v2944
  %v2946 = vrot.slane %v2804, 2
  %v2947 = vrot.slane %v2805, 2
  %v2948 = vsel %vm2935, %v2946, %v2947
  %v2949 = vrot.slane %v2806, 2
  %v2950 = vsel %vm2935, %v2947, %v2949
  %v2951 = vrot.slane %v2807, 2
  %v2952 = vrot.slane %v2808, 2
  %v2953 = vsel %vm2935, %v2951, %v2952
  %v2954 = vrot.slane %v2809, 2
  %v2955 = vsel %vm2935, %v2952, %v2954
  %v2956 = vrot.slane %v2810, 2
  %v2957 = vrot.slane %v2811, 2
  %v2958 = vsel %vm2935, %v2956, %v2957
  %v2959 = vrot.slane %v2812, 2
  %v2960 = vsel %vm2935, %v2957, %v2959
  %v2961 = vrot.slane %v2813, 2
  %v2962 = vrot.slane %v2814, 2
  %v2963 = vsel %vm2935, %v2961, %v2962
  %v2964 = vrot.slane %v2815, 2
  %v2965 = vsel %vm2935, %v2962, %v2964
  %v2966 = vrot.slane %v2816, 2
  %v2967 = vrot.slane %v2817, 2
  %v2968 = vsel %vm2935, %v2966, %v2967
  %v2969 = vrot.slane %v2818, 2
  %v2970 = vsel %vm2935, %v2967, %v2969
  %v2971 = vrot.slane %v2819, 2
  %v2972 = vrot.slane %v2820, 2
  %v2973 = vsel %vm2935, %v2971, %v2972
  %v2974 = vrot.slane %v2821, 2
  %v2975 = vsel %vm2935, %v2972, %v2974
  %v3000 = vmax.f32 %v2911, %v2938
  %v3001 = vmax.f32 %v2912, %v2940
  %v3002 = vmax.f32 %v2913, %v2939
  %v3003 = vmax.f32 %v2914, %v2943
  %v3004 = vmax.f32 %v2915, %v2945
  %v3005 = vmax.f32 %v2916, %v2944
  %v3006 = vmax.f32 %v2917, %v2948
  %v3007 = vmax.f32 %v2918, %v2950
  %v3008 = vmax.f32 %v2919, %v2949
  %v3009 = vmax.f32 %v2920, %v2953
  %v3010 = vmax.f32 %v2921, %v2955
  %v3011 = vmax.f32 %v2922, %v2954
  %v3012 = vmax.f32 %v2923, %v2958
  %v3013 = vmax.f32 %v2924, %v2960
  %v3014 = vmax.f32 %v2925, %v2959
  %v3015 = vmax.f32 %v2926, %v2963
  %v3016 = vmax.f32 %v2927, %v2965
  %v3017 = vmax.f32 %v2928, %v2964
  %v3018 = vmax.f32 %v2929, %v2968
  %v3019 = vmax.f32 %v2930, %v2970
  %v3020 = vmax.f32 %v2931, %v2969
  %v3021 = vmax.f32 %v2932, %v2973
  %v3022 = vmax.f32 %v2933, %v2975
  %v3023 = vmax.f32 %v2934, %v2974
  %vm3024 = vcmask 80963
  %3025 = vst.msk [vmem:[#allocation2 - $0x3] sm:$0xf8] %vm3024, %v3000
  %vm3026 = vcmask 80960
  %3027 = vst.msk [vmem:[#allocation2 + $0x5] sm:$0xff] %vm3026, %v3001
  %vm3028 = vcmask 75840
  %3029 = vst.msk [vmem:[#allocation2 + $0xd] sm:$0x7] %vm3028, %v3002
  %3030 = vst.msk [vmem:[#allocation2 + $0xd] sm:$0xf8] %vm3024, %v3003
  %3031 = vst.msk [vmem:[#allocation2 + $0x15] sm:$0xff] %vm3026, %v3004
  %3032 = vst.msk [vmem:[#allocation2 + $0x1d] sm:$0x7] %vm3028, %v3005
  %3033 = vst.msk [vmem:[#allocation2 + $0x1d] sm:$0xf8] %vm3024, %v3006
  %3034 = vst.msk [vmem:[#allocation2 + $0x25] sm:$0xff] %vm3026, %v3007
  %3035 = vst.msk [vmem:[#allocation2 + $0x2d] sm:$0x7] %vm3028, %v3008
  %3036 = vst.msk [vmem:[#allocation2 + $0x2d] sm:$0xf8] %vm3024, %v3009
  %3037 = vst.msk [vmem:[#allocation2 + $0x35] sm:$0xff] %vm3026, %v3010
  %3038 = vst.msk [vmem:[#allocation2 + $0x3d] sm:$0x7] %vm3028, %v3011
  %3039 = vst.msk [vmem:[#allocation2 + $0x3d] sm:$0xf8] %vm3024, %v3012
  %3040 = vst.msk [vmem:[#allocation2 + $0x45] sm:$0xff] %vm3026, %v3013
  %3041 = vst.msk [vmem:[#allocation2 + $0x4d] sm:$0x7] %vm3028, %v3014
  %3042 = vst.msk [vmem:[#allocation2 + $0x4d] sm:$0xf8] %vm3024, %v3015
  %3043 = vst.msk [vmem:[#allocation2 + $0x55] sm:$0xff] %vm3026, %v3016
  %3044 = vst.msk [vmem:[#allocation2 + $0x5d] sm:$0x7] %vm3028, %v3017
  %3045 = vst.msk [vmem:[#allocation2 + $0x5d] sm:$0xf8] %vm3024, %v3018
  %3046 = vst.msk [vmem:[#allocation2 + $0x65] sm:$0xff] %vm3026, %v3019
  %3047 = vst.msk [vmem:[#allocation2 + $0x6d] sm:$0x7] %vm3028, %v3020
  %3048 = vst.msk [vmem:[#allocation2 + $0x6d] sm:$0xf8] %vm3024, %v3021
  %3049 = vst.msk [vmem:[#allocation2 + $0x75] sm:$0xff] %vm3026, %v3022
  %3050 = vst.msk [vmem:[#allocation2 + $0x7d] sm:$0x7] %vm3028, %v3023
  %vm3051 = vcmask 97364
  %3052 = vst.msk [vmem:[#allocation2 - $0x4] sm:$0xf0] %vm3051, %v2798
  %vm3053 = vcmask 97360
  %3054 = vst.msk [vmem:[#allocation2 + $0x4] sm:$0xff] %vm3053, %v2799
  %vm3055 = vcmask 93264
  %3056 = vst.msk [vmem:[#allocation2 + $0xc] sm:$0xf] %vm3055, %v2800
  %3057 = vst.msk [vmem:[#allocation2 + $0xc] sm:$0xf0] %vm3051, %v2801
  %3058 = vst.msk [vmem:[#allocation2 + $0x14] sm:$0xff] %vm3053, %v2802
  %3059 = vst.msk [vmem:[#allocation2 + $0x1c] sm:$0xf] %vm3055, %v2803
  %3060 = vst.msk [vmem:[#allocation2 + $0x1c] sm:$0xf0] %vm3051, %v2804
  %3061 = vst.msk [vmem:[#allocation2 + $0x24] sm:$0xff] %vm3053, %v2805
  %3062 = vst.msk [vmem:[#allocation2 + $0x2c] sm:$0xf] %vm3055, %v2806
  %3063 = vst.msk [vmem:[#allocation2 + $0x2c] sm:$0xf0] %vm3051, %v2807
  %3064 = vst.msk [vmem:[#allocation2 + $0x34] sm:$0xff] %vm3053, %v2808
  %3065 = vst.msk [vmem:[#allocation2 + $0x3c] sm:$0xf] %vm3055, %v2809
  %3066 = vst.msk [vmem:[#allocation2 + $0x3c] sm:$0xf0] %vm3051, %v2810
  %3067 = vst.msk [vmem:[#allocation2 + $0x44] sm:$0xff] %vm3053, %v2811
  %3068 = vst.msk [vmem:[#allocation2 + $0x4c] sm:$0xf] %vm3055, %v2812
  %3069 = vst.msk [vmem:[#allocation2 + $0x4c] sm:$0xf0] %vm3051, %v2813
  %3070 = vst.msk [vmem:[#allocation2 + $0x54] sm:$0xff] %vm3053, %v2814
  %3071 = vst.msk [vmem:[#allocation2 + $0x5c] sm:$0xf] %vm3055, %v2815
  %3072 = vst.msk [vmem:[#allocation2 + $0x5c] sm:$0xf0] %vm3051, %v2816
  %3073 = vst.msk [vmem:[#allocation2 + $0x64] sm:$0xff] %vm3053, %v2817
  %3074 = vst.msk [vmem:[#allocation2 + $0x6c] sm:$0xf] %vm3055, %v2818
  %3075 = vst.msk [vmem:[#allocation2 + $0x6c] sm:$0xf0] %vm3051, %v2819
  %3076 = vst.msk [vmem:[#allocation2 + $0x74] sm:$0xff] %vm3053, %v2820
  %3077 = vst.msk [vmem:[#allocation2 + $0x7c] sm:$0xf] %vm3055, %v2821
  %v3078 = vld [vmem:[#allocation2] sm:$0xff]
  %v3079 = vld [vmem:[#allocation2 + $0x8] sm:$0xff]
  %v3080 = vld [vmem:[#allocation2 + $0x10] sm:$0xff]
  %v3081 = vld [vmem:[#allocation2 + $0x18] sm:$0xff]
  %v3082 = vld [vmem:[#allocation2 + $0x20] sm:$0xff]
  %v3083 = vld [vmem:[#allocation2 + $0x28] sm:$0xff]
  %v3084 = vld [vmem:[#allocation2 + $0x30] sm:$0xff]
  %v3085 = vld [vmem:[#allocation2 + $0x38] sm:$0xff]
  %v3086 = vld [vmem:[#allocation2 + $0x40] sm:$0xff]
  %v3087 = vld [vmem:[#allocation2 + $0x48] sm:$0xff]
  %v3088 = vld [vmem:[#allocation2 + $0x50] sm:$0xff]
  %v3089 = vld [vmem:[#allocation2 + $0x58] sm:$0xff]
  %v3090 = vld [vmem:[#allocation2 + $0x60] sm:$0xff]
  %v3091 = vld [vmem:[#allocation2 + $0x68] sm:$0xff]
  %v3092 = vld [vmem:[#allocation2 + $0x70] sm:$0xff]
  %v3093 = vld [vmem:[#allocation2 + $0x78] sm:$0xff]
  %v3094 = vld [vmem:[%s9] sm:$0x1]
  %v3096 = vlaneseq
  %v3097 = vshrl.u32 %v3096, 7
  %v3098 = vsub.s32 0, %v3097
  %v3099 = vrot.slane %v3094, %v3098
  %v3101 = vmul.f32 %v3078, %v3099
  %v3102 = vmul.f32 %v3079, %v3099
  %v3103 = vmul.f32 %v3080, %v3099
  %v3104 = vmul.f32 %v3081, %v3099
  %v3105 = vmul.f32 %v3082, %v3099
  %v3106 = vmul.f32 %v3083, %v3099
  %v3107 = vmul.f32 %v3084, %v3099
  %v3108 = vmul.f32 %v3085, %v3099
  %v3109 = vmul.f32 %v3086, %v3099
  %v3110 = vmul.f32 %v3087, %v3099
  %v3111 = vmul.f32 %v3088, %v3099
  %v3112 = vmul.f32 %v3089, %v3099
  %v3113 = vmul.f32 %v3090, %v3099
  %v3114 = vmul.f32 %v3091, %v3099
  %v3115 = vmul.f32 %v3092, %v3099
  %v3116 = vmul.f32 %v3093, %v3099
  %v3117 = vld [vmem:[%s10] sm:$0x1]
  %v3119 = vlaneseq
  %v3120 = vshrl.u32 %v3119, 7
  %v3121 = vsub.s32 0, %v3120
  %v3122 = vrot.slane %v3117, %v3121
  %v3124 = vadd.f32 %v3101, %v3122
  %v3125 = vadd.f32 %v3102, %v3122
  %v3126 = vadd.f32 %v3103, %v3122
  %v3127 = vadd.f32 %v3104, %v3122
  %v3128 = vadd.f32 %v3105, %v3122
  %v3129 = vadd.f32 %v3106, %v3122
  %v3130 = vadd.f32 %v3107, %v3122
  %v3131 = vadd.f32 %v3108, %v3122
  %v3132 = vadd.f32 %v3109, %v3122
  %v3133 = vadd.f32 %v3110, %v3122
  %v3134 = vadd.f32 %v3111, %v3122
  %v3135 = vadd.f32 %v3112, %v3122
  %v3136 = vadd.f32 %v3113, %v3122
  %v3137 = vadd.f32 %v3114, %v3122
  %v3138 = vadd.f32 %v3115, %v3122
  %v3139 = vadd.f32 %v3116, %v3122
  %v3140 = vmax.f32 %v3124, 0.0
  %v3141 = vmax.f32 %v3125, 0.0
  %v3142 = vmax.f32 %v3126, 0.0
  %v3143 = vmax.f32 %v3127, 0.0
  %v3144 = vmax.f32 %v3128, 0.0
  %v3145 = vmax.f32 %v3129, 0.0
  %v3146 = vmax.f32 %v3130, 0.0
  %v3147 = vmax.f32 %v3131, 0.0
  %v3148 = vmax.f32 %v3132, 0.0
  %v3149 = vmax.f32 %v3133, 0.0
  %v3150 = vmax.f32 %v3134, 0.0
  %v3151 = vmax.f32 %v3135, 0.0
  %v3152 = vmax.f32 %v3136, 0.0
  %v3153 = vmax.f32 %v3137, 0.0
  %v3154 = vmax.f32 %v3138, 0.0
  %v3155 = vmax.f32 %v3139, 0.0
  %v3156 = vpack.c.bf16 %v3141, %v3140
  %v3157 = vpack.c.bf16 %v3143, %v3142
  %v3158 = vpack.c.bf16 %v3145, %v3144
  %v3159 = vpack.c.bf16 %v3147, %v3146
  %v3160 = vpack.c.bf16 %v3149, %v3148
  %v3161 = vpack.c.bf16 %v3151, %v3150
  %v3162 = vpack.c.bf16 %v3153, %v3152
  %v3163 = vpack.c.bf16 %v3155, %v3154
  %v3164 = vld [vmem:[%s11] sm:$0xf]
  %v3165 = vld [vmem:[%s11 + $0x4] sm:$0x3]
  %v3166 = vld [vmem:[%s12] sm:$0x1]
  %v3168 = vlaneseq
  %v3169 = vshrl.u32 %v3168, 7
  %v3170 = vsub.s32 0, %v3169
  %v3171 = vrot.slane %v3166, %v3170
  %v3175 = vunpack.c.l.b16 %v3164
  %v3176 = vunpack.c.l.b16 %v3165
  %v3177 = vpack.c.b16 %v3176, %v3175
  %vm3178 = vcmask 97280
  %v3180 = vsel %vm3178, %v3156, 0
  %v3183 = vsel %vm3178, %v3157, 0
  %v3186 = vsel %vm3178, %v3158, 0
  %v3189 = vsel %vm3178, %v3159, 0
  %v3192 = vsel %vm3178, %v3160, 0
  %v3195 = vsel %vm3178, %v3161, 0
  %v3198 = vsel %vm3178, %v3162, 0
  %v3201 = vsel %vm3178, %v3163, 0
  %v3204 = vsel %vm2935, %v3177, 0
  %3206 = vmatprep.subr.bf16.mxu0 0
  %3207 = vmatpush1.bf16.msra.mxu0 %v3204
  %3208 = vmatprep.subr.bf16.mxu0 0
  %3209 = vmatpush1.bf16.msra.mxu0 0
  %3210 = vmatprep.subr.bf16.mxu0 0
  %3211 = vmatpush1.bf16.msra.mxu0 0
  %3212 = vmatprep.subr.bf16.mxu0 0
  %3213 = vmatpush1.bf16.msra.mxu0 0
  %3214 = vmatprep.subr.bf16.mxu0 0
  %3215 = vmatpush1.bf16.msra.mxu0 0
  %3216 = vmatprep.subr.bf16.mxu0 0
  %3217 = vmatpush1.bf16.msra.mxu0 0
  %3218 = vmatprep.subr.bf16.mxu0 0
  %3219 = vmatpush1.bf16.msra.mxu0 0
  %3220 = vmatprep.subr.bf16.mxu0 0
  %3221 = vmatpush1.bf16.msra.mxu0 0
  %3222 = vmatprep.subr.bf16.mxu0 0
  %3223 = vmatpush1.bf16.msra.mxu0 0
  %3224 = vmatprep.subr.bf16.mxu0 0
  %3225 = vmatpush1.bf16.msra.mxu0 0
  %3226 = vmatprep.subr.bf16.mxu0 0
  %3227 = vmatpush1.bf16.msra.mxu0 0
  %3228 = vmatprep.subr.bf16.mxu0 0
  %3229 = vmatpush1.bf16.msra.mxu0 0
  %3230 = vmatprep.subr.bf16.mxu0 0
  %3231 = vmatpush1.bf16.msra.mxu0 0
  %3232 = vmatprep.subr.bf16.mxu0 0
  %3233 = vmatpush1.bf16.msra.mxu0 0
  %3234 = vmatprep.subr.bf16.mxu0 0
  %3235 = vmatpush1.bf16.msra.mxu0 0
  %3236 = vmatprep.subr.bf16.mxu0 0
  %3237 = vmatpush1.bf16.msra.mxu0 0
  %3238 = vmatprep.mubr.bf16.mxu0 0
  %3239 = vmatmul.mubr.bf16.gmra.mrb[0].mxu0 %v3180
  %v3240 = vpop.f32.mrb[0].mxu0
  %v3241 = vadd.f32 %v3171, %v3240
  %v3242 = vpop.f32.mrb[0].mxu0
  %v3243 = vpop.f32.mrb[0].mxu0
  %v3244 = vadd.f32 %v3171, %v3243
  %v3245 = vpop.f32.mrb[0].mxu0
  %3246 = vmatprep.mubr.bf16.mxu0 0
  %3247 = vmatmul.mubr.bf16.gmra.mrb[0].mxu0 %v3183
  %v3248 = vpop.f32.mrb[0].mxu0
  %v3249 = vadd.f32 %v3171, %v3248
  %v3250 = vpop.f32.mrb[0].mxu0
  %v3251 = vpop.f32.mrb[0].mxu0
  %v3252 = vadd.f32 %v3171, %v3251
  %v3253 = vpop.f32.mrb[0].mxu0
  %3254 = vmatprep.mubr.bf16.mxu0 0
  %3255 = vmatmul.mubr.bf16.gmra.mrb[0].mxu0 %v3186
  %v3256 = vpop.f32.mrb[0].mxu0
  %v3257 = vadd.f32 %v3171, %v3256
  %v3258 = vpop.f32.mrb[0].mxu0
  %v3259 = vpop.f32.mrb[0].mxu0
  %v3260 = vadd.f32 %v3171, %v3259
  %v3261 = vpop.f32.mrb[0].mxu0
  %3262 = vmatprep.mubr.bf16.mxu0 0
  %3263 = vmatmul.mubr.bf16.gmra.mrb[0].mxu0 %v3189
  %v3264 = vpop.f32.mrb[0].mxu0
  %v3265 = vadd.f32 %v3171, %v3264
  %v3266 = vpop.f32.mrb[0].mxu0
  %v3267 = vpop.f32.mrb[0].mxu0
  %v3268 = vadd.f32 %v3171, %v3267
  %v3269 = vpop.f32.mrb[0].mxu0
  %3270 = vmatprep.mubr.bf16.mxu0 0
  %3271 = vmatmul.mubr.bf16.gmra.mrb[0].mxu0 %v3192
  %v3272 = vpop.f32.mrb[0].mxu0
  %v3273 = vadd.f32 %v3171, %v3272
  %v3274 = vpop.f32.mrb[0].mxu0
  %v3275 = vpop.f32.mrb[0].mxu0
  %v3276 = vadd.f32 %v3171, %v3275
  %v3277 = vpop.f32.mrb[0].mxu0
  %3278 = vmatprep.mubr.bf16.mxu0 0
  %3279 = vmatmul.mubr.bf16.gmra.mrb[0].mxu0 %v3195
  %v3280 = vpop.f32.mrb[0].mxu0
  %v3281 = vadd.f32 %v3171, %v3280
  %v3282 = vpop.f32.mrb[0].mxu0
  %v3283 = vpop.f32.mrb[0].mxu0
  %v3284 = vadd.f32 %v3171, %v3283
  %v3285 = vpop.f32.mrb[0].mxu0
  %3286 = vmatprep.mubr.bf16.mxu0 0
  %3287 = vmatmul.mubr.bf16.gmra.mrb[0].mxu0 %v3198
  %v3288 = vpop.f32.mrb[0].mxu0
  %v3289 = vadd.f32 %v3171, %v3288
  %v3290 = vpop.f32.mrb[0].mxu0
  %v3291 = vpop.f32.mrb[0].mxu0
  %v3292 = vadd.f32 %v3171, %v3291
  %v3293 = vpop.f32.mrb[0].mxu0
  %3294 = vmatprep.mubr.bf16.mxu0 0
  %3295 = vmatmul.mubr.bf16.gmra.mrb[0].mxu0 %v3201
  %v3296 = vpop.f32.mrb[0].mxu0
  %v3297 = vadd.f32 %v3171, %v3296
  %v3298 = vpop.f32.mrb[0].mxu0
  %v3299 = vpop.f32.mrb[0].mxu0
  %v3300 = vadd.f32 %v3171, %v3299
  %v3301 = vpop.f32.mrb[0].mxu0
  %3302 = vdwg.mxu0
  %3303 = vst.msk [vmem:[%s13] sm:$0xff] %vm3178, %v3241
  %3304 = vst.msk [vmem:[%s13 + $0x8] sm:$0xff] %vm3178, %v3244
  %3305 = vst.msk [vmem:[%s13 + $0x10] sm:$0xff] %vm3178, %v3249
  %3306 = vst.msk [vmem:[%s13 + $0x18] sm:$0xff] %vm3178, %v3252
  %3307 = vst.msk [vmem:[%s13 + $0x20] sm:$0xff] %vm3178, %v3257
  %3308 = vst.msk [vmem:[%s13 + $0x28] sm:$0xff] %vm3178, %v3260
  %3309 = vst.msk [vmem:[%s13 + $0x30] sm:$0xff] %vm3178, %v3265
  %3310 = vst.msk [vmem:[%s13 + $0x38] sm:$0xff] %vm3178, %v3268
  %3311 = vst.msk [vmem:[%s13 + $0x40] sm:$0xff] %vm3178, %v3273
  %3312 = vst.msk [vmem:[%s13 + $0x48] sm:$0xff] %vm3178, %v3276
  %3313 = vst.msk [vmem:[%s13 + $0x50] sm:$0xff] %vm3178, %v3281
  %3314 = vst.msk [vmem:[%s13 + $0x58] sm:$0xff] %vm3178, %v3284
  %3315 = vst.msk [vmem:[%s13 + $0x60] sm:$0xff] %vm3178, %v3289
  %3316 = vst.msk [vmem:[%s13 + $0x68] sm:$0xff] %vm3178, %v3292
  %3317 = vst.msk [vmem:[%s13 + $0x70] sm:$0xff] %vm3178, %v3297
  %3318 = vst.msk [vmem:[%s13 + $0x78] sm:$0xff] %vm3178, %v3300
  // Predicated region
  $region54: #{tpu_custom_call.1} parent=0 // pred_check
    _
  $region55: #{tpu_custom_call.1} parent=0 // pred_check_branch
    %3320 = sbr.rel (0) target = $region57
  $region56: #{tpu_custom_call.1} parent=0 // pred_region
    _
  $region57: #{tpu_custom_call.1} parent=0 // pred_fallthru
    _
  // Predicated region
  $region58: #{tpu_custom_call.1} parent=0 // pred_check
    _
  $region59: #{tpu_custom_call.1} parent=0 // pred_check_branch
    %3322 = sbr.rel (0) target = $region61
  $region60: #{tpu_custom_call.1} parent=0 // pred_region
    _
  $region61: #{tpu_custom_call.1} parent=0 // pred_fallthru
    _

</llo_original>
